<compile_context>
chip_gen: v7x
topology: tpu7x:2x2x1
jax: 0.10.0
libtpu: 0.0.40
codegen_flags: <defaults>
</compile_context>

<pallas_src>
import jax
import jax.numpy as jnp
from jax.experimental import pallas as pl
from jax.experimental.pallas import tpu as pltpu


def _round_up(n, m):
    return ((n + m - 1) // m) * m


def _fused_lstm_encoder_kernel(x_ref, wih0_ref, wihr_ref, whh_ref, b_ref,
                               out_ref, h_ref, c_ref, xg_ref):
    """All LSTM layers fused; one (Tc, Bt) time-chunk per grid step.

    Grid: (batch_tiles, time_chunks) with ("parallel", "arbitrary") semantics.

    x_ref:    (Tc, Bt, D_in)  f32   time-major input chunk
    wih0_ref: (D_in, 4H)      bf16  layer-0 input->gates weight (transposed)
    wihr_ref: (max(L-1,1), H, 4H) bf16  layers>=1 input->gates weights
    whh_ref:  (L, H, 4H)      bf16  hidden->gates weights (transposed)
    b_ref:    (L, 1, 4H)      f32   combined b_ih + b_hh per layer
    out_ref:  (Tc, Bt, H)     f32   last-layer hidden outputs for this chunk
    h_ref:    (L, Bt, H) f32 VMEM scratch  hidden state carried across chunks
    c_ref:    (L, Bt, H) f32 VMEM scratch  cell state carried across chunks
    xg_ref:   (Tc, Bt, 4H) f32 VMEM scratch hoisted layer-0 gate pre-activations
    """
    chunk = pl.program_id(1)

    num_layers = whh_ref.shape[0]
    hidden = whh_ref.shape[1]
    tc, bt, d_in = x_ref.shape

    @pl.when(chunk == 0)
    def _init():
        h_ref[...] = jnp.zeros_like(h_ref)
        c_ref[...] = jnp.zeros_like(c_ref)

    # ---- Hoisted layer-0 input projection: one (Tc*Bt, D) x (D, 4H) matmul ----
    # (no sequential dependence on the x-path, so it is done off the critical
    #  recurrence; layer-0 bias is folded in here as well).
    x2d = x_ref[...].reshape(tc * bt, d_in).astype(jnp.bfloat16)
    xg2d = jnp.dot(x2d, wih0_ref[...], preferred_element_type=jnp.float32)
    xg_ref[...] = (xg2d + b_ref[0]).reshape(tc, bt, 4 * hidden)

    # ---- Sequential recurrence over the chunk; all layers per timestep ------
    def step(tt, carry):
        gates0 = xg_ref[tt]                       # (Bt, 4H) f32
        h_in = None
        for layer in range(num_layers):           # static unroll over layers
            h_prev = h_ref[layer]                 # (Bt, H) f32
            c_prev = c_ref[layer]
            rec = jnp.dot(h_prev.astype(jnp.bfloat16), whh_ref[layer],
                          preferred_element_type=jnp.float32)
            if layer == 0:
                gates = gates0 + rec
            else:
                inp = jnp.dot(h_in.astype(jnp.bfloat16), wihr_ref[layer - 1],
                              preferred_element_type=jnp.float32)
                gates = inp + rec + b_ref[layer]
            # PyTorch gate order: input, forget, cell (g), output.
            i_g = jax.nn.sigmoid(gates[:, 0 * hidden:1 * hidden])
            f_g = jax.nn.sigmoid(gates[:, 1 * hidden:2 * hidden])
            g_g = jnp.tanh(gates[:, 2 * hidden:3 * hidden])
            o_g = jax.nn.sigmoid(gates[:, 3 * hidden:4 * hidden])
            c_new = f_g * c_prev + i_g * g_g
            h_new = o_g * jnp.tanh(c_new)
            h_ref[layer] = h_new
            c_ref[layer] = c_new
            h_in = h_new
        out_ref[tt] = h_in.astype(out_ref.dtype)  # last layer's output at tt
        return carry

    jax.lax.fori_loop(0, tc, step, 0, unroll=(tc <= 8))


def init_encoder_params(key, input_dim, embedding_dim, lstm_layers):
    """PyTorch-shaped nn.LSTM parameters:
    per layer l: weight_ih (4H, D_l), weight_hh (4H, H), bias_ih (4H,), bias_hh (4H,)
    with D_0 = input_dim and D_l = embedding_dim for l > 0.
    """
    H = embedding_dim
    bound = 1.0 / jnp.sqrt(jnp.float32(H))
    params = []
    for layer in range(lstm_layers):
        d_in = input_dim if layer == 0 else embedding_dim
        key, k1, k2, k3, k4 = jax.random.split(key, 5)
        params.append(dict(
            w_ih=jax.random.uniform(k1, (4 * H, d_in), jnp.float32, -bound, bound),
            w_hh=jax.random.uniform(k2, (4 * H, H), jnp.float32, -bound, bound),
            b_ih=jax.random.uniform(k3, (4 * H,), jnp.float32, -bound, bound),
            b_hh=jax.random.uniform(k4, (4 * H,), jnp.float32, -bound, bound),
        ))
    return params


def prepare_encoder_params(raw_params):
    """One-time layout conversion (done at init, not per forward call):
    transpose weights, stack per-layer, combine biases, cast weights to bf16."""
    L = len(raw_params)
    H = raw_params[0]["w_hh"].shape[1]
    w_ih0 = jnp.asarray(raw_params[0]["w_ih"].T, jnp.bfloat16)          # (D, 4H)
    if L > 1:
        w_ihr = jnp.stack([p["w_ih"].T for p in raw_params[1:]]
                          ).astype(jnp.bfloat16)                        # (L-1, H, 4H)
    else:
        w_ihr = jnp.zeros((1, H, 4 * H), jnp.bfloat16)                  # unused dummy
    w_hh = jnp.stack([p["w_hh"].T for p in raw_params]).astype(jnp.bfloat16)  # (L,H,4H)
    bias = jnp.stack([(p["b_ih"] + p["b_hh"])[None, :] for p in raw_params]
                     ).astype(jnp.float32)                              # (L, 1, 4H)
    return {"w_ih0": w_ih0, "w_ihr": w_ihr, "w_hh": w_hh, "bias": bias}


@jax.jit
def encoder_forward(x, prep):
    """Equivalent of Encoder.forward (eval mode).

    x:    (B, T, input_dim), batch-first like PyTorch.
    prep: output of prepare_encoder_params.
    Returns (hidden_last, hidden_outs):
        hidden_last: (B, H)    -- hidden[-1] of the last layer
        hidden_outs: (B, T, H) -- last-layer outputs for all timesteps
    """
    B, T, D = x.shape
    num_layers, H, four_h = prep["w_hh"].shape
    assert four_h == 4 * H

    # Batch padding / tiling (sublane-dense; batch axis sharded across cores).
    b_pad = _round_up(max(B, 8), 8)
    if b_pad > 128:
        b_pad = _round_up(B, 128)
    b_tile = min(b_pad, 128)
    nb = b_pad // b_tile

    # Time chunking (amortize per-grid-step overhead; chunk multiple of 8).
    t_chunk = min(_round_up(T, 8), 32)
    t_pad = _round_up(T, t_chunk)
    nc = t_pad // t_chunk

    x_tm = jnp.transpose(x, (1, 0, 2))                       # (T, B, D) time-major
    x_tm = jnp.pad(x_tm, ((0, t_pad - T), (0, b_pad - B), (0, 0)))

    out_tm = pl.pallas_call(
        _fused_lstm_encoder_kernel,
        out_shape=jax.ShapeDtypeStruct((t_pad, b_pad, H), jnp.float32),
        grid_spec=pltpu.PrefetchScalarGridSpec(
            num_scalar_prefetch=0,
            grid=(nb, nc),
            in_specs=[
                pl.BlockSpec((t_chunk, b_tile, D), lambda b, c: (c, b, 0)),
                pl.BlockSpec((D, four_h), lambda b, c: (0, 0)),
                pl.BlockSpec(prep["w_ihr"].shape, lambda b, c: (0, 0, 0)),
                pl.BlockSpec((num_layers, H, four_h), lambda b, c: (0, 0, 0)),
                pl.BlockSpec((num_layers, 1, four_h), lambda b, c: (0, 0, 0)),
            ],
            out_specs=pl.BlockSpec((t_chunk, b_tile, H), lambda b, c: (c, b, 0)),
            scratch_shapes=[
                pltpu.VMEM((num_layers, b_tile, H), jnp.float32),   # h carry
                pltpu.VMEM((num_layers, b_tile, H), jnp.float32),   # c carry
                pltpu.VMEM((t_chunk, b_tile, four_h), jnp.float32), # hoisted x-proj
            ],
        ),
        compiler_params=pltpu.CompilerParams(
            dimension_semantics=("parallel", "arbitrary"),
        ),
    )(x_tm, prep["w_ih0"], prep["w_ihr"], prep["w_hh"], prep["bias"])

    hidden_outs = jnp.transpose(out_tm[:T, :B, :], (1, 0, 2))  # (B, T, H)
    hidden_last = hidden_outs[:, T - 1, :]                     # == hidden[-1]
    return hidden_last, hidden_outs


def encoder_reference(x, raw_params):
    """Pure-JAX reference (eval-mode nn.LSTM), mirroring the kernel's bf16
    matmul operands with f32 accumulation and f32 gate math."""
    B, _, _ = x.shape
    seq = x
    h_last = None
    for p in raw_params:
        H = p["w_hh"].shape[1]
        wih_t = p["w_ih"].T.astype(jnp.bfloat16)
        whh_t = p["w_hh"].T.astype(jnp.bfloat16)
        bias = (p["b_ih"] + p["b_hh"]).astype(jnp.float32)

        def step(carry, x_t, wih_t=wih_t, whh_t=whh_t, bias=bias, H=H):
            h, c = carry
            gates = (jnp.dot(x_t.astype(jnp.bfloat16), wih_t,
                             preferred_element_type=jnp.float32)
                     + jnp.dot(h.astype(jnp.bfloat16), whh_t,
                               preferred_element_type=jnp.float32)
                     + bias)
            i_g = jax.nn.sigmoid(gates[:, 0 * H:1 * H])
            f_g = jax.nn.sigmoid(gates[:, 1 * H:2 * H])
            g_g = jnp.tanh(gates[:, 2 * H:3 * H])
            o_g = jax.nn.sigmoid(gates[:, 3 * H:4 * H])
            c = f_g * c + i_g * g_g
            h = o_g * jnp.tanh(c)
            return (h, c), h

        h0 = jnp.zeros((B, H), jnp.float32)
        c0 = jnp.zeros((B, H), jnp.float32)
        (h_last, _), outs = jax.lax.scan(step, (h0, c0),
                                         jnp.transpose(seq, (1, 0, 2)))
        seq = jnp.transpose(outs, (1, 0, 2))
    return h_last, seq


if __name__ == "__main__":
    B, T = 2, 8
    input_dim, embedding_dim, lstm_layers = 8, 32, 2

    key = jax.random.PRNGKey(0)
    kx, kp = jax.random.split(key)
    x = jax.random.normal(kx, (B, T, input_dim), jnp.float32)
    raw_params = init_encoder_params(kp, input_dim, embedding_dim, lstm_layers)
    prep = prepare_encoder_params(raw_params)

    hidden_last, hidden_outs = encoder_forward(x, prep)
    jax.block_until_ready((hidden_last, hidden_outs))

    assert hidden_last.shape == (B, embedding_dim)
    assert hidden_outs.shape == (B, T, embedding_dim)
    # For a unidirectional LSTM, hidden[-1] == last-layer output at final step.
    assert bool(jnp.allclose(hidden_last, hidden_outs[:, -1, :]))

    # Numerical check against a pure-JAX LSTM reference.
    ref_last, ref_outs = encoder_reference(x, raw_params)
    assert bool(jnp.allclose(hidden_outs, ref_outs, atol=5e-3, rtol=5e-3))
    assert bool(jnp.allclose(hidden_last, ref_last, atol=5e-3, rtol=5e-3))

    print("KERNEL_OK")
</pallas_src>

<mosaic_0001>
module attributes {stable_mosaic.version = 11 : i64} {
  func.func @_fused_lstm_encoder_kernel(%arg0: i32, %arg1: i32, %arg2: memref<8x8x8xf32, #tpu.memory_space<vmem>>, %arg3: memref<8x128xbf16, #tpu.memory_space<vmem>>, %arg4: memref<1x32x128xbf16, #tpu.memory_space<vmem>>, %arg5: memref<2x32x128xbf16, #tpu.memory_space<vmem>>, %arg6: memref<2x1x128xf32, #tpu.memory_space<vmem>>, %arg7: memref<8x8x32xf32, #tpu.memory_space<vmem>>, %arg8: memref<2x8x32xf32, #tpu.memory_space<vmem>>, %arg9: memref<2x8x32xf32, #tpu.memory_space<vmem>>, %arg10: memref<8x8x128xf32, #tpu.memory_space<vmem>>) attributes {dimension_semantics = [#tpu.dimension_semantics<parallel>, #tpu.dimension_semantics<arbitrary>], iteration_bounds = array<i64: 1, 1>, scalar_prefetch = 0 : i64, scratch_operands = 3 : i64, tpu.core_type = #tpu.core_type<tc>, window_params = [{transform_indices = @transform_0, window_bounds = array<i64: 8, 8, 8>}, {pipeline_mode = #tpu.pipeline_mode<synchronous>, transform_indices = @transform_1, window_bounds = array<i64: 8, 128>}, {pipeline_mode = #tpu.pipeline_mode<synchronous>, transform_indices = @transform_2, window_bounds = array<i64: 1, 32, 128>}, {pipeline_mode = #tpu.pipeline_mode<synchronous>, transform_indices = @transform_3, window_bounds = array<i64: 2, 32, 128>}, {pipeline_mode = #tpu.pipeline_mode<synchronous>, transform_indices = @transform_4, window_bounds = array<i64: 2, 1, 128>}, {transform_indices = @transform_5, window_bounds = array<i64: 8, 8, 32>}]} {
    %c0_i32 = arith.constant 0 : i32
    %0 = arith.cmpi eq, %arg1, %c0_i32 : i32
    %1 = arith.extui %0 : i1 to i32
    %c0_i32_0 = arith.constant 0 : i32
    %2 = arith.cmpi ne, %1, %c0_i32_0 : i32
    scf.if %2 {
      %cst_403 = arith.constant 0.000000e+00 : f32
      %774 = vector.broadcast %cst_403 : f32 to vector<2x8x32xf32>
      %c0_404 = arith.constant 0 : index
      %c0_405 = arith.constant 0 : index
      %c0_406 = arith.constant 0 : index
      %775 = vector.load %arg8[%c0_404, %c0_405, %c0_406] : memref<2x8x32xf32, #tpu.memory_space<vmem>>, vector<2x8x32xf32>
      tpu.vector_store %arg8[%c0_404, %c0_405, %c0_406], %774 {strides = array<i32>} : memref<2x8x32xf32, #tpu.memory_space<vmem>>, vector<2x8x32xf32>,
      %cst_407 = arith.constant 0.000000e+00 : f32
      %776 = vector.broadcast %cst_407 : f32 to vector<2x8x32xf32>
      %c0_408 = arith.constant 0 : index
      %c0_409 = arith.constant 0 : index
      %c0_410 = arith.constant 0 : index
      %777 = vector.load %arg9[%c0_408, %c0_409, %c0_410] : memref<2x8x32xf32, #tpu.memory_space<vmem>>, vector<2x8x32xf32>
      tpu.vector_store %arg9[%c0_408, %c0_409, %c0_410], %776 {strides = array<i32>} : memref<2x8x32xf32, #tpu.memory_space<vmem>>, vector<2x8x32xf32>,
    } else {
    }
    %c0 = arith.constant 0 : index
    %c0_1 = arith.constant 0 : index
    %c0_2 = arith.constant 0 : index
    %3 = vector.load %arg2[%c0, %c0_1, %c0_2] : memref<8x8x8xf32, #tpu.memory_space<vmem>>, vector<8x8x8xf32>
    %4 = vector.shape_cast %3 : vector<8x8x8xf32> to vector<64x8xf32>
    %5 = arith.truncf %4 : vector<64x8xf32> to vector<64x8xbf16>
    %c0_3 = arith.constant 0 : index
    %c0_4 = arith.constant 0 : index
    %6 = vector.load %arg3[%c0_3, %c0_4] : memref<8x128xbf16, #tpu.memory_space<vmem>>, vector<8x128xbf16>
    %cst = arith.constant dense<0.000000e+00> : vector<64x128xf32>
    %7 = tpu.matmul %5, %6, %cst {dimension_numbers = #tpu.dot_dimension_numbers<[1], [0], [0], [1], [0, 0, 1, 1], [], []>} : vector<64x8xbf16>, vector<8x128xbf16>, vector<64x128xf32> -> vector<64x128xf32>
    %c0_5 = arith.constant 0 : index
    %c0_6 = arith.constant 0 : index
    %c0_7 = arith.constant 0 : index
    %8 = vector.load %arg6[%c0_5, %c0_6, %c0_7] : memref<2x1x128xf32, #tpu.memory_space<vmem>>, vector<1x1x128xf32>
    %9 = vector.shape_cast %8 : vector<1x1x128xf32> to vector<1x128xf32>
    %10 = vector.broadcast %9 : vector<1x128xf32> to vector<64x128xf32>
    %11 = arith.addf %7, %10 : vector<64x128xf32>
    %12 = vector.shape_cast %11 : vector<64x128xf32> to vector<8x8x128xf32>
    %c0_8 = arith.constant 0 : index
    %c0_9 = arith.constant 0 : index
    %c0_10 = arith.constant 0 : index
    %13 = vector.load %arg10[%c0_8, %c0_9, %c0_10] : memref<8x8x128xf32, #tpu.memory_space<vmem>>, vector<8x8x128xf32>
    tpu.vector_store %arg10[%c0_8, %c0_9, %c0_10], %12 {strides = array<i32>} : memref<8x8x128xf32, #tpu.memory_space<vmem>>, vector<8x8x128xf32>,
    %c0_i32_11 = arith.constant 0 : i32
    %14 = arith.index_cast %c0_i32_11 : i32 to index
    %c0_12 = arith.constant 0 : index
    %c0_13 = arith.constant 0 : index
    %15 = vector.load %arg10[%14, %c0_12, %c0_13] : memref<8x8x128xf32, #tpu.memory_space<vmem>>, vector<1x8x128xf32>
    %16 = vector.shape_cast %15 : vector<1x8x128xf32> to vector<8x128xf32>
    %c0_14 = arith.constant 0 : index
    %c0_15 = arith.constant 0 : index
    %c0_16 = arith.constant 0 : index
    %17 = vector.load %arg8[%c0_14, %c0_15, %c0_16] : memref<2x8x32xf32, #tpu.memory_space<vmem>>, vector<1x8x32xf32>
    %18 = vector.shape_cast %17 : vector<1x8x32xf32> to vector<8x32xf32>
    %c0_17 = arith.constant 0 : index
    %c0_18 = arith.constant 0 : index
    %c0_19 = arith.constant 0 : index
    %19 = vector.load %arg9[%c0_17, %c0_18, %c0_19] : memref<2x8x32xf32, #tpu.memory_space<vmem>>, vector<1x8x32xf32>
    %20 = vector.shape_cast %19 : vector<1x8x32xf32> to vector<8x32xf32>
    %21 = arith.truncf %18 : vector<8x32xf32> to vector<8x32xbf16>
    %c0_20 = arith.constant 0 : index
    %c0_21 = arith.constant 0 : index
    %c0_22 = arith.constant 0 : index
    %22 = vector.load %arg5[%c0_20, %c0_21, %c0_22] : memref<2x32x128xbf16, #tpu.memory_space<vmem>>, vector<1x32x128xbf16>
    %23 = vector.shape_cast %22 : vector<1x32x128xbf16> to vector<32x128xbf16>
    %cst_23 = arith.constant dense<0.000000e+00> : vector<8x128xf32>
    %24 = tpu.matmul %21, %23, %cst_23 {dimension_numbers = #tpu.dot_dimension_numbers<[1], [0], [0], [1], [0, 0, 1, 1], [], []>} : vector<8x32xbf16>, vector<32x128xbf16>, vector<8x128xf32> -> vector<8x128xf32>
    %25 = arith.addf %16, %24 : vector<8x128xf32>
    %26 = vector.extract_strided_slice %25 {offsets = [0, 0], sizes = [8, 32], strides = [1, 1]} : vector<8x128xf32> to vector<8x32xf32>
    %27 = arith.negf %26 : vector<8x32xf32>
    %28 = math.exp %27 : vector<8x32xf32>
    %cst_24 = arith.constant 1.000000e+00 : f32
    %29 = vector.broadcast %cst_24 : f32 to vector<8x32xf32>
    %30 = arith.addf %29, %28 : vector<8x32xf32>
    %31 = arith.divf %29, %30 : vector<8x32xf32>
    %32 = vector.extract_strided_slice %25 {offsets = [0, 32], sizes = [8, 32], strides = [1, 1]} : vector<8x128xf32> to vector<8x32xf32>
    %33 = arith.negf %32 : vector<8x32xf32>
    %34 = math.exp %33 : vector<8x32xf32>
    %cst_25 = arith.constant 1.000000e+00 : f32
    %35 = vector.broadcast %cst_25 : f32 to vector<8x32xf32>
    %36 = arith.addf %35, %34 : vector<8x32xf32>
    %37 = arith.divf %35, %36 : vector<8x32xf32>
    %38 = vector.extract_strided_slice %25 {offsets = [0, 64], sizes = [8, 32], strides = [1, 1]} : vector<8x128xf32> to vector<8x32xf32>
    %39 = math.tanh %38 : vector<8x32xf32>
    %40 = vector.extract_strided_slice %25 {offsets = [0, 96], sizes = [8, 32], strides = [1, 1]} : vector<8x128xf32> to vector<8x32xf32>
    %41 = arith.negf %40 : vector<8x32xf32>
    %42 = math.exp %41 : vector<8x32xf32>
    %cst_26 = arith.constant 1.000000e+00 : f32
    %43 = vector.broadcast %cst_26 : f32 to vector<8x32xf32>
    %44 = arith.addf %43, %42 : vector<8x32xf32>
    %45 = arith.divf %43, %44 : vector<8x32xf32>
    %46 = arith.mulf %37, %20 : vector<8x32xf32>
    %47 = arith.mulf %31, %39 : vector<8x32xf32>
    %48 = arith.addf %46, %47 : vector<8x32xf32>
    %49 = math.tanh %48 : vector<8x32xf32>
    %50 = arith.mulf %45, %49 : vector<8x32xf32>
    %c0_27 = arith.constant 0 : index
    %c0_28 = arith.constant 0 : index
    %c0_29 = arith.constant 0 : index
    %51 = vector.load %arg8[%c0_27, %c0_28, %c0_29] : memref<2x8x32xf32, #tpu.memory_space<vmem>>, vector<1x8x32xf32>
    %52 = vector.shape_cast %51 : vector<1x8x32xf32> to vector<8x32xf32>
    %53 = vector.shape_cast %50 : vector<8x32xf32> to vector<1x8x32xf32>
    tpu.vector_store %arg8[%c0_27, %c0_28, %c0_29], %53 {strides = array<i32>} : memref<2x8x32xf32, #tpu.memory_space<vmem>>, vector<1x8x32xf32>,
    %c0_30 = arith.constant 0 : index
    %c0_31 = arith.constant 0 : index
    %c0_32 = arith.constant 0 : index
    %54 = vector.load %arg9[%c0_30, %c0_31, %c0_32] : memref<2x8x32xf32, #tpu.memory_space<vmem>>, vector<1x8x32xf32>
    %55 = vector.shape_cast %54 : vector<1x8x32xf32> to vector<8x32xf32>
    %56 = vector.shape_cast %48 : vector<8x32xf32> to vector<1x8x32xf32>
    tpu.vector_store %arg9[%c0_30, %c0_31, %c0_32], %56 {strides = array<i32>} : memref<2x8x32xf32, #tpu.memory_space<vmem>>, vector<1x8x32xf32>,
    %c1 = arith.constant 1 : index
    %c0_33 = arith.constant 0 : index
    %c0_34 = arith.constant 0 : index
    %57 = vector.load %arg8[%c1, %c0_33, %c0_34] : memref<2x8x32xf32, #tpu.memory_space<vmem>>, vector<1x8x32xf32>
    %58 = vector.shape_cast %57 : vector<1x8x32xf32> to vector<8x32xf32>
    %c1_35 = arith.constant 1 : index
    %c0_36 = arith.constant 0 : index
    %c0_37 = arith.constant 0 : index
    %59 = vector.load %arg9[%c1_35, %c0_36, %c0_37] : memref<2x8x32xf32, #tpu.memory_space<vmem>>, vector<1x8x32xf32>
    %60 = vector.shape_cast %59 : vector<1x8x32xf32> to vector<8x32xf32>
    %61 = arith.truncf %58 : vector<8x32xf32> to vector<8x32xbf16>
    %c1_38 = arith.constant 1 : index
    %c0_39 = arith.constant 0 : index
    %c0_40 = arith.constant 0 : index
    %62 = vector.load %arg5[%c1_38, %c0_39, %c0_40] : memref<2x32x128xbf16, #tpu.memory_space<vmem>>, vector<1x32x128xbf16>
    %63 = vector.shape_cast %62 : vector<1x32x128xbf16> to vector<32x128xbf16>
    %cst_41 = arith.constant dense<0.000000e+00> : vector<8x128xf32>
    %64 = tpu.matmul %61, %63, %cst_41 {dimension_numbers = #tpu.dot_dimension_numbers<[1], [0], [0], [1], [0, 0, 1, 1], [], []>} : vector<8x32xbf16>, vector<32x128xbf16>, vector<8x128xf32> -> vector<8x128xf32>
    %65 = arith.truncf %50 : vector<8x32xf32> to vector<8x32xbf16>
    %c0_42 = arith.constant 0 : index
    %c0_43 = arith.constant 0 : index
    %c0_44 = arith.constant 0 : index
    %66 = vector.load %arg4[%c0_42, %c0_43, %c0_44] : memref<1x32x128xbf16, #tpu.memory_space<vmem>>, vector<1x32x128xbf16>
    %67 = vector.shape_cast %66 : vector<1x32x128xbf16> to vector<32x128xbf16>
    %cst_45 = arith.constant dense<0.000000e+00> : vector<8x128xf32>
    %68 = tpu.matmul %65, %67, %cst_45 {dimension_numbers = #tpu.dot_dimension_numbers<[1], [0], [0], [1], [0, 0, 1, 1], [], []>} : vector<8x32xbf16>, vector<32x128xbf16>, vector<8x128xf32> -> vector<8x128xf32>
    %69 = arith.addf %68, %64 : vector<8x128xf32>
    %c1_46 = arith.constant 1 : index
    %c0_47 = arith.constant 0 : index
    %c0_48 = arith.constant 0 : index
    %70 = vector.load %arg6[%c1_46, %c0_47, %c0_48] : memref<2x1x128xf32, #tpu.memory_space<vmem>>, vector<1x1x128xf32>
    %71 = vector.shape_cast %70 : vector<1x1x128xf32> to vector<1x128xf32>
    %72 = vector.broadcast %71 : vector<1x128xf32> to vector<8x128xf32>
    %73 = arith.addf %69, %72 : vector<8x128xf32>
    %74 = vector.extract_strided_slice %73 {offsets = [0, 0], sizes = [8, 32], strides = [1, 1]} : vector<8x128xf32> to vector<8x32xf32>
    %75 = arith.negf %74 : vector<8x32xf32>
    %76 = math.exp %75 : vector<8x32xf32>
    %cst_49 = arith.constant 1.000000e+00 : f32
    %77 = vector.broadcast %cst_49 : f32 to vector<8x32xf32>
    %78 = arith.addf %77, %76 : vector<8x32xf32>
    %79 = arith.divf %77, %78 : vector<8x32xf32>
    %80 = vector.extract_strided_slice %73 {offsets = [0, 32], sizes = [8, 32], strides = [1, 1]} : vector<8x128xf32> to vector<8x32xf32>
    %81 = arith.negf %80 : vector<8x32xf32>
    %82 = math.exp %81 : vector<8x32xf32>
    %cst_50 = arith.constant 1.000000e+00 : f32
    %83 = vector.broadcast %cst_50 : f32 to vector<8x32xf32>
    %84 = arith.addf %83, %82 : vector<8x32xf32>
    %85 = arith.divf %83, %84 : vector<8x32xf32>
    %86 = vector.extract_strided_slice %73 {offsets = [0, 64], sizes = [8, 32], strides = [1, 1]} : vector<8x128xf32> to vector<8x32xf32>
    %87 = math.tanh %86 : vector<8x32xf32>
    %88 = vector.extract_strided_slice %73 {offsets = [0, 96], sizes = [8, 32], strides = [1, 1]} : vector<8x128xf32> to vector<8x32xf32>
    %89 = arith.negf %88 : vector<8x32xf32>
    %90 = math.exp %89 : vector<8x32xf32>
    %cst_51 = arith.constant 1.000000e+00 : f32
    %91 = vector.broadcast %cst_51 : f32 to vector<8x32xf32>
    %92 = arith.addf %91, %90 : vector<8x32xf32>
    %93 = arith.divf %91, %92 : vector<8x32xf32>
    %94 = arith.mulf %85, %60 : vector<8x32xf32>
    %95 = arith.mulf %79, %87 : vector<8x32xf32>
    %96 = arith.addf %94, %95 : vector<8x32xf32>
    %97 = math.tanh %96 : vector<8x32xf32>
    %98 = arith.mulf %93, %97 : vector<8x32xf32>
    %c1_52 = arith.constant 1 : index
    %c0_53 = arith.constant 0 : index
    %c0_54 = arith.constant 0 : index
    %99 = vector.load %arg8[%c1_52, %c0_53, %c0_54] : memref<2x8x32xf32, #tpu.memory_space<vmem>>, vector<1x8x32xf32>
    %100 = vector.shape_cast %99 : vector<1x8x32xf32> to vector<8x32xf32>
    %101 = vector.shape_cast %98 : vector<8x32xf32> to vector<1x8x32xf32>
    tpu.vector_store %arg8[%c1_52, %c0_53, %c0_54], %101 {strides = array<i32>} : memref<2x8x32xf32, #tpu.memory_space<vmem>>, vector<1x8x32xf32>,
    %c1_55 = arith.constant 1 : index
    %c0_56 = arith.constant 0 : index
    %c0_57 = arith.constant 0 : index
    %102 = vector.load %arg9[%c1_55, %c0_56, %c0_57] : memref<2x8x32xf32, #tpu.memory_space<vmem>>, vector<1x8x32xf32>
    %103 = vector.shape_cast %102 : vector<1x8x32xf32> to vector<8x32xf32>
    %104 = vector.shape_cast %96 : vector<8x32xf32> to vector<1x8x32xf32>
    tpu.vector_store %arg9[%c1_55, %c0_56, %c0_57], %104 {strides = array<i32>} : memref<2x8x32xf32, #tpu.memory_space<vmem>>, vector<1x8x32xf32>,
    %105 = arith.index_cast %c0_i32_11 : i32 to index
    %c0_58 = arith.constant 0 : index
    %c0_59 = arith.constant 0 : index
    %106 = vector.load %arg7[%105, %c0_58, %c0_59] : memref<8x8x32xf32, #tpu.memory_space<vmem>>, vector<1x8x32xf32>
    %107 = vector.shape_cast %106 : vector<1x8x32xf32> to vector<8x32xf32>
    %108 = vector.shape_cast %98 : vector<8x32xf32> to vector<1x8x32xf32>
    tpu.vector_store %arg7[%105, %c0_58, %c0_59], %108 {strides = array<i32>} : memref<8x8x32xf32, #tpu.memory_space<vmem>>, vector<1x8x32xf32>,
    %c1_i32 = arith.constant 1 : i32
    %109 = arith.index_cast %c1_i32 : i32 to index
    %c0_60 = arith.constant 0 : index
    %c0_61 = arith.constant 0 : index
    %110 = vector.load %arg10[%109, %c0_60, %c0_61] : memref<8x8x128xf32, #tpu.memory_space<vmem>>, vector<1x8x128xf32>
    %111 = vector.shape_cast %110 : vector<1x8x128xf32> to vector<8x128xf32>
    %c0_62 = arith.constant 0 : index
    %c0_63 = arith.constant 0 : index
    %c0_64 = arith.constant 0 : index
    %112 = vector.load %arg8[%c0_62, %c0_63, %c0_64] : memref<2x8x32xf32, #tpu.memory_space<vmem>>, vector<1x8x32xf32>
    %113 = vector.shape_cast %112 : vector<1x8x32xf32> to vector<8x32xf32>
    %c0_65 = arith.constant 0 : index
    %c0_66 = arith.constant 0 : index
    %c0_67 = arith.constant 0 : index
    %114 = vector.load %arg9[%c0_65, %c0_66, %c0_67] : memref<2x8x32xf32, #tpu.memory_space<vmem>>, vector<1x8x32xf32>
    %115 = vector.shape_cast %114 : vector<1x8x32xf32> to vector<8x32xf32>
    %116 = arith.truncf %113 : vector<8x32xf32> to vector<8x32xbf16>
    %c0_68 = arith.constant 0 : index
    %c0_69 = arith.constant 0 : index
    %c0_70 = arith.constant 0 : index
    %117 = vector.load %arg5[%c0_68, %c0_69, %c0_70] : memref<2x32x128xbf16, #tpu.memory_space<vmem>>, vector<1x32x128xbf16>
    %118 = vector.shape_cast %117 : vector<1x32x128xbf16> to vector<32x128xbf16>
    %cst_71 = arith.constant dense<0.000000e+00> : vector<8x128xf32>
    %119 = tpu.matmul %116, %118, %cst_71 {dimension_numbers = #tpu.dot_dimension_numbers<[1], [0], [0], [1], [0, 0, 1, 1], [], []>} : vector<8x32xbf16>, vector<32x128xbf16>, vector<8x128xf32> -> vector<8x128xf32>
    %120 = arith.addf %111, %119 : vector<8x128xf32>
    %121 = vector.extract_strided_slice %120 {offsets = [0, 0], sizes = [8, 32], strides = [1, 1]} : vector<8x128xf32> to vector<8x32xf32>
    %122 = arith.negf %121 : vector<8x32xf32>
    %123 = math.exp %122 : vector<8x32xf32>
    %cst_72 = arith.constant 1.000000e+00 : f32
    %124 = vector.broadcast %cst_72 : f32 to vector<8x32xf32>
    %125 = arith.addf %124, %123 : vector<8x32xf32>
    %126 = arith.divf %124, %125 : vector<8x32xf32>
    %127 = vector.extract_strided_slice %120 {offsets = [0, 32], sizes = [8, 32], strides = [1, 1]} : vector<8x128xf32> to vector<8x32xf32>
    %128 = arith.negf %127 : vector<8x32xf32>
    %129 = math.exp %128 : vector<8x32xf32>
    %cst_73 = arith.constant 1.000000e+00 : f32
    %130 = vector.broadcast %cst_73 : f32 to vector<8x32xf32>
    %131 = arith.addf %130, %129 : vector<8x32xf32>
    %132 = arith.divf %130, %131 : vector<8x32xf32>
    %133 = vector.extract_strided_slice %120 {offsets = [0, 64], sizes = [8, 32], strides = [1, 1]} : vector<8x128xf32> to vector<8x32xf32>
    %134 = math.tanh %133 : vector<8x32xf32>
    %135 = vector.extract_strided_slice %120 {offsets = [0, 96], sizes = [8, 32], strides = [1, 1]} : vector<8x128xf32> to vector<8x32xf32>
    %136 = arith.negf %135 : vector<8x32xf32>
    %137 = math.exp %136 : vector<8x32xf32>
    %cst_74 = arith.constant 1.000000e+00 : f32
    %138 = vector.broadcast %cst_74 : f32 to vector<8x32xf32>
    %139 = arith.addf %138, %137 : vector<8x32xf32>
    %140 = arith.divf %138, %139 : vector<8x32xf32>
    %141 = arith.mulf %132, %115 : vector<8x32xf32>
    %142 = arith.mulf %126, %134 : vector<8x32xf32>
    %143 = arith.addf %141, %142 : vector<8x32xf32>
    %144 = math.tanh %143 : vector<8x32xf32>
    %145 = arith.mulf %140, %144 : vector<8x32xf32>
    %c0_75 = arith.constant 0 : index
    %c0_76 = arith.constant 0 : index
    %c0_77 = arith.constant 0 : index
    %146 = vector.load %arg8[%c0_75, %c0_76, %c0_77] : memref<2x8x32xf32, #tpu.memory_space<vmem>>, vector<1x8x32xf32>
    %147 = vector.shape_cast %146 : vector<1x8x32xf32> to vector<8x32xf32>
    %148 = vector.shape_cast %145 : vector<8x32xf32> to vector<1x8x32xf32>
    tpu.vector_store %arg8[%c0_75, %c0_76, %c0_77], %148 {strides = array<i32>} : memref<2x8x32xf32, #tpu.memory_space<vmem>>, vector<1x8x32xf32>,
    %c0_78 = arith.constant 0 : index
    %c0_79 = arith.constant 0 : index
    %c0_80 = arith.constant 0 : index
    %149 = vector.load %arg9[%c0_78, %c0_79, %c0_80] : memref<2x8x32xf32, #tpu.memory_space<vmem>>, vector<1x8x32xf32>
    %150 = vector.shape_cast %149 : vector<1x8x32xf32> to vector<8x32xf32>
    %151 = vector.shape_cast %143 : vector<8x32xf32> to vector<1x8x32xf32>
    tpu.vector_store %arg9[%c0_78, %c0_79, %c0_80], %151 {strides = array<i32>} : memref<2x8x32xf32, #tpu.memory_space<vmem>>, vector<1x8x32xf32>,
    %c1_81 = arith.constant 1 : index
    %c0_82 = arith.constant 0 : index
    %c0_83 = arith.constant 0 : index
    %152 = vector.load %arg8[%c1_81, %c0_82, %c0_83] : memref<2x8x32xf32, #tpu.memory_space<vmem>>, vector<1x8x32xf32>
    %153 = vector.shape_cast %152 : vector<1x8x32xf32> to vector<8x32xf32>
    %c1_84 = arith.constant 1 : index
    %c0_85 = arith.constant 0 : index
    %c0_86 = arith.constant 0 : index
    %154 = vector.load %arg9[%c1_84, %c0_85, %c0_86] : memref<2x8x32xf32, #tpu.memory_space<vmem>>, vector<1x8x32xf32>
    %155 = vector.shape_cast %154 : vector<1x8x32xf32> to vector<8x32xf32>
    %156 = arith.truncf %153 : vector<8x32xf32> to vector<8x32xbf16>
    %c1_87 = arith.constant 1 : index
    %c0_88 = arith.constant 0 : index
    %c0_89 = arith.constant 0 : index
    %157 = vector.load %arg5[%c1_87, %c0_88, %c0_89] : memref<2x32x128xbf16, #tpu.memory_space<vmem>>, vector<1x32x128xbf16>
    %158 = vector.shape_cast %157 : vector<1x32x128xbf16> to vector<32x128xbf16>
    %cst_90 = arith.constant dense<0.000000e+00> : vector<8x128xf32>
    %159 = tpu.matmul %156, %158, %cst_90 {dimension_numbers = #tpu.dot_dimension_numbers<[1], [0], [0], [1], [0, 0, 1, 1], [], []>} : vector<8x32xbf16>, vector<32x128xbf16>, vector<8x128xf32> -> vector<8x128xf32>
    %160 = arith.truncf %145 : vector<8x32xf32> to vector<8x32xbf16>
    %c0_91 = arith.constant 0 : index
    %c0_92 = arith.constant 0 : index
    %c0_93 = arith.constant 0 : index
    %161 = vector.load %arg4[%c0_91, %c0_92, %c0_93] : memref<1x32x128xbf16, #tpu.memory_space<vmem>>, vector<1x32x128xbf16>
    %162 = vector.shape_cast %161 : vector<1x32x128xbf16> to vector<32x128xbf16>
    %cst_94 = arith.constant dense<0.000000e+00> : vector<8x128xf32>
    %163 = tpu.matmul %160, %162, %cst_94 {dimension_numbers = #tpu.dot_dimension_numbers<[1], [0], [0], [1], [0, 0, 1, 1], [], []>} : vector<8x32xbf16>, vector<32x128xbf16>, vector<8x128xf32> -> vector<8x128xf32>
    %164 = arith.addf %163, %159 : vector<8x128xf32>
    %c1_95 = arith.constant 1 : index
    %c0_96 = arith.constant 0 : index
    %c0_97 = arith.constant 0 : index
    %165 = vector.load %arg6[%c1_95, %c0_96, %c0_97] : memref<2x1x128xf32, #tpu.memory_space<vmem>>, vector<1x1x128xf32>
    %166 = vector.shape_cast %165 : vector<1x1x128xf32> to vector<1x128xf32>
    %167 = vector.broadcast %166 : vector<1x128xf32> to vector<8x128xf32>
    %168 = arith.addf %164, %167 : vector<8x128xf32>
    %169 = vector.extract_strided_slice %168 {offsets = [0, 0], sizes = [8, 32], strides = [1, 1]} : vector<8x128xf32> to vector<8x32xf32>
    %170 = arith.negf %169 : vector<8x32xf32>
    %171 = math.exp %170 : vector<8x32xf32>
    %cst_98 = arith.constant 1.000000e+00 : f32
    %172 = vector.broadcast %cst_98 : f32 to vector<8x32xf32>
    %173 = arith.addf %172, %171 : vector<8x32xf32>
    %174 = arith.divf %172, %173 : vector<8x32xf32>
    %175 = vector.extract_strided_slice %168 {offsets = [0, 32], sizes = [8, 32], strides = [1, 1]} : vector<8x128xf32> to vector<8x32xf32>
    %176 = arith.negf %175 : vector<8x32xf32>
    %177 = math.exp %176 : vector<8x32xf32>
    %cst_99 = arith.constant 1.000000e+00 : f32
    %178 = vector.broadcast %cst_99 : f32 to vector<8x32xf32>
    %179 = arith.addf %178, %177 : vector<8x32xf32>
    %180 = arith.divf %178, %179 : vector<8x32xf32>
    %181 = vector.extract_strided_slice %168 {offsets = [0, 64], sizes = [8, 32], strides = [1, 1]} : vector<8x128xf32> to vector<8x32xf32>
    %182 = math.tanh %181 : vector<8x32xf32>
    %183 = vector.extract_strided_slice %168 {offsets = [0, 96], sizes = [8, 32], strides = [1, 1]} : vector<8x128xf32> to vector<8x32xf32>
    %184 = arith.negf %183 : vector<8x32xf32>
    %185 = math.exp %184 : vector<8x32xf32>
    %cst_100 = arith.constant 1.000000e+00 : f32
    %186 = vector.broadcast %cst_100 : f32 to vector<8x32xf32>
    %187 = arith.addf %186, %185 : vector<8x32xf32>
    %188 = arith.divf %186, %187 : vector<8x32xf32>
    %189 = arith.mulf %180, %155 : vector<8x32xf32>
    %190 = arith.mulf %174, %182 : vector<8x32xf32>
    %191 = arith.addf %189, %190 : vector<8x32xf32>
    %192 = math.tanh %191 : vector<8x32xf32>
    %193 = arith.mulf %188, %192 : vector<8x32xf32>
    %c1_101 = arith.constant 1 : index
    %c0_102 = arith.constant 0 : index
    %c0_103 = arith.constant 0 : index
    %194 = vector.load %arg8[%c1_101, %c0_102, %c0_103] : memref<2x8x32xf32, #tpu.memory_space<vmem>>, vector<1x8x32xf32>
    %195 = vector.shape_cast %194 : vector<1x8x32xf32> to vector<8x32xf32>
    %196 = vector.shape_cast %193 : vector<8x32xf32> to vector<1x8x32xf32>
    tpu.vector_store %arg8[%c1_101, %c0_102, %c0_103], %196 {strides = array<i32>} : memref<2x8x32xf32, #tpu.memory_space<vmem>>, vector<1x8x32xf32>,
    %c1_104 = arith.constant 1 : index
    %c0_105 = arith.constant 0 : index
    %c0_106 = arith.constant 0 : index
    %197 = vector.load %arg9[%c1_104, %c0_105, %c0_106] : memref<2x8x32xf32, #tpu.memory_space<vmem>>, vector<1x8x32xf32>
    %198 = vector.shape_cast %197 : vector<1x8x32xf32> to vector<8x32xf32>
    %199 = vector.shape_cast %191 : vector<8x32xf32> to vector<1x8x32xf32>
    tpu.vector_store %arg9[%c1_104, %c0_105, %c0_106], %199 {strides = array<i32>} : memref<2x8x32xf32, #tpu.memory_space<vmem>>, vector<1x8x32xf32>,
    %200 = arith.index_cast %c1_i32 : i32 to index
    %c0_107 = arith.constant 0 : index
    %c0_108 = arith.constant 0 : index
    %201 = vector.load %arg7[%200, %c0_107, %c0_108] : memref<8x8x32xf32, #tpu.memory_space<vmem>>, vector<1x8x32xf32>
    %202 = vector.shape_cast %201 : vector<1x8x32xf32> to vector<8x32xf32>
    %203 = vector.shape_cast %193 : vector<8x32xf32> to vector<1x8x32xf32>
    tpu.vector_store %arg7[%200, %c0_107, %c0_108], %203 {strides = array<i32>} : memref<8x8x32xf32, #tpu.memory_space<vmem>>, vector<1x8x32xf32>,
    %c2_i32 = arith.constant 2 : i32
    %204 = arith.index_cast %c2_i32 : i32 to index
    %c0_109 = arith.constant 0 : index
    %c0_110 = arith.constant 0 : index
    %205 = vector.load %arg10[%204, %c0_109, %c0_110] : memref<8x8x128xf32, #tpu.memory_space<vmem>>, vector<1x8x128xf32>
    %206 = vector.shape_cast %205 : vector<1x8x128xf32> to vector<8x128xf32>
    %c0_111 = arith.constant 0 : index
    %c0_112 = arith.constant 0 : index
    %c0_113 = arith.constant 0 : index
    %207 = vector.load %arg8[%c0_111, %c0_112, %c0_113] : memref<2x8x32xf32, #tpu.memory_space<vmem>>, vector<1x8x32xf32>
    %208 = vector.shape_cast %207 : vector<1x8x32xf32> to vector<8x32xf32>
    %c0_114 = arith.constant 0 : index
    %c0_115 = arith.constant 0 : index
    %c0_116 = arith.constant 0 : index
    %209 = vector.load %arg9[%c0_114, %c0_115, %c0_116] : memref<2x8x32xf32, #tpu.memory_space<vmem>>, vector<1x8x32xf32>
    %210 = vector.shape_cast %209 : vector<1x8x32xf32> to vector<8x32xf32>
    %211 = arith.truncf %208 : vector<8x32xf32> to vector<8x32xbf16>
    %c0_117 = arith.constant 0 : index
    %c0_118 = arith.constant 0 : index
    %c0_119 = arith.constant 0 : index
    %212 = vector.load %arg5[%c0_117, %c0_118, %c0_119] : memref<2x32x128xbf16, #tpu.memory_space<vmem>>, vector<1x32x128xbf16>
    %213 = vector.shape_cast %212 : vector<1x32x128xbf16> to vector<32x128xbf16>
    %cst_120 = arith.constant dense<0.000000e+00> : vector<8x128xf32>
    %214 = tpu.matmul %211, %213, %cst_120 {dimension_numbers = #tpu.dot_dimension_numbers<[1], [0], [0], [1], [0, 0, 1, 1], [], []>} : vector<8x32xbf16>, vector<32x128xbf16>, vector<8x128xf32> -> vector<8x128xf32>
    %215 = arith.addf %206, %214 : vector<8x128xf32>
    %216 = vector.extract_strided_slice %215 {offsets = [0, 0], sizes = [8, 32], strides = [1, 1]} : vector<8x128xf32> to vector<8x32xf32>
    %217 = arith.negf %216 : vector<8x32xf32>
    %218 = math.exp %217 : vector<8x32xf32>
    %cst_121 = arith.constant 1.000000e+00 : f32
    %219 = vector.broadcast %cst_121 : f32 to vector<8x32xf32>
    %220 = arith.addf %219, %218 : vector<8x32xf32>
    %221 = arith.divf %219, %220 : vector<8x32xf32>
    %222 = vector.extract_strided_slice %215 {offsets = [0, 32], sizes = [8, 32], strides = [1, 1]} : vector<8x128xf32> to vector<8x32xf32>
    %223 = arith.negf %222 : vector<8x32xf32>
    %224 = math.exp %223 : vector<8x32xf32>
    %cst_122 = arith.constant 1.000000e+00 : f32
    %225 = vector.broadcast %cst_122 : f32 to vector<8x32xf32>
    %226 = arith.addf %225, %224 : vector<8x32xf32>
    %227 = arith.divf %225, %226 : vector<8x32xf32>
    %228 = vector.extract_strided_slice %215 {offsets = [0, 64], sizes = [8, 32], strides = [1, 1]} : vector<8x128xf32> to vector<8x32xf32>
    %229 = math.tanh %228 : vector<8x32xf32>
    %230 = vector.extract_strided_slice %215 {offsets = [0, 96], sizes = [8, 32], strides = [1, 1]} : vector<8x128xf32> to vector<8x32xf32>
    %231 = arith.negf %230 : vector<8x32xf32>
    %232 = math.exp %231 : vector<8x32xf32>
    %cst_123 = arith.constant 1.000000e+00 : f32
    %233 = vector.broadcast %cst_123 : f32 to vector<8x32xf32>
    %234 = arith.addf %233, %232 : vector<8x32xf32>
    %235 = arith.divf %233, %234 : vector<8x32xf32>
    %236 = arith.mulf %227, %210 : vector<8x32xf32>
    %237 = arith.mulf %221, %229 : vector<8x32xf32>
    %238 = arith.addf %236, %237 : vector<8x32xf32>
    %239 = math.tanh %238 : vector<8x32xf32>
    %240 = arith.mulf %235, %239 : vector<8x32xf32>
    %c0_124 = arith.constant 0 : index
    %c0_125 = arith.constant 0 : index
    %c0_126 = arith.constant 0 : index
    %241 = vector.load %arg8[%c0_124, %c0_125, %c0_126] : memref<2x8x32xf32, #tpu.memory_space<vmem>>, vector<1x8x32xf32>
    %242 = vector.shape_cast %241 : vector<1x8x32xf32> to vector<8x32xf32>
    %243 = vector.shape_cast %240 : vector<8x32xf32> to vector<1x8x32xf32>
    tpu.vector_store %arg8[%c0_124, %c0_125, %c0_126], %243 {strides = array<i32>} : memref<2x8x32xf32, #tpu.memory_space<vmem>>, vector<1x8x32xf32>,
    %c0_127 = arith.constant 0 : index
    %c0_128 = arith.constant 0 : index
    %c0_129 = arith.constant 0 : index
    %244 = vector.load %arg9[%c0_127, %c0_128, %c0_129] : memref<2x8x32xf32, #tpu.memory_space<vmem>>, vector<1x8x32xf32>
    %245 = vector.shape_cast %244 : vector<1x8x32xf32> to vector<8x32xf32>
    %246 = vector.shape_cast %238 : vector<8x32xf32> to vector<1x8x32xf32>
    tpu.vector_store %arg9[%c0_127, %c0_128, %c0_129], %246 {strides = array<i32>} : memref<2x8x32xf32, #tpu.memory_space<vmem>>, vector<1x8x32xf32>,
    %c1_130 = arith.constant 1 : index
    %c0_131 = arith.constant 0 : index
    %c0_132 = arith.constant 0 : index
    %247 = vector.load %arg8[%c1_130, %c0_131, %c0_132] : memref<2x8x32xf32, #tpu.memory_space<vmem>>, vector<1x8x32xf32>
    %248 = vector.shape_cast %247 : vector<1x8x32xf32> to vector<8x32xf32>
    %c1_133 = arith.constant 1 : index
    %c0_134 = arith.constant 0 : index
    %c0_135 = arith.constant 0 : index
    %249 = vector.load %arg9[%c1_133, %c0_134, %c0_135] : memref<2x8x32xf32, #tpu.memory_space<vmem>>, vector<1x8x32xf32>
    %250 = vector.shape_cast %249 : vector<1x8x32xf32> to vector<8x32xf32>
    %251 = arith.truncf %248 : vector<8x32xf32> to vector<8x32xbf16>
    %c1_136 = arith.constant 1 : index
    %c0_137 = arith.constant 0 : index
    %c0_138 = arith.constant 0 : index
    %252 = vector.load %arg5[%c1_136, %c0_137, %c0_138] : memref<2x32x128xbf16, #tpu.memory_space<vmem>>, vector<1x32x128xbf16>
    %253 = vector.shape_cast %252 : vector<1x32x128xbf16> to vector<32x128xbf16>
    %cst_139 = arith.constant dense<0.000000e+00> : vector<8x128xf32>
    %254 = tpu.matmul %251, %253, %cst_139 {dimension_numbers = #tpu.dot_dimension_numbers<[1], [0], [0], [1], [0, 0, 1, 1], [], []>} : vector<8x32xbf16>, vector<32x128xbf16>, vector<8x128xf32> -> vector<8x128xf32>
    %255 = arith.truncf %240 : vector<8x32xf32> to vector<8x32xbf16>
    %c0_140 = arith.constant 0 : index
    %c0_141 = arith.constant 0 : index
    %c0_142 = arith.constant 0 : index
    %256 = vector.load %arg4[%c0_140, %c0_141, %c0_142] : memref<1x32x128xbf16, #tpu.memory_space<vmem>>, vector<1x32x128xbf16>
    %257 = vector.shape_cast %256 : vector<1x32x128xbf16> to vector<32x128xbf16>
    %cst_143 = arith.constant dense<0.000000e+00> : vector<8x128xf32>
    %258 = tpu.matmul %255, %257, %cst_143 {dimension_numbers = #tpu.dot_dimension_numbers<[1], [0], [0], [1], [0, 0, 1, 1], [], []>} : vector<8x32xbf16>, vector<32x128xbf16>, vector<8x128xf32> -> vector<8x128xf32>
    %259 = arith.addf %258, %254 : vector<8x128xf32>
    %c1_144 = arith.constant 1 : index
    %c0_145 = arith.constant 0 : index
    %c0_146 = arith.constant 0 : index
    %260 = vector.load %arg6[%c1_144, %c0_145, %c0_146] : memref<2x1x128xf32, #tpu.memory_space<vmem>>, vector<1x1x128xf32>
    %261 = vector.shape_cast %260 : vector<1x1x128xf32> to vector<1x128xf32>
    %262 = vector.broadcast %261 : vector<1x128xf32> to vector<8x128xf32>
    %263 = arith.addf %259, %262 : vector<8x128xf32>
    %264 = vector.extract_strided_slice %263 {offsets = [0, 0], sizes = [8, 32], strides = [1, 1]} : vector<8x128xf32> to vector<8x32xf32>
    %265 = arith.negf %264 : vector<8x32xf32>
    %266 = math.exp %265 : vector<8x32xf32>
    %cst_147 = arith.constant 1.000000e+00 : f32
    %267 = vector.broadcast %cst_147 : f32 to vector<8x32xf32>
    %268 = arith.addf %267, %266 : vector<8x32xf32>
    %269 = arith.divf %267, %268 : vector<8x32xf32>
    %270 = vector.extract_strided_slice %263 {offsets = [0, 32], sizes = [8, 32], strides = [1, 1]} : vector<8x128xf32> to vector<8x32xf32>
    %271 = arith.negf %270 : vector<8x32xf32>
    %272 = math.exp %271 : vector<8x32xf32>
    %cst_148 = arith.constant 1.000000e+00 : f32
    %273 = vector.broadcast %cst_148 : f32 to vector<8x32xf32>
    %274 = arith.addf %273, %272 : vector<8x32xf32>
    %275 = arith.divf %273, %274 : vector<8x32xf32>
    %276 = vector.extract_strided_slice %263 {offsets = [0, 64], sizes = [8, 32], strides = [1, 1]} : vector<8x128xf32> to vector<8x32xf32>
    %277 = math.tanh %276 : vector<8x32xf32>
    %278 = vector.extract_strided_slice %263 {offsets = [0, 96], sizes = [8, 32], strides = [1, 1]} : vector<8x128xf32> to vector<8x32xf32>
    %279 = arith.negf %278 : vector<8x32xf32>
    %280 = math.exp %279 : vector<8x32xf32>
    %cst_149 = arith.constant 1.000000e+00 : f32
    %281 = vector.broadcast %cst_149 : f32 to vector<8x32xf32>
    %282 = arith.addf %281, %280 : vector<8x32xf32>
    %283 = arith.divf %281, %282 : vector<8x32xf32>
    %284 = arith.mulf %275, %250 : vector<8x32xf32>
    %285 = arith.mulf %269, %277 : vector<8x32xf32>
    %286 = arith.addf %284, %285 : vector<8x32xf32>
    %287 = math.tanh %286 : vector<8x32xf32>
    %288 = arith.mulf %283, %287 : vector<8x32xf32>
    %c1_150 = arith.constant 1 : index
    %c0_151 = arith.constant 0 : index
    %c0_152 = arith.constant 0 : index
    %289 = vector.load %arg8[%c1_150, %c0_151, %c0_152] : memref<2x8x32xf32, #tpu.memory_space<vmem>>, vector<1x8x32xf32>
    %290 = vector.shape_cast %289 : vector<1x8x32xf32> to vector<8x32xf32>
    %291 = vector.shape_cast %288 : vector<8x32xf32> to vector<1x8x32xf32>
    tpu.vector_store %arg8[%c1_150, %c0_151, %c0_152], %291 {strides = array<i32>} : memref<2x8x32xf32, #tpu.memory_space<vmem>>, vector<1x8x32xf32>,
    %c1_153 = arith.constant 1 : index
    %c0_154 = arith.constant 0 : index
    %c0_155 = arith.constant 0 : index
    %292 = vector.load %arg9[%c1_153, %c0_154, %c0_155] : memref<2x8x32xf32, #tpu.memory_space<vmem>>, vector<1x8x32xf32>
    %293 = vector.shape_cast %292 : vector<1x8x32xf32> to vector<8x32xf32>
    %294 = vector.shape_cast %286 : vector<8x32xf32> to vector<1x8x32xf32>
    tpu.vector_store %arg9[%c1_153, %c0_154, %c0_155], %294 {strides = array<i32>} : memref<2x8x32xf32, #tpu.memory_space<vmem>>, vector<1x8x32xf32>,
    %295 = arith.index_cast %c2_i32 : i32 to index
    %c0_156 = arith.constant 0 : index
    %c0_157 = arith.constant 0 : index
    %296 = vector.load %arg7[%295, %c0_156, %c0_157] : memref<8x8x32xf32, #tpu.memory_space<vmem>>, vector<1x8x32xf32>
    %297 = vector.shape_cast %296 : vector<1x8x32xf32> to vector<8x32xf32>
    %298 = vector.shape_cast %288 : vector<8x32xf32> to vector<1x8x32xf32>
    tpu.vector_store %arg7[%295, %c0_156, %c0_157], %298 {strides = array<i32>} : memref<8x8x32xf32, #tpu.memory_space<vmem>>, vector<1x8x32xf32>,
    %c3_i32 = arith.constant 3 : i32
    %299 = arith.index_cast %c3_i32 : i32 to index
    %c0_158 = arith.constant 0 : index
    %c0_159 = arith.constant 0 : index
    %300 = vector.load %arg10[%299, %c0_158, %c0_159] : memref<8x8x128xf32, #tpu.memory_space<vmem>>, vector<1x8x128xf32>
    %301 = vector.shape_cast %300 : vector<1x8x128xf32> to vector<8x128xf32>
    %c0_160 = arith.constant 0 : index
    %c0_161 = arith.constant 0 : index
    %c0_162 = arith.constant 0 : index
    %302 = vector.load %arg8[%c0_160, %c0_161, %c0_162] : memref<2x8x32xf32, #tpu.memory_space<vmem>>, vector<1x8x32xf32>
    %303 = vector.shape_cast %302 : vector<1x8x32xf32> to vector<8x32xf32>
    %c0_163 = arith.constant 0 : index
    %c0_164 = arith.constant 0 : index
    %c0_165 = arith.constant 0 : index
    %304 = vector.load %arg9[%c0_163, %c0_164, %c0_165] : memref<2x8x32xf32, #tpu.memory_space<vmem>>, vector<1x8x32xf32>
    %305 = vector.shape_cast %304 : vector<1x8x32xf32> to vector<8x32xf32>
    %306 = arith.truncf %303 : vector<8x32xf32> to vector<8x32xbf16>
    %c0_166 = arith.constant 0 : index
    %c0_167 = arith.constant 0 : index
    %c0_168 = arith.constant 0 : index
    %307 = vector.load %arg5[%c0_166, %c0_167, %c0_168] : memref<2x32x128xbf16, #tpu.memory_space<vmem>>, vector<1x32x128xbf16>
    %308 = vector.shape_cast %307 : vector<1x32x128xbf16> to vector<32x128xbf16>
    %cst_169 = arith.constant dense<0.000000e+00> : vector<8x128xf32>
    %309 = tpu.matmul %306, %308, %cst_169 {dimension_numbers = #tpu.dot_dimension_numbers<[1], [0], [0], [1], [0, 0, 1, 1], [], []>} : vector<8x32xbf16>, vector<32x128xbf16>, vector<8x128xf32> -> vector<8x128xf32>
    %310 = arith.addf %301, %309 : vector<8x128xf32>
    %311 = vector.extract_strided_slice %310 {offsets = [0, 0], sizes = [8, 32], strides = [1, 1]} : vector<8x128xf32> to vector<8x32xf32>
    %312 = arith.negf %311 : vector<8x32xf32>
    %313 = math.exp %312 : vector<8x32xf32>
    %cst_170 = arith.constant 1.000000e+00 : f32
    %314 = vector.broadcast %cst_170 : f32 to vector<8x32xf32>
    %315 = arith.addf %314, %313 : vector<8x32xf32>
    %316 = arith.divf %314, %315 : vector<8x32xf32>
    %317 = vector.extract_strided_slice %310 {offsets = [0, 32], sizes = [8, 32], strides = [1, 1]} : vector<8x128xf32> to vector<8x32xf32>
    %318 = arith.negf %317 : vector<8x32xf32>
    %319 = math.exp %318 : vector<8x32xf32>
    %cst_171 = arith.constant 1.000000e+00 : f32
    %320 = vector.broadcast %cst_171 : f32 to vector<8x32xf32>
    %321 = arith.addf %320, %319 : vector<8x32xf32>
    %322 = arith.divf %320, %321 : vector<8x32xf32>
    %323 = vector.extract_strided_slice %310 {offsets = [0, 64], sizes = [8, 32], strides = [1, 1]} : vector<8x128xf32> to vector<8x32xf32>
    %324 = math.tanh %323 : vector<8x32xf32>
    %325 = vector.extract_strided_slice %310 {offsets = [0, 96], sizes = [8, 32], strides = [1, 1]} : vector<8x128xf32> to vector<8x32xf32>
    %326 = arith.negf %325 : vector<8x32xf32>
    %327 = math.exp %326 : vector<8x32xf32>
    %cst_172 = arith.constant 1.000000e+00 : f32
    %328 = vector.broadcast %cst_172 : f32 to vector<8x32xf32>
    %329 = arith.addf %328, %327 : vector<8x32xf32>
    %330 = arith.divf %328, %329 : vector<8x32xf32>
    %331 = arith.mulf %322, %305 : vector<8x32xf32>
    %332 = arith.mulf %316, %324 : vector<8x32xf32>
    %333 = arith.addf %331, %332 : vector<8x32xf32>
    %334 = math.tanh %333 : vector<8x32xf32>
    %335 = arith.mulf %330, %334 : vector<8x32xf32>
    %c0_173 = arith.constant 0 : index
    %c0_174 = arith.constant 0 : index
    %c0_175 = arith.constant 0 : index
    %336 = vector.load %arg8[%c0_173, %c0_174, %c0_175] : memref<2x8x32xf32, #tpu.memory_space<vmem>>, vector<1x8x32xf32>
    %337 = vector.shape_cast %336 : vector<1x8x32xf32> to vector<8x32xf32>
    %338 = vector.shape_cast %335 : vector<8x32xf32> to vector<1x8x32xf32>
    tpu.vector_store %arg8[%c0_173, %c0_174, %c0_175], %338 {strides = array<i32>} : memref<2x8x32xf32, #tpu.memory_space<vmem>>, vector<1x8x32xf32>,
    %c0_176 = arith.constant 0 : index
    %c0_177 = arith.constant 0 : index
    %c0_178 = arith.constant 0 : index
    %339 = vector.load %arg9[%c0_176, %c0_177, %c0_178] : memref<2x8x32xf32, #tpu.memory_space<vmem>>, vector<1x8x32xf32>
    %340 = vector.shape_cast %339 : vector<1x8x32xf32> to vector<8x32xf32>
    %341 = vector.shape_cast %333 : vector<8x32xf32> to vector<1x8x32xf32>
    tpu.vector_store %arg9[%c0_176, %c0_177, %c0_178], %341 {strides = array<i32>} : memref<2x8x32xf32, #tpu.memory_space<vmem>>, vector<1x8x32xf32>,
    %c1_179 = arith.constant 1 : index
    %c0_180 = arith.constant 0 : index
    %c0_181 = arith.constant 0 : index
    %342 = vector.load %arg8[%c1_179, %c0_180, %c0_181] : memref<2x8x32xf32, #tpu.memory_space<vmem>>, vector<1x8x32xf32>
    %343 = vector.shape_cast %342 : vector<1x8x32xf32> to vector<8x32xf32>
    %c1_182 = arith.constant 1 : index
    %c0_183 = arith.constant 0 : index
    %c0_184 = arith.constant 0 : index
    %344 = vector.load %arg9[%c1_182, %c0_183, %c0_184] : memref<2x8x32xf32, #tpu.memory_space<vmem>>, vector<1x8x32xf32>
    %345 = vector.shape_cast %344 : vector<1x8x32xf32> to vector<8x32xf32>
    %346 = arith.truncf %343 : vector<8x32xf32> to vector<8x32xbf16>
    %c1_185 = arith.constant 1 : index
    %c0_186 = arith.constant 0 : index
    %c0_187 = arith.constant 0 : index
    %347 = vector.load %arg5[%c1_185, %c0_186, %c0_187] : memref<2x32x128xbf16, #tpu.memory_space<vmem>>, vector<1x32x128xbf16>
    %348 = vector.shape_cast %347 : vector<1x32x128xbf16> to vector<32x128xbf16>
    %cst_188 = arith.constant dense<0.000000e+00> : vector<8x128xf32>
    %349 = tpu.matmul %346, %348, %cst_188 {dimension_numbers = #tpu.dot_dimension_numbers<[1], [0], [0], [1], [0, 0, 1, 1], [], []>} : vector<8x32xbf16>, vector<32x128xbf16>, vector<8x128xf32> -> vector<8x128xf32>
    %350 = arith.truncf %335 : vector<8x32xf32> to vector<8x32xbf16>
    %c0_189 = arith.constant 0 : index
    %c0_190 = arith.constant 0 : index
    %c0_191 = arith.constant 0 : index
    %351 = vector.load %arg4[%c0_189, %c0_190, %c0_191] : memref<1x32x128xbf16, #tpu.memory_space<vmem>>, vector<1x32x128xbf16>
    %352 = vector.shape_cast %351 : vector<1x32x128xbf16> to vector<32x128xbf16>
    %cst_192 = arith.constant dense<0.000000e+00> : vector<8x128xf32>
    %353 = tpu.matmul %350, %352, %cst_192 {dimension_numbers = #tpu.dot_dimension_numbers<[1], [0], [0], [1], [0, 0, 1, 1], [], []>} : vector<8x32xbf16>, vector<32x128xbf16>, vector<8x128xf32> -> vector<8x128xf32>
    %354 = arith.addf %353, %349 : vector<8x128xf32>
    %c1_193 = arith.constant 1 : index
    %c0_194 = arith.constant 0 : index
    %c0_195 = arith.constant 0 : index
    %355 = vector.load %arg6[%c1_193, %c0_194, %c0_195] : memref<2x1x128xf32, #tpu.memory_space<vmem>>, vector<1x1x128xf32>
    %356 = vector.shape_cast %355 : vector<1x1x128xf32> to vector<1x128xf32>
    %357 = vector.broadcast %356 : vector<1x128xf32> to vector<8x128xf32>
    %358 = arith.addf %354, %357 : vector<8x128xf32>
    %359 = vector.extract_strided_slice %358 {offsets = [0, 0], sizes = [8, 32], strides = [1, 1]} : vector<8x128xf32> to vector<8x32xf32>
    %360 = arith.negf %359 : vector<8x32xf32>
    %361 = math.exp %360 : vector<8x32xf32>
    %cst_196 = arith.constant 1.000000e+00 : f32
    %362 = vector.broadcast %cst_196 : f32 to vector<8x32xf32>
    %363 = arith.addf %362, %361 : vector<8x32xf32>
    %364 = arith.divf %362, %363 : vector<8x32xf32>
    %365 = vector.extract_strided_slice %358 {offsets = [0, 32], sizes = [8, 32], strides = [1, 1]} : vector<8x128xf32> to vector<8x32xf32>
    %366 = arith.negf %365 : vector<8x32xf32>
    %367 = math.exp %366 : vector<8x32xf32>
    %cst_197 = arith.constant 1.000000e+00 : f32
    %368 = vector.broadcast %cst_197 : f32 to vector<8x32xf32>
    %369 = arith.addf %368, %367 : vector<8x32xf32>
    %370 = arith.divf %368, %369 : vector<8x32xf32>
    %371 = vector.extract_strided_slice %358 {offsets = [0, 64], sizes = [8, 32], strides = [1, 1]} : vector<8x128xf32> to vector<8x32xf32>
    %372 = math.tanh %371 : vector<8x32xf32>
    %373 = vector.extract_strided_slice %358 {offsets = [0, 96], sizes = [8, 32], strides = [1, 1]} : vector<8x128xf32> to vector<8x32xf32>
    %374 = arith.negf %373 : vector<8x32xf32>
    %375 = math.exp %374 : vector<8x32xf32>
    %cst_198 = arith.constant 1.000000e+00 : f32
    %376 = vector.broadcast %cst_198 : f32 to vector<8x32xf32>
    %377 = arith.addf %376, %375 : vector<8x32xf32>
    %378 = arith.divf %376, %377 : vector<8x32xf32>
    %379 = arith.mulf %370, %345 : vector<8x32xf32>
    %380 = arith.mulf %364, %372 : vector<8x32xf32>
    %381 = arith.addf %379, %380 : vector<8x32xf32>
    %382 = math.tanh %381 : vector<8x32xf32>
    %383 = arith.mulf %378, %382 : vector<8x32xf32>
    %c1_199 = arith.constant 1 : index
    %c0_200 = arith.constant 0 : index
    %c0_201 = arith.constant 0 : index
    %384 = vector.load %arg8[%c1_199, %c0_200, %c0_201] : memref<2x8x32xf32, #tpu.memory_space<vmem>>, vector<1x8x32xf32>
    %385 = vector.shape_cast %384 : vector<1x8x32xf32> to vector<8x32xf32>
    %386 = vector.shape_cast %383 : vector<8x32xf32> to vector<1x8x32xf32>
    tpu.vector_store %arg8[%c1_199, %c0_200, %c0_201], %386 {strides = array<i32>} : memref<2x8x32xf32, #tpu.memory_space<vmem>>, vector<1x8x32xf32>,
    %c1_202 = arith.constant 1 : index
    %c0_203 = arith.constant 0 : index
    %c0_204 = arith.constant 0 : index
    %387 = vector.load %arg9[%c1_202, %c0_203, %c0_204] : memref<2x8x32xf32, #tpu.memory_space<vmem>>, vector<1x8x32xf32>
    %388 = vector.shape_cast %387 : vector<1x8x32xf32> to vector<8x32xf32>
    %389 = vector.shape_cast %381 : vector<8x32xf32> to vector<1x8x32xf32>
    tpu.vector_store %arg9[%c1_202, %c0_203, %c0_204], %389 {strides = array<i32>} : memref<2x8x32xf32, #tpu.memory_space<vmem>>, vector<1x8x32xf32>,
    %390 = arith.index_cast %c3_i32 : i32 to index
    %c0_205 = arith.constant 0 : index
    %c0_206 = arith.constant 0 : index
    %391 = vector.load %arg7[%390, %c0_205, %c0_206] : memref<8x8x32xf32, #tpu.memory_space<vmem>>, vector<1x8x32xf32>
    %392 = vector.shape_cast %391 : vector<1x8x32xf32> to vector<8x32xf32>
    %393 = vector.shape_cast %383 : vector<8x32xf32> to vector<1x8x32xf32>
    tpu.vector_store %arg7[%390, %c0_205, %c0_206], %393 {strides = array<i32>} : memref<8x8x32xf32, #tpu.memory_space<vmem>>, vector<1x8x32xf32>,
    %c4_i32 = arith.constant 4 : i32
    %394 = arith.index_cast %c4_i32 : i32 to index
    %c0_207 = arith.constant 0 : index
    %c0_208 = arith.constant 0 : index
    %395 = vector.load %arg10[%394, %c0_207, %c0_208] : memref<8x8x128xf32, #tpu.memory_space<vmem>>, vector<1x8x128xf32>
    %396 = vector.shape_cast %395 : vector<1x8x128xf32> to vector<8x128xf32>
    %c0_209 = arith.constant 0 : index
    %c0_210 = arith.constant 0 : index
    %c0_211 = arith.constant 0 : index
    %397 = vector.load %arg8[%c0_209, %c0_210, %c0_211] : memref<2x8x32xf32, #tpu.memory_space<vmem>>, vector<1x8x32xf32>
    %398 = vector.shape_cast %397 : vector<1x8x32xf32> to vector<8x32xf32>
    %c0_212 = arith.constant 0 : index
    %c0_213 = arith.constant 0 : index
    %c0_214 = arith.constant 0 : index
    %399 = vector.load %arg9[%c0_212, %c0_213, %c0_214] : memref<2x8x32xf32, #tpu.memory_space<vmem>>, vector<1x8x32xf32>
    %400 = vector.shape_cast %399 : vector<1x8x32xf32> to vector<8x32xf32>
    %401 = arith.truncf %398 : vector<8x32xf32> to vector<8x32xbf16>
    %c0_215 = arith.constant 0 : index
    %c0_216 = arith.constant 0 : index
    %c0_217 = arith.constant 0 : index
    %402 = vector.load %arg5[%c0_215, %c0_216, %c0_217] : memref<2x32x128xbf16, #tpu.memory_space<vmem>>, vector<1x32x128xbf16>
    %403 = vector.shape_cast %402 : vector<1x32x128xbf16> to vector<32x128xbf16>
    %cst_218 = arith.constant dense<0.000000e+00> : vector<8x128xf32>
    %404 = tpu.matmul %401, %403, %cst_218 {dimension_numbers = #tpu.dot_dimension_numbers<[1], [0], [0], [1], [0, 0, 1, 1], [], []>} : vector<8x32xbf16>, vector<32x128xbf16>, vector<8x128xf32> -> vector<8x128xf32>
    %405 = arith.addf %396, %404 : vector<8x128xf32>
    %406 = vector.extract_strided_slice %405 {offsets = [0, 0], sizes = [8, 32], strides = [1, 1]} : vector<8x128xf32> to vector<8x32xf32>
    %407 = arith.negf %406 : vector<8x32xf32>
    %408 = math.exp %407 : vector<8x32xf32>
    %cst_219 = arith.constant 1.000000e+00 : f32
    %409 = vector.broadcast %cst_219 : f32 to vector<8x32xf32>
    %410 = arith.addf %409, %408 : vector<8x32xf32>
    %411 = arith.divf %409, %410 : vector<8x32xf32>
    %412 = vector.extract_strided_slice %405 {offsets = [0, 32], sizes = [8, 32], strides = [1, 1]} : vector<8x128xf32> to vector<8x32xf32>
    %413 = arith.negf %412 : vector<8x32xf32>
    %414 = math.exp %413 : vector<8x32xf32>
    %cst_220 = arith.constant 1.000000e+00 : f32
    %415 = vector.broadcast %cst_220 : f32 to vector<8x32xf32>
    %416 = arith.addf %415, %414 : vector<8x32xf32>
    %417 = arith.divf %415, %416 : vector<8x32xf32>
    %418 = vector.extract_strided_slice %405 {offsets = [0, 64], sizes = [8, 32], strides = [1, 1]} : vector<8x128xf32> to vector<8x32xf32>
    %419 = math.tanh %418 : vector<8x32xf32>
    %420 = vector.extract_strided_slice %405 {offsets = [0, 96], sizes = [8, 32], strides = [1, 1]} : vector<8x128xf32> to vector<8x32xf32>
    %421 = arith.negf %420 : vector<8x32xf32>
    %422 = math.exp %421 : vector<8x32xf32>
    %cst_221 = arith.constant 1.000000e+00 : f32
    %423 = vector.broadcast %cst_221 : f32 to vector<8x32xf32>
    %424 = arith.addf %423, %422 : vector<8x32xf32>
    %425 = arith.divf %423, %424 : vector<8x32xf32>
    %426 = arith.mulf %417, %400 : vector<8x32xf32>
    %427 = arith.mulf %411, %419 : vector<8x32xf32>
    %428 = arith.addf %426, %427 : vector<8x32xf32>
    %429 = math.tanh %428 : vector<8x32xf32>
    %430 = arith.mulf %425, %429 : vector<8x32xf32>
    %c0_222 = arith.constant 0 : index
    %c0_223 = arith.constant 0 : index
    %c0_224 = arith.constant 0 : index
    %431 = vector.load %arg8[%c0_222, %c0_223, %c0_224] : memref<2x8x32xf32, #tpu.memory_space<vmem>>, vector<1x8x32xf32>
    %432 = vector.shape_cast %431 : vector<1x8x32xf32> to vector<8x32xf32>
    %433 = vector.shape_cast %430 : vector<8x32xf32> to vector<1x8x32xf32>
    tpu.vector_store %arg8[%c0_222, %c0_223, %c0_224], %433 {strides = array<i32>} : memref<2x8x32xf32, #tpu.memory_space<vmem>>, vector<1x8x32xf32>,
    %c0_225 = arith.constant 0 : index
    %c0_226 = arith.constant 0 : index
    %c0_227 = arith.constant 0 : index
    %434 = vector.load %arg9[%c0_225, %c0_226, %c0_227] : memref<2x8x32xf32, #tpu.memory_space<vmem>>, vector<1x8x32xf32>
    %435 = vector.shape_cast %434 : vector<1x8x32xf32> to vector<8x32xf32>
    %436 = vector.shape_cast %428 : vector<8x32xf32> to vector<1x8x32xf32>
    tpu.vector_store %arg9[%c0_225, %c0_226, %c0_227], %436 {strides = array<i32>} : memref<2x8x32xf32, #tpu.memory_space<vmem>>, vector<1x8x32xf32>,
    %c1_228 = arith.constant 1 : index
    %c0_229 = arith.constant 0 : index
    %c0_230 = arith.constant 0 : index
    %437 = vector.load %arg8[%c1_228, %c0_229, %c0_230] : memref<2x8x32xf32, #tpu.memory_space<vmem>>, vector<1x8x32xf32>
    %438 = vector.shape_cast %437 : vector<1x8x32xf32> to vector<8x32xf32>
    %c1_231 = arith.constant 1 : index
    %c0_232 = arith.constant 0 : index
    %c0_233 = arith.constant 0 : index
    %439 = vector.load %arg9[%c1_231, %c0_232, %c0_233] : memref<2x8x32xf32, #tpu.memory_space<vmem>>, vector<1x8x32xf32>
    %440 = vector.shape_cast %439 : vector<1x8x32xf32> to vector<8x32xf32>
    %441 = arith.truncf %438 : vector<8x32xf32> to vector<8x32xbf16>
    %c1_234 = arith.constant 1 : index
    %c0_235 = arith.constant 0 : index
    %c0_236 = arith.constant 0 : index
    %442 = vector.load %arg5[%c1_234, %c0_235, %c0_236] : memref<2x32x128xbf16, #tpu.memory_space<vmem>>, vector<1x32x128xbf16>
    %443 = vector.shape_cast %442 : vector<1x32x128xbf16> to vector<32x128xbf16>
    %cst_237 = arith.constant dense<0.000000e+00> : vector<8x128xf32>
    %444 = tpu.matmul %441, %443, %cst_237 {dimension_numbers = #tpu.dot_dimension_numbers<[1], [0], [0], [1], [0, 0, 1, 1], [], []>} : vector<8x32xbf16>, vector<32x128xbf16>, vector<8x128xf32> -> vector<8x128xf32>
    %445 = arith.truncf %430 : vector<8x32xf32> to vector<8x32xbf16>
    %c0_238 = arith.constant 0 : index
    %c0_239 = arith.constant 0 : index
    %c0_240 = arith.constant 0 : index
    %446 = vector.load %arg4[%c0_238, %c0_239, %c0_240] : memref<1x32x128xbf16, #tpu.memory_space<vmem>>, vector<1x32x128xbf16>
    %447 = vector.shape_cast %446 : vector<1x32x128xbf16> to vector<32x128xbf16>
    %cst_241 = arith.constant dense<0.000000e+00> : vector<8x128xf32>
    %448 = tpu.matmul %445, %447, %cst_241 {dimension_numbers = #tpu.dot_dimension_numbers<[1], [0], [0], [1], [0, 0, 1, 1], [], []>} : vector<8x32xbf16>, vector<32x128xbf16>, vector<8x128xf32> -> vector<8x128xf32>
    %449 = arith.addf %448, %444 : vector<8x128xf32>
    %c1_242 = arith.constant 1 : index
    %c0_243 = arith.constant 0 : index
    %c0_244 = arith.constant 0 : index
    %450 = vector.load %arg6[%c1_242, %c0_243, %c0_244] : memref<2x1x128xf32, #tpu.memory_space<vmem>>, vector<1x1x128xf32>
    %451 = vector.shape_cast %450 : vector<1x1x128xf32> to vector<1x128xf32>
    %452 = vector.broadcast %451 : vector<1x128xf32> to vector<8x128xf32>
    %453 = arith.addf %449, %452 : vector<8x128xf32>
    %454 = vector.extract_strided_slice %453 {offsets = [0, 0], sizes = [8, 32], strides = [1, 1]} : vector<8x128xf32> to vector<8x32xf32>
    %455 = arith.negf %454 : vector<8x32xf32>
    %456 = math.exp %455 : vector<8x32xf32>
    %cst_245 = arith.constant 1.000000e+00 : f32
    %457 = vector.broadcast %cst_245 : f32 to vector<8x32xf32>
    %458 = arith.addf %457, %456 : vector<8x32xf32>
    %459 = arith.divf %457, %458 : vector<8x32xf32>
    %460 = vector.extract_strided_slice %453 {offsets = [0, 32], sizes = [8, 32], strides = [1, 1]} : vector<8x128xf32> to vector<8x32xf32>
    %461 = arith.negf %460 : vector<8x32xf32>
    %462 = math.exp %461 : vector<8x32xf32>
    %cst_246 = arith.constant 1.000000e+00 : f32
    %463 = vector.broadcast %cst_246 : f32 to vector<8x32xf32>
    %464 = arith.addf %463, %462 : vector<8x32xf32>
    %465 = arith.divf %463, %464 : vector<8x32xf32>
    %466 = vector.extract_strided_slice %453 {offsets = [0, 64], sizes = [8, 32], strides = [1, 1]} : vector<8x128xf32> to vector<8x32xf32>
    %467 = math.tanh %466 : vector<8x32xf32>
    %468 = vector.extract_strided_slice %453 {offsets = [0, 96], sizes = [8, 32], strides = [1, 1]} : vector<8x128xf32> to vector<8x32xf32>
    %469 = arith.negf %468 : vector<8x32xf32>
    %470 = math.exp %469 : vector<8x32xf32>
    %cst_247 = arith.constant 1.000000e+00 : f32
    %471 = vector.broadcast %cst_247 : f32 to vector<8x32xf32>
    %472 = arith.addf %471, %470 : vector<8x32xf32>
    %473 = arith.divf %471, %472 : vector<8x32xf32>
    %474 = arith.mulf %465, %440 : vector<8x32xf32>
    %475 = arith.mulf %459, %467 : vector<8x32xf32>
    %476 = arith.addf %474, %475 : vector<8x32xf32>
    %477 = math.tanh %476 : vector<8x32xf32>
    %478 = arith.mulf %473, %477 : vector<8x32xf32>
    %c1_248 = arith.constant 1 : index
    %c0_249 = arith.constant 0 : index
    %c0_250 = arith.constant 0 : index
    %479 = vector.load %arg8[%c1_248, %c0_249, %c0_250] : memref<2x8x32xf32, #tpu.memory_space<vmem>>, vector<1x8x32xf32>
    %480 = vector.shape_cast %479 : vector<1x8x32xf32> to vector<8x32xf32>
    %481 = vector.shape_cast %478 : vector<8x32xf32> to vector<1x8x32xf32>
    tpu.vector_store %arg8[%c1_248, %c0_249, %c0_250], %481 {strides = array<i32>} : memref<2x8x32xf32, #tpu.memory_space<vmem>>, vector<1x8x32xf32>,
    %c1_251 = arith.constant 1 : index
    %c0_252 = arith.constant 0 : index
    %c0_253 = arith.constant 0 : index
    %482 = vector.load %arg9[%c1_251, %c0_252, %c0_253] : memref<2x8x32xf32, #tpu.memory_space<vmem>>, vector<1x8x32xf32>
    %483 = vector.shape_cast %482 : vector<1x8x32xf32> to vector<8x32xf32>
    %484 = vector.shape_cast %476 : vector<8x32xf32> to vector<1x8x32xf32>
    tpu.vector_store %arg9[%c1_251, %c0_252, %c0_253], %484 {strides = array<i32>} : memref<2x8x32xf32, #tpu.memory_space<vmem>>, vector<1x8x32xf32>,
    %485 = arith.index_cast %c4_i32 : i32 to index
    %c0_254 = arith.constant 0 : index
    %c0_255 = arith.constant 0 : index
    %486 = vector.load %arg7[%485, %c0_254, %c0_255] : memref<8x8x32xf32, #tpu.memory_space<vmem>>, vector<1x8x32xf32>
    %487 = vector.shape_cast %486 : vector<1x8x32xf32> to vector<8x32xf32>
    %488 = vector.shape_cast %478 : vector<8x32xf32> to vector<1x8x32xf32>
    tpu.vector_store %arg7[%485, %c0_254, %c0_255], %488 {strides = array<i32>} : memref<8x8x32xf32, #tpu.memory_space<vmem>>, vector<1x8x32xf32>,
    %c5_i32 = arith.constant 5 : i32
    %489 = arith.index_cast %c5_i32 : i32 to index
    %c0_256 = arith.constant 0 : index
    %c0_257 = arith.constant 0 : index
    %490 = vector.load %arg10[%489, %c0_256, %c0_257] : memref<8x8x128xf32, #tpu.memory_space<vmem>>, vector<1x8x128xf32>
    %491 = vector.shape_cast %490 : vector<1x8x128xf32> to vector<8x128xf32>
    %c0_258 = arith.constant 0 : index
    %c0_259 = arith.constant 0 : index
    %c0_260 = arith.constant 0 : index
    %492 = vector.load %arg8[%c0_258, %c0_259, %c0_260] : memref<2x8x32xf32, #tpu.memory_space<vmem>>, vector<1x8x32xf32>
    %493 = vector.shape_cast %492 : vector<1x8x32xf32> to vector<8x32xf32>
    %c0_261 = arith.constant 0 : index
    %c0_262 = arith.constant 0 : index
    %c0_263 = arith.constant 0 : index
    %494 = vector.load %arg9[%c0_261, %c0_262, %c0_263] : memref<2x8x32xf32, #tpu.memory_space<vmem>>, vector<1x8x32xf32>
    %495 = vector.shape_cast %494 : vector<1x8x32xf32> to vector<8x32xf32>
    %496 = arith.truncf %493 : vector<8x32xf32> to vector<8x32xbf16>
    %c0_264 = arith.constant 0 : index
    %c0_265 = arith.constant 0 : index
    %c0_266 = arith.constant 0 : index
    %497 = vector.load %arg5[%c0_264, %c0_265, %c0_266] : memref<2x32x128xbf16, #tpu.memory_space<vmem>>, vector<1x32x128xbf16>
    %498 = vector.shape_cast %497 : vector<1x32x128xbf16> to vector<32x128xbf16>
    %cst_267 = arith.constant dense<0.000000e+00> : vector<8x128xf32>
    %499 = tpu.matmul %496, %498, %cst_267 {dimension_numbers = #tpu.dot_dimension_numbers<[1], [0], [0], [1], [0, 0, 1, 1], [], []>} : vector<8x32xbf16>, vector<32x128xbf16>, vector<8x128xf32> -> vector<8x128xf32>
    %500 = arith.addf %491, %499 : vector<8x128xf32>
    %501 = vector.extract_strided_slice %500 {offsets = [0, 0], sizes = [8, 32], strides = [1, 1]} : vector<8x128xf32> to vector<8x32xf32>
    %502 = arith.negf %501 : vector<8x32xf32>
    %503 = math.exp %502 : vector<8x32xf32>
    %cst_268 = arith.constant 1.000000e+00 : f32
    %504 = vector.broadcast %cst_268 : f32 to vector<8x32xf32>
    %505 = arith.addf %504, %503 : vector<8x32xf32>
    %506 = arith.divf %504, %505 : vector<8x32xf32>
    %507 = vector.extract_strided_slice %500 {offsets = [0, 32], sizes = [8, 32], strides = [1, 1]} : vector<8x128xf32> to vector<8x32xf32>
    %508 = arith.negf %507 : vector<8x32xf32>
    %509 = math.exp %508 : vector<8x32xf32>
    %cst_269 = arith.constant 1.000000e+00 : f32
    %510 = vector.broadcast %cst_269 : f32 to vector<8x32xf32>
    %511 = arith.addf %510, %509 : vector<8x32xf32>
    %512 = arith.divf %510, %511 : vector<8x32xf32>
    %513 = vector.extract_strided_slice %500 {offsets = [0, 64], sizes = [8, 32], strides = [1, 1]} : vector<8x128xf32> to vector<8x32xf32>
    %514 = math.tanh %513 : vector<8x32xf32>
    %515 = vector.extract_strided_slice %500 {offsets = [0, 96], sizes = [8, 32], strides = [1, 1]} : vector<8x128xf32> to vector<8x32xf32>
    %516 = arith.negf %515 : vector<8x32xf32>
    %517 = math.exp %516 : vector<8x32xf32>
    %cst_270 = arith.constant 1.000000e+00 : f32
    %518 = vector.broadcast %cst_270 : f32 to vector<8x32xf32>
    %519 = arith.addf %518, %517 : vector<8x32xf32>
    %520 = arith.divf %518, %519 : vector<8x32xf32>
    %521 = arith.mulf %512, %495 : vector<8x32xf32>
    %522 = arith.mulf %506, %514 : vector<8x32xf32>
    %523 = arith.addf %521, %522 : vector<8x32xf32>
    %524 = math.tanh %523 : vector<8x32xf32>
    %525 = arith.mulf %520, %524 : vector<8x32xf32>
    %c0_271 = arith.constant 0 : index
    %c0_272 = arith.constant 0 : index
    %c0_273 = arith.constant 0 : index
    %526 = vector.load %arg8[%c0_271, %c0_272, %c0_273] : memref<2x8x32xf32, #tpu.memory_space<vmem>>, vector<1x8x32xf32>
    %527 = vector.shape_cast %526 : vector<1x8x32xf32> to vector<8x32xf32>
    %528 = vector.shape_cast %525 : vector<8x32xf32> to vector<1x8x32xf32>
    tpu.vector_store %arg8[%c0_271, %c0_272, %c0_273], %528 {strides = array<i32>} : memref<2x8x32xf32, #tpu.memory_space<vmem>>, vector<1x8x32xf32>,
    %c0_274 = arith.constant 0 : index
    %c0_275 = arith.constant 0 : index
    %c0_276 = arith.constant 0 : index
    %529 = vector.load %arg9[%c0_274, %c0_275, %c0_276] : memref<2x8x32xf32, #tpu.memory_space<vmem>>, vector<1x8x32xf32>
    %530 = vector.shape_cast %529 : vector<1x8x32xf32> to vector<8x32xf32>
    %531 = vector.shape_cast %523 : vector<8x32xf32> to vector<1x8x32xf32>
    tpu.vector_store %arg9[%c0_274, %c0_275, %c0_276], %531 {strides = array<i32>} : memref<2x8x32xf32, #tpu.memory_space<vmem>>, vector<1x8x32xf32>,
    %c1_277 = arith.constant 1 : index
    %c0_278 = arith.constant 0 : index
    %c0_279 = arith.constant 0 : index
    %532 = vector.load %arg8[%c1_277, %c0_278, %c0_279] : memref<2x8x32xf32, #tpu.memory_space<vmem>>, vector<1x8x32xf32>
    %533 = vector.shape_cast %532 : vector<1x8x32xf32> to vector<8x32xf32>
    %c1_280 = arith.constant 1 : index
    %c0_281 = arith.constant 0 : index
    %c0_282 = arith.constant 0 : index
    %534 = vector.load %arg9[%c1_280, %c0_281, %c0_282] : memref<2x8x32xf32, #tpu.memory_space<vmem>>, vector<1x8x32xf32>
    %535 = vector.shape_cast %534 : vector<1x8x32xf32> to vector<8x32xf32>
    %536 = arith.truncf %533 : vector<8x32xf32> to vector<8x32xbf16>
    %c1_283 = arith.constant 1 : index
    %c0_284 = arith.constant 0 : index
    %c0_285 = arith.constant 0 : index
    %537 = vector.load %arg5[%c1_283, %c0_284, %c0_285] : memref<2x32x128xbf16, #tpu.memory_space<vmem>>, vector<1x32x128xbf16>
    %538 = vector.shape_cast %537 : vector<1x32x128xbf16> to vector<32x128xbf16>
    %cst_286 = arith.constant dense<0.000000e+00> : vector<8x128xf32>
    %539 = tpu.matmul %536, %538, %cst_286 {dimension_numbers = #tpu.dot_dimension_numbers<[1], [0], [0], [1], [0, 0, 1, 1], [], []>} : vector<8x32xbf16>, vector<32x128xbf16>, vector<8x128xf32> -> vector<8x128xf32>
    %540 = arith.truncf %525 : vector<8x32xf32> to vector<8x32xbf16>
    %c0_287 = arith.constant 0 : index
    %c0_288 = arith.constant 0 : index
    %c0_289 = arith.constant 0 : index
    %541 = vector.load %arg4[%c0_287, %c0_288, %c0_289] : memref<1x32x128xbf16, #tpu.memory_space<vmem>>, vector<1x32x128xbf16>
    %542 = vector.shape_cast %541 : vector<1x32x128xbf16> to vector<32x128xbf16>
    %cst_290 = arith.constant dense<0.000000e+00> : vector<8x128xf32>
    %543 = tpu.matmul %540, %542, %cst_290 {dimension_numbers = #tpu.dot_dimension_numbers<[1], [0], [0], [1], [0, 0, 1, 1], [], []>} : vector<8x32xbf16>, vector<32x128xbf16>, vector<8x128xf32> -> vector<8x128xf32>
    %544 = arith.addf %543, %539 : vector<8x128xf32>
    %c1_291 = arith.constant 1 : index
    %c0_292 = arith.constant 0 : index
    %c0_293 = arith.constant 0 : index
    %545 = vector.load %arg6[%c1_291, %c0_292, %c0_293] : memref<2x1x128xf32, #tpu.memory_space<vmem>>, vector<1x1x128xf32>
    %546 = vector.shape_cast %545 : vector<1x1x128xf32> to vector<1x128xf32>
    %547 = vector.broadcast %546 : vector<1x128xf32> to vector<8x128xf32>
    %548 = arith.addf %544, %547 : vector<8x128xf32>
    %549 = vector.extract_strided_slice %548 {offsets = [0, 0], sizes = [8, 32], strides = [1, 1]} : vector<8x128xf32> to vector<8x32xf32>
    %550 = arith.negf %549 : vector<8x32xf32>
    %551 = math.exp %550 : vector<8x32xf32>
    %cst_294 = arith.constant 1.000000e+00 : f32
    %552 = vector.broadcast %cst_294 : f32 to vector<8x32xf32>
    %553 = arith.addf %552, %551 : vector<8x32xf32>
    %554 = arith.divf %552, %553 : vector<8x32xf32>
    %555 = vector.extract_strided_slice %548 {offsets = [0, 32], sizes = [8, 32], strides = [1, 1]} : vector<8x128xf32> to vector<8x32xf32>
    %556 = arith.negf %555 : vector<8x32xf32>
    %557 = math.exp %556 : vector<8x32xf32>
    %cst_295 = arith.constant 1.000000e+00 : f32
    %558 = vector.broadcast %cst_295 : f32 to vector<8x32xf32>
    %559 = arith.addf %558, %557 : vector<8x32xf32>
    %560 = arith.divf %558, %559 : vector<8x32xf32>
    %561 = vector.extract_strided_slice %548 {offsets = [0, 64], sizes = [8, 32], strides = [1, 1]} : vector<8x128xf32> to vector<8x32xf32>
    %562 = math.tanh %561 : vector<8x32xf32>
    %563 = vector.extract_strided_slice %548 {offsets = [0, 96], sizes = [8, 32], strides = [1, 1]} : vector<8x128xf32> to vector<8x32xf32>
    %564 = arith.negf %563 : vector<8x32xf32>
    %565 = math.exp %564 : vector<8x32xf32>
    %cst_296 = arith.constant 1.000000e+00 : f32
    %566 = vector.broadcast %cst_296 : f32 to vector<8x32xf32>
    %567 = arith.addf %566, %565 : vector<8x32xf32>
    %568 = arith.divf %566, %567 : vector<8x32xf32>
    %569 = arith.mulf %560, %535 : vector<8x32xf32>
    %570 = arith.mulf %554, %562 : vector<8x32xf32>
    %571 = arith.addf %569, %570 : vector<8x32xf32>
    %572 = math.tanh %571 : vector<8x32xf32>
    %573 = arith.mulf %568, %572 : vector<8x32xf32>
    %c1_297 = arith.constant 1 : index
    %c0_298 = arith.constant 0 : index
    %c0_299 = arith.constant 0 : index
    %574 = vector.load %arg8[%c1_297, %c0_298, %c0_299] : memref<2x8x32xf32, #tpu.memory_space<vmem>>, vector<1x8x32xf32>
    %575 = vector.shape_cast %574 : vector<1x8x32xf32> to vector<8x32xf32>
    %576 = vector.shape_cast %573 : vector<8x32xf32> to vector<1x8x32xf32>
    tpu.vector_store %arg8[%c1_297, %c0_298, %c0_299], %576 {strides = array<i32>} : memref<2x8x32xf32, #tpu.memory_space<vmem>>, vector<1x8x32xf32>,
    %c1_300 = arith.constant 1 : index
    %c0_301 = arith.constant 0 : index
    %c0_302 = arith.constant 0 : index
    %577 = vector.load %arg9[%c1_300, %c0_301, %c0_302] : memref<2x8x32xf32, #tpu.memory_space<vmem>>, vector<1x8x32xf32>
    %578 = vector.shape_cast %577 : vector<1x8x32xf32> to vector<8x32xf32>
    %579 = vector.shape_cast %571 : vector<8x32xf32> to vector<1x8x32xf32>
    tpu.vector_store %arg9[%c1_300, %c0_301, %c0_302], %579 {strides = array<i32>} : memref<2x8x32xf32, #tpu.memory_space<vmem>>, vector<1x8x32xf32>,
    %580 = arith.index_cast %c5_i32 : i32 to index
    %c0_303 = arith.constant 0 : index
    %c0_304 = arith.constant 0 : index
    %581 = vector.load %arg7[%580, %c0_303, %c0_304] : memref<8x8x32xf32, #tpu.memory_space<vmem>>, vector<1x8x32xf32>
    %582 = vector.shape_cast %581 : vector<1x8x32xf32> to vector<8x32xf32>
    %583 = vector.shape_cast %573 : vector<8x32xf32> to vector<1x8x32xf32>
    tpu.vector_store %arg7[%580, %c0_303, %c0_304], %583 {strides = array<i32>} : memref<8x8x32xf32, #tpu.memory_space<vmem>>, vector<1x8x32xf32>,
    %c6_i32 = arith.constant 6 : i32
    %584 = arith.index_cast %c6_i32 : i32 to index
    %c0_305 = arith.constant 0 : index
    %c0_306 = arith.constant 0 : index
    %585 = vector.load %arg10[%584, %c0_305, %c0_306] : memref<8x8x128xf32, #tpu.memory_space<vmem>>, vector<1x8x128xf32>
    %586 = vector.shape_cast %585 : vector<1x8x128xf32> to vector<8x128xf32>
    %c0_307 = arith.constant 0 : index
    %c0_308 = arith.constant 0 : index
    %c0_309 = arith.constant 0 : index
    %587 = vector.load %arg8[%c0_307, %c0_308, %c0_309] : memref<2x8x32xf32, #tpu.memory_space<vmem>>, vector<1x8x32xf32>
    %588 = vector.shape_cast %587 : vector<1x8x32xf32> to vector<8x32xf32>
    %c0_310 = arith.constant 0 : index
    %c0_311 = arith.constant 0 : index
    %c0_312 = arith.constant 0 : index
    %589 = vector.load %arg9[%c0_310, %c0_311, %c0_312] : memref<2x8x32xf32, #tpu.memory_space<vmem>>, vector<1x8x32xf32>
    %590 = vector.shape_cast %589 : vector<1x8x32xf32> to vector<8x32xf32>
    %591 = arith.truncf %588 : vector<8x32xf32> to vector<8x32xbf16>
    %c0_313 = arith.constant 0 : index
    %c0_314 = arith.constant 0 : index
    %c0_315 = arith.constant 0 : index
    %592 = vector.load %arg5[%c0_313, %c0_314, %c0_315] : memref<2x32x128xbf16, #tpu.memory_space<vmem>>, vector<1x32x128xbf16>
    %593 = vector.shape_cast %592 : vector<1x32x128xbf16> to vector<32x128xbf16>
    %cst_316 = arith.constant dense<0.000000e+00> : vector<8x128xf32>
    %594 = tpu.matmul %591, %593, %cst_316 {dimension_numbers = #tpu.dot_dimension_numbers<[1], [0], [0], [1], [0, 0, 1, 1], [], []>} : vector<8x32xbf16>, vector<32x128xbf16>, vector<8x128xf32> -> vector<8x128xf32>
    %595 = arith.addf %586, %594 : vector<8x128xf32>
    %596 = vector.extract_strided_slice %595 {offsets = [0, 0], sizes = [8, 32], strides = [1, 1]} : vector<8x128xf32> to vector<8x32xf32>
    %597 = arith.negf %596 : vector<8x32xf32>
    %598 = math.exp %597 : vector<8x32xf32>
    %cst_317 = arith.constant 1.000000e+00 : f32
    %599 = vector.broadcast %cst_317 : f32 to vector<8x32xf32>
    %600 = arith.addf %599, %598 : vector<8x32xf32>
    %601 = arith.divf %599, %600 : vector<8x32xf32>
    %602 = vector.extract_strided_slice %595 {offsets = [0, 32], sizes = [8, 32], strides = [1, 1]} : vector<8x128xf32> to vector<8x32xf32>
    %603 = arith.negf %602 : vector<8x32xf32>
    %604 = math.exp %603 : vector<8x32xf32>
    %cst_318 = arith.constant 1.000000e+00 : f32
    %605 = vector.broadcast %cst_318 : f32 to vector<8x32xf32>
    %606 = arith.addf %605, %604 : vector<8x32xf32>
    %607 = arith.divf %605, %606 : vector<8x32xf32>
    %608 = vector.extract_strided_slice %595 {offsets = [0, 64], sizes = [8, 32], strides = [1, 1]} : vector<8x128xf32> to vector<8x32xf32>
    %609 = math.tanh %608 : vector<8x32xf32>
    %610 = vector.extract_strided_slice %595 {offsets = [0, 96], sizes = [8, 32], strides = [1, 1]} : vector<8x128xf32> to vector<8x32xf32>
    %611 = arith.negf %610 : vector<8x32xf32>
    %612 = math.exp %611 : vector<8x32xf32>
    %cst_319 = arith.constant 1.000000e+00 : f32
    %613 = vector.broadcast %cst_319 : f32 to vector<8x32xf32>
    %614 = arith.addf %613, %612 : vector<8x32xf32>
    %615 = arith.divf %613, %614 : vector<8x32xf32>
    %616 = arith.mulf %607, %590 : vector<8x32xf32>
    %617 = arith.mulf %601, %609 : vector<8x32xf32>
    %618 = arith.addf %616, %617 : vector<8x32xf32>
    %619 = math.tanh %618 : vector<8x32xf32>
    %620 = arith.mulf %615, %619 : vector<8x32xf32>
    %c0_320 = arith.constant 0 : index
    %c0_321 = arith.constant 0 : index
    %c0_322 = arith.constant 0 : index
    %621 = vector.load %arg8[%c0_320, %c0_321, %c0_322] : memref<2x8x32xf32, #tpu.memory_space<vmem>>, vector<1x8x32xf32>
    %622 = vector.shape_cast %621 : vector<1x8x32xf32> to vector<8x32xf32>
    %623 = vector.shape_cast %620 : vector<8x32xf32> to vector<1x8x32xf32>
    tpu.vector_store %arg8[%c0_320, %c0_321, %c0_322], %623 {strides = array<i32>} : memref<2x8x32xf32, #tpu.memory_space<vmem>>, vector<1x8x32xf32>,
    %c0_323 = arith.constant 0 : index
    %c0_324 = arith.constant 0 : index
    %c0_325 = arith.constant 0 : index
    %624 = vector.load %arg9[%c0_323, %c0_324, %c0_325] : memref<2x8x32xf32, #tpu.memory_space<vmem>>, vector<1x8x32xf32>
    %625 = vector.shape_cast %624 : vector<1x8x32xf32> to vector<8x32xf32>
    %626 = vector.shape_cast %618 : vector<8x32xf32> to vector<1x8x32xf32>
    tpu.vector_store %arg9[%c0_323, %c0_324, %c0_325], %626 {strides = array<i32>} : memref<2x8x32xf32, #tpu.memory_space<vmem>>, vector<1x8x32xf32>,
    %c1_326 = arith.constant 1 : index
    %c0_327 = arith.constant 0 : index
    %c0_328 = arith.constant 0 : index
    %627 = vector.load %arg8[%c1_326, %c0_327, %c0_328] : memref<2x8x32xf32, #tpu.memory_space<vmem>>, vector<1x8x32xf32>
    %628 = vector.shape_cast %627 : vector<1x8x32xf32> to vector<8x32xf32>
    %c1_329 = arith.constant 1 : index
    %c0_330 = arith.constant 0 : index
    %c0_331 = arith.constant 0 : index
    %629 = vector.load %arg9[%c1_329, %c0_330, %c0_331] : memref<2x8x32xf32, #tpu.memory_space<vmem>>, vector<1x8x32xf32>
    %630 = vector.shape_cast %629 : vector<1x8x32xf32> to vector<8x32xf32>
    %631 = arith.truncf %628 : vector<8x32xf32> to vector<8x32xbf16>
    %c1_332 = arith.constant 1 : index
    %c0_333 = arith.constant 0 : index
    %c0_334 = arith.constant 0 : index
    %632 = vector.load %arg5[%c1_332, %c0_333, %c0_334] : memref<2x32x128xbf16, #tpu.memory_space<vmem>>, vector<1x32x128xbf16>
    %633 = vector.shape_cast %632 : vector<1x32x128xbf16> to vector<32x128xbf16>
    %cst_335 = arith.constant dense<0.000000e+00> : vector<8x128xf32>
    %634 = tpu.matmul %631, %633, %cst_335 {dimension_numbers = #tpu.dot_dimension_numbers<[1], [0], [0], [1], [0, 0, 1, 1], [], []>} : vector<8x32xbf16>, vector<32x128xbf16>, vector<8x128xf32> -> vector<8x128xf32>
    %635 = arith.truncf %620 : vector<8x32xf32> to vector<8x32xbf16>
    %c0_336 = arith.constant 0 : index
    %c0_337 = arith.constant 0 : index
    %c0_338 = arith.constant 0 : index
    %636 = vector.load %arg4[%c0_336, %c0_337, %c0_338] : memref<1x32x128xbf16, #tpu.memory_space<vmem>>, vector<1x32x128xbf16>
    %637 = vector.shape_cast %636 : vector<1x32x128xbf16> to vector<32x128xbf16>
    %cst_339 = arith.constant dense<0.000000e+00> : vector<8x128xf32>
    %638 = tpu.matmul %635, %637, %cst_339 {dimension_numbers = #tpu.dot_dimension_numbers<[1], [0], [0], [1], [0, 0, 1, 1], [], []>} : vector<8x32xbf16>, vector<32x128xbf16>, vector<8x128xf32> -> vector<8x128xf32>
    %639 = arith.addf %638, %634 : vector<8x128xf32>
    %c1_340 = arith.constant 1 : index
    %c0_341 = arith.constant 0 : index
    %c0_342 = arith.constant 0 : index
    %640 = vector.load %arg6[%c1_340, %c0_341, %c0_342] : memref<2x1x128xf32, #tpu.memory_space<vmem>>, vector<1x1x128xf32>
    %641 = vector.shape_cast %640 : vector<1x1x128xf32> to vector<1x128xf32>
    %642 = vector.broadcast %641 : vector<1x128xf32> to vector<8x128xf32>
    %643 = arith.addf %639, %642 : vector<8x128xf32>
    %644 = vector.extract_strided_slice %643 {offsets = [0, 0], sizes = [8, 32], strides = [1, 1]} : vector<8x128xf32> to vector<8x32xf32>
    %645 = arith.negf %644 : vector<8x32xf32>
    %646 = math.exp %645 : vector<8x32xf32>
    %cst_343 = arith.constant 1.000000e+00 : f32
    %647 = vector.broadcast %cst_343 : f32 to vector<8x32xf32>
    %648 = arith.addf %647, %646 : vector<8x32xf32>
    %649 = arith.divf %647, %648 : vector<8x32xf32>
    %650 = vector.extract_strided_slice %643 {offsets = [0, 32], sizes = [8, 32], strides = [1, 1]} : vector<8x128xf32> to vector<8x32xf32>
    %651 = arith.negf %650 : vector<8x32xf32>
    %652 = math.exp %651 : vector<8x32xf32>
    %cst_344 = arith.constant 1.000000e+00 : f32
    %653 = vector.broadcast %cst_344 : f32 to vector<8x32xf32>
    %654 = arith.addf %653, %652 : vector<8x32xf32>
    %655 = arith.divf %653, %654 : vector<8x32xf32>
    %656 = vector.extract_strided_slice %643 {offsets = [0, 64], sizes = [8, 32], strides = [1, 1]} : vector<8x128xf32> to vector<8x32xf32>
    %657 = math.tanh %656 : vector<8x32xf32>
    %658 = vector.extract_strided_slice %643 {offsets = [0, 96], sizes = [8, 32], strides = [1, 1]} : vector<8x128xf32> to vector<8x32xf32>
    %659 = arith.negf %658 : vector<8x32xf32>
    %660 = math.exp %659 : vector<8x32xf32>
    %cst_345 = arith.constant 1.000000e+00 : f32
    %661 = vector.broadcast %cst_345 : f32 to vector<8x32xf32>
    %662 = arith.addf %661, %660 : vector<8x32xf32>
    %663 = arith.divf %661, %662 : vector<8x32xf32>
    %664 = arith.mulf %655, %630 : vector<8x32xf32>
    %665 = arith.mulf %649, %657 : vector<8x32xf32>
    %666 = arith.addf %664, %665 : vector<8x32xf32>
    %667 = math.tanh %666 : vector<8x32xf32>
    %668 = arith.mulf %663, %667 : vector<8x32xf32>
    %c1_346 = arith.constant 1 : index
    %c0_347 = arith.constant 0 : index
    %c0_348 = arith.constant 0 : index
    %669 = vector.load %arg8[%c1_346, %c0_347, %c0_348] : memref<2x8x32xf32, #tpu.memory_space<vmem>>, vector<1x8x32xf32>
    %670 = vector.shape_cast %669 : vector<1x8x32xf32> to vector<8x32xf32>
    %671 = vector.shape_cast %668 : vector<8x32xf32> to vector<1x8x32xf32>
    tpu.vector_store %arg8[%c1_346, %c0_347, %c0_348], %671 {strides = array<i32>} : memref<2x8x32xf32, #tpu.memory_space<vmem>>, vector<1x8x32xf32>,
    %c1_349 = arith.constant 1 : index
    %c0_350 = arith.constant 0 : index
    %c0_351 = arith.constant 0 : index
    %672 = vector.load %arg9[%c1_349, %c0_350, %c0_351] : memref<2x8x32xf32, #tpu.memory_space<vmem>>, vector<1x8x32xf32>
    %673 = vector.shape_cast %672 : vector<1x8x32xf32> to vector<8x32xf32>
    %674 = vector.shape_cast %666 : vector<8x32xf32> to vector<1x8x32xf32>
    tpu.vector_store %arg9[%c1_349, %c0_350, %c0_351], %674 {strides = array<i32>} : memref<2x8x32xf32, #tpu.memory_space<vmem>>, vector<1x8x32xf32>,
    %675 = arith.index_cast %c6_i32 : i32 to index
    %c0_352 = arith.constant 0 : index
    %c0_353 = arith.constant 0 : index
    %676 = vector.load %arg7[%675, %c0_352, %c0_353] : memref<8x8x32xf32, #tpu.memory_space<vmem>>, vector<1x8x32xf32>
    %677 = vector.shape_cast %676 : vector<1x8x32xf32> to vector<8x32xf32>
    %678 = vector.shape_cast %668 : vector<8x32xf32> to vector<1x8x32xf32>
    tpu.vector_store %arg7[%675, %c0_352, %c0_353], %678 {strides = array<i32>} : memref<8x8x32xf32, #tpu.memory_space<vmem>>, vector<1x8x32xf32>,
    %c7_i32 = arith.constant 7 : i32
    %679 = arith.index_cast %c7_i32 : i32 to index
    %c0_354 = arith.constant 0 : index
    %c0_355 = arith.constant 0 : index
    %680 = vector.load %arg10[%679, %c0_354, %c0_355] : memref<8x8x128xf32, #tpu.memory_space<vmem>>, vector<1x8x128xf32>
    %681 = vector.shape_cast %680 : vector<1x8x128xf32> to vector<8x128xf32>
    %c0_356 = arith.constant 0 : index
    %c0_357 = arith.constant 0 : index
    %c0_358 = arith.constant 0 : index
    %682 = vector.load %arg8[%c0_356, %c0_357, %c0_358] : memref<2x8x32xf32, #tpu.memory_space<vmem>>, vector<1x8x32xf32>
    %683 = vector.shape_cast %682 : vector<1x8x32xf32> to vector<8x32xf32>
    %c0_359 = arith.constant 0 : index
    %c0_360 = arith.constant 0 : index
    %c0_361 = arith.constant 0 : index
    %684 = vector.load %arg9[%c0_359, %c0_360, %c0_361] : memref<2x8x32xf32, #tpu.memory_space<vmem>>, vector<1x8x32xf32>
    %685 = vector.shape_cast %684 : vector<1x8x32xf32> to vector<8x32xf32>
    %686 = arith.truncf %683 : vector<8x32xf32> to vector<8x32xbf16>
    %c0_362 = arith.constant 0 : index
    %c0_363 = arith.constant 0 : index
    %c0_364 = arith.constant 0 : index
    %687 = vector.load %arg5[%c0_362, %c0_363, %c0_364] : memref<2x32x128xbf16, #tpu.memory_space<vmem>>, vector<1x32x128xbf16>
    %688 = vector.shape_cast %687 : vector<1x32x128xbf16> to vector<32x128xbf16>
    %cst_365 = arith.constant dense<0.000000e+00> : vector<8x128xf32>
    %689 = tpu.matmul %686, %688, %cst_365 {dimension_numbers = #tpu.dot_dimension_numbers<[1], [0], [0], [1], [0, 0, 1, 1], [], []>} : vector<8x32xbf16>, vector<32x128xbf16>, vector<8x128xf32> -> vector<8x128xf32>
    %690 = arith.addf %681, %689 : vector<8x128xf32>
    %691 = vector.extract_strided_slice %690 {offsets = [0, 0], sizes = [8, 32], strides = [1, 1]} : vector<8x128xf32> to vector<8x32xf32>
    %692 = arith.negf %691 : vector<8x32xf32>
    %693 = math.exp %692 : vector<8x32xf32>
    %cst_366 = arith.constant 1.000000e+00 : f32
    %694 = vector.broadcast %cst_366 : f32 to vector<8x32xf32>
    %695 = arith.addf %694, %693 : vector<8x32xf32>
    %696 = arith.divf %694, %695 : vector<8x32xf32>
    %697 = vector.extract_strided_slice %690 {offsets = [0, 32], sizes = [8, 32], strides = [1, 1]} : vector<8x128xf32> to vector<8x32xf32>
    %698 = arith.negf %697 : vector<8x32xf32>
    %699 = math.exp %698 : vector<8x32xf32>
    %cst_367 = arith.constant 1.000000e+00 : f32
    %700 = vector.broadcast %cst_367 : f32 to vector<8x32xf32>
    %701 = arith.addf %700, %699 : vector<8x32xf32>
    %702 = arith.divf %700, %701 : vector<8x32xf32>
    %703 = vector.extract_strided_slice %690 {offsets = [0, 64], sizes = [8, 32], strides = [1, 1]} : vector<8x128xf32> to vector<8x32xf32>
    %704 = math.tanh %703 : vector<8x32xf32>
    %705 = vector.extract_strided_slice %690 {offsets = [0, 96], sizes = [8, 32], strides = [1, 1]} : vector<8x128xf32> to vector<8x32xf32>
    %706 = arith.negf %705 : vector<8x32xf32>
    %707 = math.exp %706 : vector<8x32xf32>
    %cst_368 = arith.constant 1.000000e+00 : f32
    %708 = vector.broadcast %cst_368 : f32 to vector<8x32xf32>
    %709 = arith.addf %708, %707 : vector<8x32xf32>
    %710 = arith.divf %708, %709 : vector<8x32xf32>
    %711 = arith.mulf %702, %685 : vector<8x32xf32>
    %712 = arith.mulf %696, %704 : vector<8x32xf32>
    %713 = arith.addf %711, %712 : vector<8x32xf32>
    %714 = math.tanh %713 : vector<8x32xf32>
    %715 = arith.mulf %710, %714 : vector<8x32xf32>
    %c0_369 = arith.constant 0 : index
    %c0_370 = arith.constant 0 : index
    %c0_371 = arith.constant 0 : index
    %716 = vector.load %arg8[%c0_369, %c0_370, %c0_371] : memref<2x8x32xf32, #tpu.memory_space<vmem>>, vector<1x8x32xf32>
    %717 = vector.shape_cast %716 : vector<1x8x32xf32> to vector<8x32xf32>
    %718 = vector.shape_cast %715 : vector<8x32xf32> to vector<1x8x32xf32>
    tpu.vector_store %arg8[%c0_369, %c0_370, %c0_371], %718 {strides = array<i32>} : memref<2x8x32xf32, #tpu.memory_space<vmem>>, vector<1x8x32xf32>,
    %c0_372 = arith.constant 0 : index
    %c0_373 = arith.constant 0 : index
    %c0_374 = arith.constant 0 : index
    %719 = vector.load %arg9[%c0_372, %c0_373, %c0_374] : memref<2x8x32xf32, #tpu.memory_space<vmem>>, vector<1x8x32xf32>
    %720 = vector.shape_cast %719 : vector<1x8x32xf32> to vector<8x32xf32>
    %721 = vector.shape_cast %713 : vector<8x32xf32> to vector<1x8x32xf32>
    tpu.vector_store %arg9[%c0_372, %c0_373, %c0_374], %721 {strides = array<i32>} : memref<2x8x32xf32, #tpu.memory_space<vmem>>, vector<1x8x32xf32>,
    %c1_375 = arith.constant 1 : index
    %c0_376 = arith.constant 0 : index
    %c0_377 = arith.constant 0 : index
    %722 = vector.load %arg8[%c1_375, %c0_376, %c0_377] : memref<2x8x32xf32, #tpu.memory_space<vmem>>, vector<1x8x32xf32>
    %723 = vector.shape_cast %722 : vector<1x8x32xf32> to vector<8x32xf32>
    %c1_378 = arith.constant 1 : index
    %c0_379 = arith.constant 0 : index
    %c0_380 = arith.constant 0 : index
    %724 = vector.load %arg9[%c1_378, %c0_379, %c0_380] : memref<2x8x32xf32, #tpu.memory_space<vmem>>, vector<1x8x32xf32>
    %725 = vector.shape_cast %724 : vector<1x8x32xf32> to vector<8x32xf32>
    %726 = arith.truncf %723 : vector<8x32xf32> to vector<8x32xbf16>
    %c1_381 = arith.constant 1 : index
    %c0_382 = arith.constant 0 : index
    %c0_383 = arith.constant 0 : index
    %727 = vector.load %arg5[%c1_381, %c0_382, %c0_383] : memref<2x32x128xbf16, #tpu.memory_space<vmem>>, vector<1x32x128xbf16>
    %728 = vector.shape_cast %727 : vector<1x32x128xbf16> to vector<32x128xbf16>
    %cst_384 = arith.constant dense<0.000000e+00> : vector<8x128xf32>
    %729 = tpu.matmul %726, %728, %cst_384 {dimension_numbers = #tpu.dot_dimension_numbers<[1], [0], [0], [1], [0, 0, 1, 1], [], []>} : vector<8x32xbf16>, vector<32x128xbf16>, vector<8x128xf32> -> vector<8x128xf32>
    %730 = arith.truncf %715 : vector<8x32xf32> to vector<8x32xbf16>
    %c0_385 = arith.constant 0 : index
    %c0_386 = arith.constant 0 : index
    %c0_387 = arith.constant 0 : index
    %731 = vector.load %arg4[%c0_385, %c0_386, %c0_387] : memref<1x32x128xbf16, #tpu.memory_space<vmem>>, vector<1x32x128xbf16>
    %732 = vector.shape_cast %731 : vector<1x32x128xbf16> to vector<32x128xbf16>
    %cst_388 = arith.constant dense<0.000000e+00> : vector<8x128xf32>
    %733 = tpu.matmul %730, %732, %cst_388 {dimension_numbers = #tpu.dot_dimension_numbers<[1], [0], [0], [1], [0, 0, 1, 1], [], []>} : vector<8x32xbf16>, vector<32x128xbf16>, vector<8x128xf32> -> vector<8x128xf32>
    %734 = arith.addf %733, %729 : vector<8x128xf32>
    %c1_389 = arith.constant 1 : index
    %c0_390 = arith.constant 0 : index
    %c0_391 = arith.constant 0 : index
    %735 = vector.load %arg6[%c1_389, %c0_390, %c0_391] : memref<2x1x128xf32, #tpu.memory_space<vmem>>, vector<1x1x128xf32>
    %736 = vector.shape_cast %735 : vector<1x1x128xf32> to vector<1x128xf32>
    %737 = vector.broadcast %736 : vector<1x128xf32> to vector<8x128xf32>
    %738 = arith.addf %734, %737 : vector<8x128xf32>
    %739 = vector.extract_strided_slice %738 {offsets = [0, 0], sizes = [8, 32], strides = [1, 1]} : vector<8x128xf32> to vector<8x32xf32>
    %740 = arith.negf %739 : vector<8x32xf32>
    %741 = math.exp %740 : vector<8x32xf32>
    %cst_392 = arith.constant 1.000000e+00 : f32
    %742 = vector.broadcast %cst_392 : f32 to vector<8x32xf32>
    %743 = arith.addf %742, %741 : vector<8x32xf32>
    %744 = arith.divf %742, %743 : vector<8x32xf32>
    %745 = vector.extract_strided_slice %738 {offsets = [0, 32], sizes = [8, 32], strides = [1, 1]} : vector<8x128xf32> to vector<8x32xf32>
    %746 = arith.negf %745 : vector<8x32xf32>
    %747 = math.exp %746 : vector<8x32xf32>
    %cst_393 = arith.constant 1.000000e+00 : f32
    %748 = vector.broadcast %cst_393 : f32 to vector<8x32xf32>
    %749 = arith.addf %748, %747 : vector<8x32xf32>
    %750 = arith.divf %748, %749 : vector<8x32xf32>
    %751 = vector.extract_strided_slice %738 {offsets = [0, 64], sizes = [8, 32], strides = [1, 1]} : vector<8x128xf32> to vector<8x32xf32>
    %752 = math.tanh %751 : vector<8x32xf32>
    %753 = vector.extract_strided_slice %738 {offsets = [0, 96], sizes = [8, 32], strides = [1, 1]} : vector<8x128xf32> to vector<8x32xf32>
    %754 = arith.negf %753 : vector<8x32xf32>
    %755 = math.exp %754 : vector<8x32xf32>
    %cst_394 = arith.constant 1.000000e+00 : f32
    %756 = vector.broadcast %cst_394 : f32 to vector<8x32xf32>
    %757 = arith.addf %756, %755 : vector<8x32xf32>
    %758 = arith.divf %756, %757 : vector<8x32xf32>
    %759 = arith.mulf %750, %725 : vector<8x32xf32>
    %760 = arith.mulf %744, %752 : vector<8x32xf32>
    %761 = arith.addf %759, %760 : vector<8x32xf32>
    %762 = math.tanh %761 : vector<8x32xf32>
    %763 = arith.mulf %758, %762 : vector<8x32xf32>
    %c1_395 = arith.constant 1 : index
    %c0_396 = arith.constant 0 : index
    %c0_397 = arith.constant 0 : index
    %764 = vector.load %arg8[%c1_395, %c0_396, %c0_397] : memref<2x8x32xf32, #tpu.memory_space<vmem>>, vector<1x8x32xf32>
    %765 = vector.shape_cast %764 : vector<1x8x32xf32> to vector<8x32xf32>
    %766 = vector.shape_cast %763 : vector<8x32xf32> to vector<1x8x32xf32>
    tpu.vector_store %arg8[%c1_395, %c0_396, %c0_397], %766 {strides = array<i32>} : memref<2x8x32xf32, #tpu.memory_space<vmem>>, vector<1x8x32xf32>,
    %c1_398 = arith.constant 1 : index
    %c0_399 = arith.constant 0 : index
    %c0_400 = arith.constant 0 : index
    %767 = vector.load %arg9[%c1_398, %c0_399, %c0_400] : memref<2x8x32xf32, #tpu.memory_space<vmem>>, vector<1x8x32xf32>
    %768 = vector.shape_cast %767 : vector<1x8x32xf32> to vector<8x32xf32>
    %769 = vector.shape_cast %761 : vector<8x32xf32> to vector<1x8x32xf32>
    tpu.vector_store %arg9[%c1_398, %c0_399, %c0_400], %769 {strides = array<i32>} : memref<2x8x32xf32, #tpu.memory_space<vmem>>, vector<1x8x32xf32>,
    %770 = arith.index_cast %c7_i32 : i32 to index
    %c0_401 = arith.constant 0 : index
    %c0_402 = arith.constant 0 : index
    %771 = vector.load %arg7[%770, %c0_401, %c0_402] : memref<8x8x32xf32, #tpu.memory_space<vmem>>, vector<1x8x32xf32>
    %772 = vector.shape_cast %771 : vector<1x8x32xf32> to vector<8x32xf32>
    %773 = vector.shape_cast %763 : vector<8x32xf32> to vector<1x8x32xf32>
    tpu.vector_store %arg7[%770, %c0_401, %c0_402], %773 {strides = array<i32>} : memref<8x8x32xf32, #tpu.memory_space<vmem>>, vector<1x8x32xf32>,
    %c8_i32 = arith.constant 8 : i32
    return
  }
  func.func @transform_0(%arg0: i32, %arg1: i32) -> (i32, i32, i32) {
    %c0_i32 = arith.constant 0 : i32
    %c0_i32_0 = arith.constant 0 : i32
    return %arg1, %arg0, %c0_i32 : i32, i32, i32
  }
  func.func @transform_1(%arg0: i32, %arg1: i32) -> (i32, i32) {
    %c0_i32 = arith.constant 0 : i32
    %c0_i32_0 = arith.constant 0 : i32
    %c0_i32_1 = arith.constant 0 : i32
    return %c0_i32, %c0_i32_0 : i32, i32
  }
  func.func @transform_2(%arg0: i32, %arg1: i32) -> (i32, i32, i32) {
    %c0_i32 = arith.constant 0 : i32
    %c0_i32_0 = arith.constant 0 : i32
    %c0_i32_1 = arith.constant 0 : i32
    %c0_i32_2 = arith.constant 0 : i32
    return %c0_i32, %c0_i32_0, %c0_i32_1 : i32, i32, i32
  }
  func.func @transform_3(%arg0: i32, %arg1: i32) -> (i32, i32, i32) {
    %c0_i32 = arith.constant 0 : i32
    %c0_i32_0 = arith.constant 0 : i32
    %c0_i32_1 = arith.constant 0 : i32
    %c0_i32_2 = arith.constant 0 : i32
    return %c0_i32, %c0_i32_0, %c0_i32_1 : i32, i32, i32
  }
  func.func @transform_4(%arg0: i32, %arg1: i32) -> (i32, i32, i32) {
    %c0_i32 = arith.constant 0 : i32
    %c0_i32_0 = arith.constant 0 : i32
    %c0_i32_1 = arith.constant 0 : i32
    %c0_i32_2 = arith.constant 0 : i32
    return %c0_i32, %c0_i32_0, %c0_i32_1 : i32, i32, i32
  }
  func.func @transform_5(%arg0: i32, %arg1: i32) -> (i32, i32, i32) {
    %c0_i32 = arith.constant 0 : i32
    %c0_i32_0 = arith.constant 0 : i32
    return %arg1, %arg0, %c0_i32 : i32, i32, i32
  }
}

</mosaic_0001>

<llo_original>
// kernel: encoder_forward.1
$region0: #{encoder_forward.1}
  #allocation0 [shape = 'u32[]', space=smem, size = 0x4, offset = 0x4, fixed_abs, tag = 'smem constant byte address 0x4 - core index']
  #allocation1 [shape = 'u32[144,128]{1,0:T(1,128)}', space=vmem, size = 0x12000, scoped, tag = 'internal scratch']
  #allocation2 [shape = 'f32[2,8,32]{2,1,0:T(8,128)}', space=vmem, size = 0x2000, scoped, tag = 'scratch operand']
  #allocation3 [shape = 'f32[2,8,32]{2,1,0:T(8,128)}', space=vmem, size = 0x2000, scoped, tag = 'scratch operand']
  #allocation4 [shape = 'f32[8,8,128]{2,1,0:T(8,128)}', space=vmem, size = 0x8000, scoped, tag = 'scratch operand']
  %s0 = inlined_call_operand.vmem [shape: f32[8,8,8], index: 0, kind: input, shape index: {}]
  %s1 = inlined_call_operand.vmem [shape: bf16[8,128], index: 1, kind: input, shape index: {}]
  %s2 = inlined_call_operand.vmem [shape: bf16[1,32,128], index: 2, kind: input, shape index: {}]
  %s3 = inlined_call_operand.vmem [shape: bf16[2,32,128], index: 3, kind: input, shape index: {}]
  %s4 = inlined_call_operand.vmem [shape: f32[2,1,128], index: 4, kind: input, shape index: {}]
  %s5 = inlined_call_operand.vmem [shape: f32[8,8,32], index: 5, kind: output, shape index: {}]
  %s6 = sld [smem:[#allocation0]]
  $region34: #{encoder_forward.1} parent=0
    _
  %s8 = ssub.s32 1, %s6
  %s9 = scalar_select 0, %s8, %s6
  // Predicated region
  $region2: #{encoder_forward.1} parent=0 // pred_check
    _
  $region3: #{encoder_forward.1} parent=0 // pred_check_branch
    %11 = sbr.rel (0) target = $region5
  $region4: #{encoder_forward.1} parent=0 // pred_region
    _
  $region5: #{encoder_forward.1} parent=0 // pred_fallthru
    _
  // Predicated region
  $region6: #{encoder_forward.1} parent=0 // pred_check
    _
  $region7: #{encoder_forward.1} parent=0 // pred_check_branch
    %13 = sbr.rel (0) target = $region9
  $region8: #{encoder_forward.1} parent=0 // pred_region
    _
  $region9: #{encoder_forward.1} parent=0 // pred_fallthru
    _
  // Predicated region
  $region10: #{encoder_forward.1} parent=0 // pred_check
    _
  $region11: #{encoder_forward.1} parent=0 // pred_check_branch
    %15 = sbr.rel (0) target = $region13
  $region12: #{encoder_forward.1} parent=0 // pred_region
    _
  $region13: #{encoder_forward.1} parent=0 // pred_fallthru
    _
  // Predicated region
  $region14: #{encoder_forward.1} parent=0 // pred_check
    _
  $region15: #{encoder_forward.1} parent=0 // pred_check_branch
    %17 = sbr.rel (0) target = $region17
  $region16: #{encoder_forward.1} parent=0 // pred_region
    _
  $region17: #{encoder_forward.1} parent=0 // pred_fallthru
    _
  // Predicated region
  $region18: #{encoder_forward.1} parent=0 // pred_check
    _
  $region19: #{encoder_forward.1} parent=0 // pred_check_branch
    %19 = sbr.rel (0) target = $region21
  $region20: #{encoder_forward.1} parent=0 // pred_region
    _
  $region21: #{encoder_forward.1} parent=0 // pred_fallthru
    _
  %p21 = scmp.eq.s32.totalorder 0, 0
  // Predicated region
  $region22: #{encoder_forward.1} parent=0 // pred_check
    %p22 = pneg %p21
  $region23: #{encoder_forward.1} parent=0 // pred_check_branch
    %24 = sbr.rel (%p22) target = $region25
  $region24: #{encoder_forward.1} parent=0 // pred_region
    %vm25 = vcmask 261120
    %26 = vst.msk [vmem:[#allocation2] sm:$0xff] %vm25, 0.0
    %27 = vst.msk [vmem:[#allocation2 + $0x8] sm:$0xff] %vm25, 0.0
    %28 = vst.msk [vmem:[#allocation3] sm:$0xff] %vm25, 0.0
    %29 = vst.msk [vmem:[#allocation3 + $0x8] sm:$0xff] %vm25, 0.0
  $region25: #{encoder_forward.1} parent=0 // pred_fallthru
    _
  %v30 = vld [vmem:[%s0] sm:$0xff]
  %v31 = vld [vmem:[%s0 + $0x8] sm:$0xff]
  %v32 = vld [vmem:[%s0 + $0x10] sm:$0xff]
  %v33 = vld [vmem:[%s0 + $0x18] sm:$0xff]
  %v34 = vld [vmem:[%s0 + $0x20] sm:$0xff]
  %v35 = vld [vmem:[%s0 + $0x28] sm:$0xff]
  %v36 = vld [vmem:[%s0 + $0x30] sm:$0xff]
  %v37 = vld [vmem:[%s0 + $0x38] sm:$0xff]
  %v38 = vpack.c.bf16 %v31, %v30
  %v39 = vpack.c.bf16 %v33, %v32
  %v40 = vpack.c.bf16 %v35, %v34
  %v41 = vpack.c.bf16 %v37, %v36
  %v42 = vld [vmem:[%s1] sm:$0xf]
  %v43 = vld [vmem:[%s4] sm:$0x1]
  %v45 = vlaneseq
  %v46 = vshrl.u32 %v45, 7
  %v47 = vsub.s32 0, %v46
  %v48 = vrot.slane %v43, %v47
  %vm50 = vcmask 64512
  %v52 = vsel %vm50, %v38, 0
  %v55 = vsel %vm50, %v39, 0
  %v58 = vsel %vm50, %v40, 0
  %v61 = vsel %vm50, %v41, 0
  %vm63 = vcmask 1043456
  %v65 = vsel %vm63, %v42, 0
  %67 = vmatprep.subr.bf16.mxu0 0
  %68 = vmatpush1.bf16.msra.mxu0 %v65
  %69 = vmatprep.subr.bf16.mxu0 0
  %70 = vmatpush1.bf16.msra.mxu0 0
  %71 = vmatprep.subr.bf16.mxu0 0
  %72 = vmatpush1.bf16.msra.mxu0 0
  %73 = vmatprep.subr.bf16.mxu0 0
  %74 = vmatpush1.bf16.msra.mxu0 0
  %75 = vmatprep.subr.bf16.mxu0 0
  %76 = vmatpush1.bf16.msra.mxu0 0
  %77 = vmatprep.subr.bf16.mxu0 0
  %78 = vmatpush1.bf16.msra.mxu0 0
  %79 = vmatprep.subr.bf16.mxu0 0
  %80 = vmatpush1.bf16.msra.mxu0 0
  %81 = vmatprep.subr.bf16.mxu0 0
  %82 = vmatpush1.bf16.msra.mxu0 0
  %83 = vmatprep.subr.bf16.mxu0 0
  %84 = vmatpush1.bf16.msra.mxu0 0
  %85 = vmatprep.subr.bf16.mxu0 0
  %86 = vmatpush1.bf16.msra.mxu0 0
  %87 = vmatprep.subr.bf16.mxu0 0
  %88 = vmatpush1.bf16.msra.mxu0 0
  %89 = vmatprep.subr.bf16.mxu0 0
  %90 = vmatpush1.bf16.msra.mxu0 0
  %91 = vmatprep.subr.bf16.mxu0 0
  %92 = vmatpush1.bf16.msra.mxu0 0
  %93 = vmatprep.subr.bf16.mxu0 0
  %94 = vmatpush1.bf16.msra.mxu0 0
  %95 = vmatprep.subr.bf16.mxu0 0
  %96 = vmatpush1.bf16.msra.mxu0 0
  %97 = vmatprep.subr.bf16.mxu0 0
  %98 = vmatpush1.bf16.msra.mxu0 0
  %99 = vmatprep.mubr.bf16.mxu0 0
  %100 = vmatmul.mubr.bf16.gmra.mrb[0].mxu0 %v52
  %v101 = vpop.f32.mrb[0].mxu0
  %v102 = vadd.f32 %v48, %v101
  %v103 = vpop.f32.mrb[0].mxu0
  %v104 = vpop.f32.mrb[0].mxu0
  %v105 = vadd.f32 %v48, %v104
  %v106 = vpop.f32.mrb[0].mxu0
  %107 = vmatprep.mubr.bf16.mxu0 0
  %108 = vmatmul.mubr.bf16.gmra.mrb[0].mxu0 %v55
  %v109 = vpop.f32.mrb[0].mxu0
  %v110 = vadd.f32 %v48, %v109
  %v111 = vpop.f32.mrb[0].mxu0
  %v112 = vpop.f32.mrb[0].mxu0
  %v113 = vadd.f32 %v48, %v112
  %v114 = vpop.f32.mrb[0].mxu0
  %115 = vmatprep.mubr.bf16.mxu0 0
  %116 = vmatmul.mubr.bf16.gmra.mrb[0].mxu0 %v58
  %v117 = vpop.f32.mrb[0].mxu0
  %v118 = vadd.f32 %v48, %v117
  %v119 = vpop.f32.mrb[0].mxu0
  %v120 = vpop.f32.mrb[0].mxu0
  %v121 = vadd.f32 %v48, %v120
  %v122 = vpop.f32.mrb[0].mxu0
  %123 = vmatprep.mubr.bf16.mxu0 0
  %124 = vmatmul.mubr.bf16.gmra.mrb[0].mxu0 %v61
  %v125 = vpop.f32.mrb[0].mxu0
  %v126 = vadd.f32 %v48, %v125
  %v127 = vpop.f32.mrb[0].mxu0
  %v128 = vpop.f32.mrb[0].mxu0
  %v129 = vadd.f32 %v48, %v128
  %v130 = vpop.f32.mrb[0].mxu0
  %131 = vdwg.mxu0
  %132 = vst [vmem:[#allocation4] sm:$0xff] %v102
  %133 = vst [vmem:[#allocation4 + $0x8] sm:$0xff] %v105
  %134 = vst [vmem:[#allocation4 + $0x10] sm:$0xff] %v110
  %135 = vst [vmem:[#allocation4 + $0x18] sm:$0xff] %v113
  %136 = vst [vmem:[#allocation4 + $0x20] sm:$0xff] %v118
  %137 = vst [vmem:[#allocation4 + $0x28] sm:$0xff] %v121
  %138 = vst [vmem:[#allocation4 + $0x30] sm:$0xff] %v126
  %139 = vst [vmem:[#allocation4 + $0x38] sm:$0xff] %v129
  %v140 = vld [vmem:[#allocation4] sm:$0xff]
  %v141 = vld [vmem:[#allocation2] sm:$0xff]
  %v142 = vld [vmem:[#allocation3] sm:$0xff]
  %v143 = vpack.c.bf16 %v141, %v141
  %v144 = vld [vmem:[%s3] sm:$0xf]
  %v145 = vld [vmem:[%s3 + $0x4] sm:$0xf]
  %v146 = vld [vmem:[%s3 + $0x8] sm:$0xf]
  %v147 = vld [vmem:[%s3 + $0xc] sm:$0xf]
  %v152 = vunpack.c.l.b16 %v144
  %v153 = vunpack.c.l.b16 %v145
  %v154 = vunpack.c.l.b16 %v146
  %v155 = vunpack.c.l.b16 %v147
  %v156 = vpack.c.b16 %v153, %v152
  %v157 = vpack.c.b16 %v155, %v154
  %vm160 = vcmask 261120
  %v162 = vsel %vm160, %v143, 0
  %164 = vmatprep.subr.bf16.mxu0 0
  %165 = vmatpush1.bf16.msra.mxu0 %v156
  %166 = vmatprep.subr.bf16.mxu0 0
  %167 = vmatpush1.bf16.msra.mxu0 %v157
  %168 = vmatprep.subr.bf16.mxu0 0
  %169 = vmatpush1.bf16.msra.mxu0 0
  %170 = vmatprep.subr.bf16.mxu0 0
  %171 = vmatpush1.bf16.msra.mxu0 0
  %172 = vmatprep.subr.bf16.mxu0 0
  %173 = vmatpush1.bf16.msra.mxu0 0
  %174 = vmatprep.subr.bf16.mxu0 0
  %175 = vmatpush1.bf16.msra.mxu0 0
  %176 = vmatprep.subr.bf16.mxu0 0
  %177 = vmatpush1.bf16.msra.mxu0 0
  %178 = vmatprep.subr.bf16.mxu0 0
  %179 = vmatpush1.bf16.msra.mxu0 0
  %180 = vmatprep.subr.bf16.mxu0 0
  %181 = vmatpush1.bf16.msra.mxu0 0
  %182 = vmatprep.subr.bf16.mxu0 0
  %183 = vmatpush1.bf16.msra.mxu0 0
  %184 = vmatprep.subr.bf16.mxu0 0
  %185 = vmatpush1.bf16.msra.mxu0 0
  %186 = vmatprep.subr.bf16.mxu0 0
  %187 = vmatpush1.bf16.msra.mxu0 0
  %188 = vmatprep.subr.bf16.mxu0 0
  %189 = vmatpush1.bf16.msra.mxu0 0
  %190 = vmatprep.subr.bf16.mxu0 0
  %191 = vmatpush1.bf16.msra.mxu0 0
  %192 = vmatprep.subr.bf16.mxu0 0
  %193 = vmatpush1.bf16.msra.mxu0 0
  %194 = vmatprep.subr.bf16.mxu0 0
  %195 = vmatpush1.bf16.msra.mxu0 0
  %196 = vmatprep.mubr.bf16.mxu0 0
  %197 = vmatmul.mubr.bf16.gmra.mrb[0].mxu0 %v162
  %v198 = vpop.f32.mrb[0].mxu0
  %v199 = vadd.f32 0.0, %v198
  %v200 = vpop.f32.mrb[0].mxu0
  %v201 = vpop.f32.mrb[0].mxu0
  %v202 = vpop.f32.mrb[0].mxu0
  %203 = vdwg.mxu0
  %v204 = vadd.f32 %v140, %v199
  %v205 = vxor.u32 %v204, 2147483648
  %v206 = vmul.f32 %v205, 1.442695
  %v207 = vpow.pop %v206
  %v208 = vadd.f32 %v207, 1.0
  %v209 = vrcp.pop %v208
  %v210 = vmul.f32 1.0, %v209
  %v211 = vtanh.pop %v204
  %213 = vrot.lane.b32.xlu0 %v142, 32
  %v214 = vpop.permute.xlu0 %213
  %v216 = vmul.f32 %v210, %v214
  %218 = vrot.lane.b32.xlu0 %v211, 64
  %v219 = vpop.permute.xlu0 %218
  %v221 = vmul.f32 %v210, %v219
  %223 = vrot.lane.b32.xlu0 %v221, 32
  %v224 = vpop.permute.xlu0 %223
  %v226 = vadd.f32 %v216, %v224
  %v227 = vtanh.pop %v226
  %229 = vrot.lane.b32.xlu0 %v227, 64
  %v230 = vpop.permute.xlu0 %229
  %v232 = vmul.f32 %v210, %v230
  %234 = vrot.lane.b32.xlu0 %v232, 32
  %v235 = vpop.permute.xlu0 %234
  %237 = vst.msk [vmem:[#allocation2] sm:$0xff] %vm160, %v235
  %239 = vrot.lane.b32.xlu0 %v226, 96
  %v240 = vpop.permute.xlu0 %239
  %242 = vst.msk [vmem:[#allocation3] sm:$0xff] %vm160, %v240
  %s243 = scalar_lea.vmem [#allocation2], 8
  %v244 = vld [vmem:[%s243] sm:$0xff]
  %s245 = scalar_lea.vmem [#allocation3], 8
  %v246 = vld [vmem:[%s245] sm:$0xff]
  %v247 = vpack.c.bf16 %v244, %v244
  %s248 = scalar_lea.vmem %s3, 16
  %v249 = vld [vmem:[%s248] sm:$0xf]
  %v250 = vld [vmem:[%s248 + $0x4] sm:$0xf]
  %v251 = vld [vmem:[%s248 + $0x8] sm:$0xf]
  %v252 = vld [vmem:[%s248 + $0xc] sm:$0xf]
  %v257 = vunpack.c.l.b16 %v249
  %v258 = vunpack.c.l.b16 %v250
  %v259 = vunpack.c.l.b16 %v251
  %v260 = vunpack.c.l.b16 %v252
  %v261 = vpack.c.b16 %v258, %v257
  %v262 = vpack.c.b16 %v260, %v259
  %v266 = vsel %vm160, %v247, 0
  %268 = vmatprep.subr.bf16.mxu0 0
  %269 = vmatpush1.bf16.msra.mxu0 %v261
  %270 = vmatprep.subr.bf16.mxu0 0
  %271 = vmatpush1.bf16.msra.mxu0 %v262
  %272 = vmatprep.subr.bf16.mxu0 0
  %273 = vmatpush1.bf16.msra.mxu0 0
  %274 = vmatprep.subr.bf16.mxu0 0
  %275 = vmatpush1.bf16.msra.mxu0 0
  %276 = vmatprep.subr.bf16.mxu0 0
  %277 = vmatpush1.bf16.msra.mxu0 0
  %278 = vmatprep.subr.bf16.mxu0 0
  %279 = vmatpush1.bf16.msra.mxu0 0
  %280 = vmatprep.subr.bf16.mxu0 0
  %281 = vmatpush1.bf16.msra.mxu0 0
  %282 = vmatprep.subr.bf16.mxu0 0
  %283 = vmatpush1.bf16.msra.mxu0 0
  %284 = vmatprep.subr.bf16.mxu0 0
  %285 = vmatpush1.bf16.msra.mxu0 0
  %286 = vmatprep.subr.bf16.mxu0 0
  %287 = vmatpush1.bf16.msra.mxu0 0
  %288 = vmatprep.subr.bf16.mxu0 0
  %289 = vmatpush1.bf16.msra.mxu0 0
  %290 = vmatprep.subr.bf16.mxu0 0
  %291 = vmatpush1.bf16.msra.mxu0 0
  %292 = vmatprep.subr.bf16.mxu0 0
  %293 = vmatpush1.bf16.msra.mxu0 0
  %294 = vmatprep.subr.bf16.mxu0 0
  %295 = vmatpush1.bf16.msra.mxu0 0
  %296 = vmatprep.subr.bf16.mxu0 0
  %297 = vmatpush1.bf16.msra.mxu0 0
  %298 = vmatprep.subr.bf16.mxu0 0
  %299 = vmatpush1.bf16.msra.mxu0 0
  %300 = vmatprep.mubr.bf16.mxu0 0
  %301 = vmatmul.mubr.bf16.gmra.mrb[0].mxu0 %v266
  %v302 = vpop.f32.mrb[0].mxu0
  %v303 = vadd.f32 0.0, %v302
  %v304 = vpop.f32.mrb[0].mxu0
  %v305 = vpop.f32.mrb[0].mxu0
  %v306 = vpop.f32.mrb[0].mxu0
  %307 = vdwg.mxu0
  %v308 = vpack.c.bf16 %v232, %v232
  %v309 = vld [vmem:[%s2] sm:$0xf]
  %v310 = vld [vmem:[%s2 + $0x4] sm:$0xf]
  %v311 = vld [vmem:[%s2 + $0x8] sm:$0xf]
  %v312 = vld [vmem:[%s2 + $0xc] sm:$0xf]
  %314 = vrot.lane.b32.xlu0 %v308, 32
  %v315 = vpop.permute.xlu0 %314
  %v320 = vunpack.c.l.b16 %v309
  %v321 = vunpack.c.l.b16 %v310
  %v322 = vunpack.c.l.b16 %v311
  %v323 = vunpack.c.l.b16 %v312
  %v324 = vpack.c.b16 %v321, %v320
  %v325 = vpack.c.b16 %v323, %v322
  %v329 = vsel %vm160, %v315, 0
  %331 = vmatprep.subr.bf16.mxu0 0
  %332 = vmatpush1.bf16.msra.mxu0 %v324
  %333 = vmatprep.subr.bf16.mxu0 0
  %334 = vmatpush1.bf16.msra.mxu0 %v325
  %335 = vmatprep.subr.bf16.mxu0 0
  %336 = vmatpush1.bf16.msra.mxu0 0
  %337 = vmatprep.subr.bf16.mxu0 0
  %338 = vmatpush1.bf16.msra.mxu0 0
  %339 = vmatprep.subr.bf16.mxu0 0
  %340 = vmatpush1.bf16.msra.mxu0 0
  %341 = vmatprep.subr.bf16.mxu0 0
  %342 = vmatpush1.bf16.msra.mxu0 0
  %343 = vmatprep.subr.bf16.mxu0 0
  %344 = vmatpush1.bf16.msra.mxu0 0
  %345 = vmatprep.subr.bf16.mxu0 0
  %346 = vmatpush1.bf16.msra.mxu0 0
  %347 = vmatprep.subr.bf16.mxu0 0
  %348 = vmatpush1.bf16.msra.mxu0 0
  %349 = vmatprep.subr.bf16.mxu0 0
  %350 = vmatpush1.bf16.msra.mxu0 0
  %351 = vmatprep.subr.bf16.mxu0 0
  %352 = vmatpush1.bf16.msra.mxu0 0
  %353 = vmatprep.subr.bf16.mxu0 0
  %354 = vmatpush1.bf16.msra.mxu0 0
  %355 = vmatprep.subr.bf16.mxu0 0
  %356 = vmatpush1.bf16.msra.mxu0 0
  %357 = vmatprep.subr.bf16.mxu0 0
  %358 = vmatpush1.bf16.msra.mxu0 0
  %359 = vmatprep.subr.bf16.mxu0 0
  %360 = vmatpush1.bf16.msra.mxu0 0
  %361 = vmatprep.subr.bf16.mxu0 0
  %362 = vmatpush1.bf16.msra.mxu0 0
  %363 = vmatprep.mubr.bf16.mxu0 0
  %364 = vmatmul.mubr.bf16.gmra.mrb[0].mxu0 %v329
  %v365 = vpop.f32.mrb[0].mxu0
  %v366 = vadd.f32 %v303, %v365
  %v367 = vpop.f32.mrb[0].mxu0
  %v368 = vpop.f32.mrb[0].mxu0
  %v369 = vpop.f32.mrb[0].mxu0
  %370 = vdwg.mxu0
  %s371 = scalar_lea.vmem %s4, 1
  %v372 = vld [vmem:[%s371] sm:$0x1]
  %v374 = vlaneseq
  %v375 = vshrl.u32 %v374, 7
  %v376 = vsub.s32 0, %v375
  %v377 = vrot.slane %v372, %v376
  %v379 = vadd.f32 %v366, %v377
  %v380 = vxor.u32 %v379, 2147483648
  %v381 = vmul.f32 %v380, 1.442695
  %v382 = vpow.pop %v381
  %v383 = vadd.f32 %v382, 1.0
  %v384 = vrcp.pop %v383
  %v385 = vmul.f32 1.0, %v384
  %v386 = vtanh.pop %v379
  %388 = vrot.lane.b32.xlu0 %v246, 32
  %v389 = vpop.permute.xlu0 %388
  %v391 = vmul.f32 %v385, %v389
  %393 = vrot.lane.b32.xlu0 %v386, 64
  %v394 = vpop.permute.xlu0 %393
  %v396 = vmul.f32 %v385, %v394
  %398 = vrot.lane.b32.xlu0 %v396, 32
  %v399 = vpop.permute.xlu0 %398
  %v401 = vadd.f32 %v391, %v399
  %v402 = vtanh.pop %v401
  %404 = vrot.lane.b32.xlu0 %v402, 64
  %v405 = vpop.permute.xlu0 %404
  %v407 = vmul.f32 %v385, %v405
  %409 = vrot.lane.b32.xlu0 %v407, 32
  %v410 = vpop.permute.xlu0 %409
  %412 = vst.msk [vmem:[%s243] sm:$0xff] %vm160, %v410
  %414 = vrot.lane.b32.xlu0 %v401, 96
  %v415 = vpop.permute.xlu0 %414
  %417 = vst.msk [vmem:[%s245] sm:$0xff] %vm160, %v415
  %418 = vst.msk [vmem:[%s5] sm:$0xff] %vm160, %v410
  %s419 = scalar_lea.vmem [#allocation4], 8
  %v420 = vld [vmem:[%s419] sm:$0xff]
  %v421 = vld [vmem:[#allocation2] sm:$0xff]
  %v422 = vld [vmem:[#allocation3] sm:$0xff]
  %v423 = vpack.c.bf16 %v421, %v421
  %v424 = vld [vmem:[%s3] sm:$0xf]
  %v425 = vld [vmem:[%s3 + $0x4] sm:$0xf]
  %v426 = vld [vmem:[%s3 + $0x8] sm:$0xf]
  %v427 = vld [vmem:[%s3 + $0xc] sm:$0xf]
  %v432 = vunpack.c.l.b16 %v424
  %v433 = vunpack.c.l.b16 %v425
  %v434 = vunpack.c.l.b16 %v426
  %v435 = vunpack.c.l.b16 %v427
  %v436 = vpack.c.b16 %v433, %v432
  %v437 = vpack.c.b16 %v435, %v434
  %v441 = vsel %vm160, %v423, 0
  %443 = vmatprep.subr.bf16.mxu0 0
  %444 = vmatpush1.bf16.msra.mxu0 %v436
  %445 = vmatprep.subr.bf16.mxu0 0
  %446 = vmatpush1.bf16.msra.mxu0 %v437
  %447 = vmatprep.subr.bf16.mxu0 0
  %448 = vmatpush1.bf16.msra.mxu0 0
  %449 = vmatprep.subr.bf16.mxu0 0
  %450 = vmatpush1.bf16.msra.mxu0 0
  %451 = vmatprep.subr.bf16.mxu0 0
  %452 = vmatpush1.bf16.msra.mxu0 0
  %453 = vmatprep.subr.bf16.mxu0 0
  %454 = vmatpush1.bf16.msra.mxu0 0
  %455 = vmatprep.subr.bf16.mxu0 0
  %456 = vmatpush1.bf16.msra.mxu0 0
  %457 = vmatprep.subr.bf16.mxu0 0
  %458 = vmatpush1.bf16.msra.mxu0 0
  %459 = vmatprep.subr.bf16.mxu0 0
  %460 = vmatpush1.bf16.msra.mxu0 0
  %461 = vmatprep.subr.bf16.mxu0 0
  %462 = vmatpush1.bf16.msra.mxu0 0
  %463 = vmatprep.subr.bf16.mxu0 0
  %464 = vmatpush1.bf16.msra.mxu0 0
  %465 = vmatprep.subr.bf16.mxu0 0
  %466 = vmatpush1.bf16.msra.mxu0 0
  %467 = vmatprep.subr.bf16.mxu0 0
  %468 = vmatpush1.bf16.msra.mxu0 0
  %469 = vmatprep.subr.bf16.mxu0 0
  %470 = vmatpush1.bf16.msra.mxu0 0
  %471 = vmatprep.subr.bf16.mxu0 0
  %472 = vmatpush1.bf16.msra.mxu0 0
  %473 = vmatprep.subr.bf16.mxu0 0
  %474 = vmatpush1.bf16.msra.mxu0 0
  %475 = vmatprep.mubr.bf16.mxu0 0
  %476 = vmatmul.mubr.bf16.gmra.mrb[0].mxu0 %v441
  %v477 = vpop.f32.mrb[0].mxu0
  %v478 = vadd.f32 0.0, %v477
  %v479 = vpop.f32.mrb[0].mxu0
  %v480 = vpop.f32.mrb[0].mxu0
  %v481 = vpop.f32.mrb[0].mxu0
  %482 = vdwg.mxu0
  %v483 = vadd.f32 %v420, %v478
  %v484 = vxor.u32 %v483, 2147483648
  %v485 = vmul.f32 %v484, 1.442695
  %v486 = vpow.pop %v485
  %v487 = vadd.f32 %v486, 1.0
  %v488 = vrcp.pop %v487
  %v489 = vmul.f32 1.0, %v488
  %v490 = vtanh.pop %v483
  %492 = vrot.lane.b32.xlu0 %v422, 32
  %v493 = vpop.permute.xlu0 %492
  %v495 = vmul.f32 %v489, %v493
  %497 = vrot.lane.b32.xlu0 %v490, 64
  %v498 = vpop.permute.xlu0 %497
  %v500 = vmul.f32 %v489, %v498
  %502 = vrot.lane.b32.xlu0 %v500, 32
  %v503 = vpop.permute.xlu0 %502
  %v505 = vadd.f32 %v495, %v503
  %v506 = vtanh.pop %v505
  %508 = vrot.lane.b32.xlu0 %v506, 64
  %v509 = vpop.permute.xlu0 %508
  %v511 = vmul.f32 %v489, %v509
  %513 = vrot.lane.b32.xlu0 %v511, 32
  %v514 = vpop.permute.xlu0 %513
  %516 = vst.msk [vmem:[#allocation2] sm:$0xff] %vm160, %v514
  %518 = vrot.lane.b32.xlu0 %v505, 96
  %v519 = vpop.permute.xlu0 %518
  %521 = vst.msk [vmem:[#allocation3] sm:$0xff] %vm160, %v519
  %v522 = vld [vmem:[%s243] sm:$0xff]
  %v523 = vld [vmem:[%s245] sm:$0xff]
  %v524 = vpack.c.bf16 %v522, %v522
  %v525 = vld [vmem:[%s248] sm:$0xf]
  %v526 = vld [vmem:[%s248 + $0x4] sm:$0xf]
  %v527 = vld [vmem:[%s248 + $0x8] sm:$0xf]
  %v528 = vld [vmem:[%s248 + $0xc] sm:$0xf]
  %v533 = vunpack.c.l.b16 %v525
  %v534 = vunpack.c.l.b16 %v526
  %v535 = vunpack.c.l.b16 %v527
  %v536 = vunpack.c.l.b16 %v528
  %v537 = vpack.c.b16 %v534, %v533
  %v538 = vpack.c.b16 %v536, %v535
  %v542 = vsel %vm160, %v524, 0
  %544 = vmatprep.subr.bf16.mxu0 0
  %545 = vmatpush1.bf16.msra.mxu0 %v537
  %546 = vmatprep.subr.bf16.mxu0 0
  %547 = vmatpush1.bf16.msra.mxu0 %v538
  %548 = vmatprep.subr.bf16.mxu0 0
  %549 = vmatpush1.bf16.msra.mxu0 0
  %550 = vmatprep.subr.bf16.mxu0 0
  %551 = vmatpush1.bf16.msra.mxu0 0
  %552 = vmatprep.subr.bf16.mxu0 0
  %553 = vmatpush1.bf16.msra.mxu0 0
  %554 = vmatprep.subr.bf16.mxu0 0
  %555 = vmatpush1.bf16.msra.mxu0 0
  %556 = vmatprep.subr.bf16.mxu0 0
  %557 = vmatpush1.bf16.msra.mxu0 0
  %558 = vmatprep.subr.bf16.mxu0 0
  %559 = vmatpush1.bf16.msra.mxu0 0
  %560 = vmatprep.subr.bf16.mxu0 0
  %561 = vmatpush1.bf16.msra.mxu0 0
  %562 = vmatprep.subr.bf16.mxu0 0
  %563 = vmatpush1.bf16.msra.mxu0 0
  %564 = vmatprep.subr.bf16.mxu0 0
  %565 = vmatpush1.bf16.msra.mxu0 0
  %566 = vmatprep.subr.bf16.mxu0 0
  %567 = vmatpush1.bf16.msra.mxu0 0
  %568 = vmatprep.subr.bf16.mxu0 0
  %569 = vmatpush1.bf16.msra.mxu0 0
  %570 = vmatprep.subr.bf16.mxu0 0
  %571 = vmatpush1.bf16.msra.mxu0 0
  %572 = vmatprep.subr.bf16.mxu0 0
  %573 = vmatpush1.bf16.msra.mxu0 0
  %574 = vmatprep.subr.bf16.mxu0 0
  %575 = vmatpush1.bf16.msra.mxu0 0
  %576 = vmatprep.mubr.bf16.mxu0 0
  %577 = vmatmul.mubr.bf16.gmra.mrb[0].mxu0 %v542
  %v578 = vpop.f32.mrb[0].mxu0
  %v579 = vadd.f32 0.0, %v578
  %v580 = vpop.f32.mrb[0].mxu0
  %v581 = vpop.f32.mrb[0].mxu0
  %v582 = vpop.f32.mrb[0].mxu0
  %583 = vdwg.mxu0
  %v584 = vpack.c.bf16 %v511, %v511
  %v585 = vld [vmem:[%s2] sm:$0xf]
  %v586 = vld [vmem:[%s2 + $0x4] sm:$0xf]
  %v587 = vld [vmem:[%s2 + $0x8] sm:$0xf]
  %v588 = vld [vmem:[%s2 + $0xc] sm:$0xf]
  %590 = vrot.lane.b32.xlu0 %v584, 32
  %v591 = vpop.permute.xlu0 %590
  %v596 = vunpack.c.l.b16 %v585
  %v597 = vunpack.c.l.b16 %v586
  %v598 = vunpack.c.l.b16 %v587
  %v599 = vunpack.c.l.b16 %v588
  %v600 = vpack.c.b16 %v597, %v596
  %v601 = vpack.c.b16 %v599, %v598
  %v605 = vsel %vm160, %v591, 0
  %607 = vmatprep.subr.bf16.mxu0 0
  %608 = vmatpush1.bf16.msra.mxu0 %v600
  %609 = vmatprep.subr.bf16.mxu0 0
  %610 = vmatpush1.bf16.msra.mxu0 %v601
  %611 = vmatprep.subr.bf16.mxu0 0
  %612 = vmatpush1.bf16.msra.mxu0 0
  %613 = vmatprep.subr.bf16.mxu0 0
  %614 = vmatpush1.bf16.msra.mxu0 0
  %615 = vmatprep.subr.bf16.mxu0 0
  %616 = vmatpush1.bf16.msra.mxu0 0
  %617 = vmatprep.subr.bf16.mxu0 0
  %618 = vmatpush1.bf16.msra.mxu0 0
  %619 = vmatprep.subr.bf16.mxu0 0
  %620 = vmatpush1.bf16.msra.mxu0 0
  %621 = vmatprep.subr.bf16.mxu0 0
  %622 = vmatpush1.bf16.msra.mxu0 0
  %623 = vmatprep.subr.bf16.mxu0 0
  %624 = vmatpush1.bf16.msra.mxu0 0
  %625 = vmatprep.subr.bf16.mxu0 0
  %626 = vmatpush1.bf16.msra.mxu0 0
  %627 = vmatprep.subr.bf16.mxu0 0
  %628 = vmatpush1.bf16.msra.mxu0 0
  %629 = vmatprep.subr.bf16.mxu0 0
  %630 = vmatpush1.bf16.msra.mxu0 0
  %631 = vmatprep.subr.bf16.mxu0 0
  %632 = vmatpush1.bf16.msra.mxu0 0
  %633 = vmatprep.subr.bf16.mxu0 0
  %634 = vmatpush1.bf16.msra.mxu0 0
  %635 = vmatprep.subr.bf16.mxu0 0
  %636 = vmatpush1.bf16.msra.mxu0 0
  %637 = vmatprep.subr.bf16.mxu0 0
  %638 = vmatpush1.bf16.msra.mxu0 0
  %639 = vmatprep.mubr.bf16.mxu0 0
  %640 = vmatmul.mubr.bf16.gmra.mrb[0].mxu0 %v605
  %v641 = vpop.f32.mrb[0].mxu0
  %v642 = vadd.f32 %v579, %v641
  %v643 = vpop.f32.mrb[0].mxu0
  %v644 = vpop.f32.mrb[0].mxu0
  %v645 = vpop.f32.mrb[0].mxu0
  %646 = vdwg.mxu0
  %v647 = vld [vmem:[%s371] sm:$0x1]
  %v649 = vlaneseq
  %v650 = vshrl.u32 %v649, 7
  %v651 = vsub.s32 0, %v650
  %v652 = vrot.slane %v647, %v651
  %v654 = vadd.f32 %v642, %v652
  %v655 = vxor.u32 %v654, 2147483648
  %v656 = vmul.f32 %v655, 1.442695
  %v657 = vpow.pop %v656
  %v658 = vadd.f32 %v657, 1.0
  %v659 = vrcp.pop %v658
  %v660 = vmul.f32 1.0, %v659
  %v661 = vtanh.pop %v654
  %663 = vrot.lane.b32.xlu0 %v523, 32
  %v664 = vpop.permute.xlu0 %663
  %v666 = vmul.f32 %v660, %v664
  %668 = vrot.lane.b32.xlu0 %v661, 64
  %v669 = vpop.permute.xlu0 %668
  %v671 = vmul.f32 %v660, %v669
  %673 = vrot.lane.b32.xlu0 %v671, 32
  %v674 = vpop.permute.xlu0 %673
  %v676 = vadd.f32 %v666, %v674
  %v677 = vtanh.pop %v676
  %679 = vrot.lane.b32.xlu0 %v677, 64
  %v680 = vpop.permute.xlu0 %679
  %v682 = vmul.f32 %v660, %v680
  %684 = vrot.lane.b32.xlu0 %v682, 32
  %v685 = vpop.permute.xlu0 %684
  %687 = vst.msk [vmem:[%s243] sm:$0xff] %vm160, %v685
  %689 = vrot.lane.b32.xlu0 %v676, 96
  %v690 = vpop.permute.xlu0 %689
  %692 = vst.msk [vmem:[%s245] sm:$0xff] %vm160, %v690
  %s693 = scalar_lea.vmem %s5, 8
  %694 = vst.msk [vmem:[%s693] sm:$0xff] %vm160, %v685
  %s695 = scalar_lea.vmem [#allocation4], 16
  %v696 = vld [vmem:[%s695] sm:$0xff]
  %v697 = vld [vmem:[#allocation2] sm:$0xff]
  %v698 = vld [vmem:[#allocation3] sm:$0xff]
  %v699 = vpack.c.bf16 %v697, %v697
  %v700 = vld [vmem:[%s3] sm:$0xf]
  %v701 = vld [vmem:[%s3 + $0x4] sm:$0xf]
  %v702 = vld [vmem:[%s3 + $0x8] sm:$0xf]
  %v703 = vld [vmem:[%s3 + $0xc] sm:$0xf]
  %v708 = vunpack.c.l.b16 %v700
  %v709 = vunpack.c.l.b16 %v701
  %v710 = vunpack.c.l.b16 %v702
  %v711 = vunpack.c.l.b16 %v703
  %v712 = vpack.c.b16 %v709, %v708
  %v713 = vpack.c.b16 %v711, %v710
  %v717 = vsel %vm160, %v699, 0
  %719 = vmatprep.subr.bf16.mxu0 0
  %720 = vmatpush1.bf16.msra.mxu0 %v712
  %721 = vmatprep.subr.bf16.mxu0 0
  %722 = vmatpush1.bf16.msra.mxu0 %v713
  %723 = vmatprep.subr.bf16.mxu0 0
  %724 = vmatpush1.bf16.msra.mxu0 0
  %725 = vmatprep.subr.bf16.mxu0 0
  %726 = vmatpush1.bf16.msra.mxu0 0
  %727 = vmatprep.subr.bf16.mxu0 0
  %728 = vmatpush1.bf16.msra.mxu0 0
  %729 = vmatprep.subr.bf16.mxu0 0
  %730 = vmatpush1.bf16.msra.mxu0 0
  %731 = vmatprep.subr.bf16.mxu0 0
  %732 = vmatpush1.bf16.msra.mxu0 0
  %733 = vmatprep.subr.bf16.mxu0 0
  %734 = vmatpush1.bf16.msra.mxu0 0
  %735 = vmatprep.subr.bf16.mxu0 0
  %736 = vmatpush1.bf16.msra.mxu0 0
  %737 = vmatprep.subr.bf16.mxu0 0
  %738 = vmatpush1.bf16.msra.mxu0 0
  %739 = vmatprep.subr.bf16.mxu0 0
  %740 = vmatpush1.bf16.msra.mxu0 0
  %741 = vmatprep.subr.bf16.mxu0 0
  %742 = vmatpush1.bf16.msra.mxu0 0
  %743 = vmatprep.subr.bf16.mxu0 0
  %744 = vmatpush1.bf16.msra.mxu0 0
  %745 = vmatprep.subr.bf16.mxu0 0
  %746 = vmatpush1.bf16.msra.mxu0 0
  %747 = vmatprep.subr.bf16.mxu0 0
  %748 = vmatpush1.bf16.msra.mxu0 0
  %749 = vmatprep.subr.bf16.mxu0 0
  %750 = vmatpush1.bf16.msra.mxu0 0
  %751 = vmatprep.mubr.bf16.mxu0 0
  %752 = vmatmul.mubr.bf16.gmra.mrb[0].mxu0 %v717
  %v753 = vpop.f32.mrb[0].mxu0
  %v754 = vadd.f32 0.0, %v753
  %v755 = vpop.f32.mrb[0].mxu0
  %v756 = vpop.f32.mrb[0].mxu0
  %v757 = vpop.f32.mrb[0].mxu0
  %758 = vdwg.mxu0
  %v759 = vadd.f32 %v696, %v754
  %v760 = vxor.u32 %v759, 2147483648
  %v761 = vmul.f32 %v760, 1.442695
  %v762 = vpow.pop %v761
  %v763 = vadd.f32 %v762, 1.0
  %v764 = vrcp.pop %v763
  %v765 = vmul.f32 1.0, %v764
  %v766 = vtanh.pop %v759
  %768 = vrot.lane.b32.xlu0 %v698, 32
  %v769 = vpop.permute.xlu0 %768
  %v771 = vmul.f32 %v765, %v769
  %773 = vrot.lane.b32.xlu0 %v766, 64
  %v774 = vpop.permute.xlu0 %773
  %v776 = vmul.f32 %v765, %v774
  %778 = vrot.lane.b32.xlu0 %v776, 32
  %v779 = vpop.permute.xlu0 %778
  %v781 = vadd.f32 %v771, %v779
  %v782 = vtanh.pop %v781
  %784 = vrot.lane.b32.xlu0 %v782, 64
  %v785 = vpop.permute.xlu0 %784
  %v787 = vmul.f32 %v765, %v785
  %789 = vrot.lane.b32.xlu0 %v787, 32
  %v790 = vpop.permute.xlu0 %789
  %792 = vst.msk [vmem:[#allocation2] sm:$0xff] %vm160, %v790
  %794 = vrot.lane.b32.xlu0 %v781, 96
  %v795 = vpop.permute.xlu0 %794
  %797 = vst.msk [vmem:[#allocation3] sm:$0xff] %vm160, %v795
  %v798 = vld [vmem:[%s243] sm:$0xff]
  %v799 = vld [vmem:[%s245] sm:$0xff]
  %v800 = vpack.c.bf16 %v798, %v798
  %v801 = vld [vmem:[%s248] sm:$0xf]
  %v802 = vld [vmem:[%s248 + $0x4] sm:$0xf]
  %v803 = vld [vmem:[%s248 + $0x8] sm:$0xf]
  %v804 = vld [vmem:[%s248 + $0xc] sm:$0xf]
  %v809 = vunpack.c.l.b16 %v801
  %v810 = vunpack.c.l.b16 %v802
  %v811 = vunpack.c.l.b16 %v803
  %v812 = vunpack.c.l.b16 %v804
  %v813 = vpack.c.b16 %v810, %v809
  %v814 = vpack.c.b16 %v812, %v811
  %v818 = vsel %vm160, %v800, 0
  %820 = vmatprep.subr.bf16.mxu0 0
  %821 = vmatpush1.bf16.msra.mxu0 %v813
  %822 = vmatprep.subr.bf16.mxu0 0
  %823 = vmatpush1.bf16.msra.mxu0 %v814
  %824 = vmatprep.subr.bf16.mxu0 0
  %825 = vmatpush1.bf16.msra.mxu0 0
  %826 = vmatprep.subr.bf16.mxu0 0
  %827 = vmatpush1.bf16.msra.mxu0 0
  %828 = vmatprep.subr.bf16.mxu0 0
  %829 = vmatpush1.bf16.msra.mxu0 0
  %830 = vmatprep.subr.bf16.mxu0 0
  %831 = vmatpush1.bf16.msra.mxu0 0
  %832 = vmatprep.subr.bf16.mxu0 0
  %833 = vmatpush1.bf16.msra.mxu0 0
  %834 = vmatprep.subr.bf16.mxu0 0
  %835 = vmatpush1.bf16.msra.mxu0 0
  %836 = vmatprep.subr.bf16.mxu0 0
  %837 = vmatpush1.bf16.msra.mxu0 0
  %838 = vmatprep.subr.bf16.mxu0 0
  %839 = vmatpush1.bf16.msra.mxu0 0
  %840 = vmatprep.subr.bf16.mxu0 0
  %841 = vmatpush1.bf16.msra.mxu0 0
  %842 = vmatprep.subr.bf16.mxu0 0
  %843 = vmatpush1.bf16.msra.mxu0 0
  %844 = vmatprep.subr.bf16.mxu0 0
  %845 = vmatpush1.bf16.msra.mxu0 0
  %846 = vmatprep.subr.bf16.mxu0 0
  %847 = vmatpush1.bf16.msra.mxu0 0
  %848 = vmatprep.subr.bf16.mxu0 0
  %849 = vmatpush1.bf16.msra.mxu0 0
  %850 = vmatprep.subr.bf16.mxu0 0
  %851 = vmatpush1.bf16.msra.mxu0 0
  %852 = vmatprep.mubr.bf16.mxu0 0
  %853 = vmatmul.mubr.bf16.gmra.mrb[0].mxu0 %v818
  %v854 = vpop.f32.mrb[0].mxu0
  %v855 = vadd.f32 0.0, %v854
  %v856 = vpop.f32.mrb[0].mxu0
  %v857 = vpop.f32.mrb[0].mxu0
  %v858 = vpop.f32.mrb[0].mxu0
  %859 = vdwg.mxu0
  %v860 = vpack.c.bf16 %v787, %v787
  %v861 = vld [vmem:[%s2] sm:$0xf]
  %v862 = vld [vmem:[%s2 + $0x4] sm:$0xf]
  %v863 = vld [vmem:[%s2 + $0x8] sm:$0xf]
  %v864 = vld [vmem:[%s2 + $0xc] sm:$0xf]
  %866 = vrot.lane.b32.xlu0 %v860, 32
  %v867 = vpop.permute.xlu0 %866
  %v872 = vunpack.c.l.b16 %v861
  %v873 = vunpack.c.l.b16 %v862
  %v874 = vunpack.c.l.b16 %v863
  %v875 = vunpack.c.l.b16 %v864
  %v876 = vpack.c.b16 %v873, %v872
  %v877 = vpack.c.b16 %v875, %v874
  %v881 = vsel %vm160, %v867, 0
  %883 = vmatprep.subr.bf16.mxu0 0
  %884 = vmatpush1.bf16.msra.mxu0 %v876
  %885 = vmatprep.subr.bf16.mxu0 0
  %886 = vmatpush1.bf16.msra.mxu0 %v877
  %887 = vmatprep.subr.bf16.mxu0 0
  %888 = vmatpush1.bf16.msra.mxu0 0
  %889 = vmatprep.subr.bf16.mxu0 0
  %890 = vmatpush1.bf16.msra.mxu0 0
  %891 = vmatprep.subr.bf16.mxu0 0
  %892 = vmatpush1.bf16.msra.mxu0 0
  %893 = vmatprep.subr.bf16.mxu0 0
  %894 = vmatpush1.bf16.msra.mxu0 0
  %895 = vmatprep.subr.bf16.mxu0 0
  %896 = vmatpush1.bf16.msra.mxu0 0
  %897 = vmatprep.subr.bf16.mxu0 0
  %898 = vmatpush1.bf16.msra.mxu0 0
  %899 = vmatprep.subr.bf16.mxu0 0
  %900 = vmatpush1.bf16.msra.mxu0 0
  %901 = vmatprep.subr.bf16.mxu0 0
  %902 = vmatpush1.bf16.msra.mxu0 0
  %903 = vmatprep.subr.bf16.mxu0 0
  %904 = vmatpush1.bf16.msra.mxu0 0
  %905 = vmatprep.subr.bf16.mxu0 0
  %906 = vmatpush1.bf16.msra.mxu0 0
  %907 = vmatprep.subr.bf16.mxu0 0
  %908 = vmatpush1.bf16.msra.mxu0 0
  %909 = vmatprep.subr.bf16.mxu0 0
  %910 = vmatpush1.bf16.msra.mxu0 0
  %911 = vmatprep.subr.bf16.mxu0 0
  %912 = vmatpush1.bf16.msra.mxu0 0
  %913 = vmatprep.subr.bf16.mxu0 0
  %914 = vmatpush1.bf16.msra.mxu0 0
  %915 = vmatprep.mubr.bf16.mxu0 0
  %916 = vmatmul.mubr.bf16.gmra.mrb[0].mxu0 %v881
  %v917 = vpop.f32.mrb[0].mxu0
  %v918 = vadd.f32 %v855, %v917
  %v919 = vpop.f32.mrb[0].mxu0
  %v920 = vpop.f32.mrb[0].mxu0
  %v921 = vpop.f32.mrb[0].mxu0
  %922 = vdwg.mxu0
  %v923 = vld [vmem:[%s371] sm:$0x1]
  %v925 = vlaneseq
  %v926 = vshrl.u32 %v925, 7
  %v927 = vsub.s32 0, %v926
  %v928 = vrot.slane %v923, %v927
  %v930 = vadd.f32 %v918, %v928
  %v931 = vxor.u32 %v930, 2147483648
  %v932 = vmul.f32 %v931, 1.442695
  %v933 = vpow.pop %v932
  %v934 = vadd.f32 %v933, 1.0
  %v935 = vrcp.pop %v934
  %v936 = vmul.f32 1.0, %v935
  %v937 = vtanh.pop %v930
  %939 = vrot.lane.b32.xlu0 %v799, 32
  %v940 = vpop.permute.xlu0 %939
  %v942 = vmul.f32 %v936, %v940
  %944 = vrot.lane.b32.xlu0 %v937, 64
  %v945 = vpop.permute.xlu0 %944
  %v947 = vmul.f32 %v936, %v945
  %949 = vrot.lane.b32.xlu0 %v947, 32
  %v950 = vpop.permute.xlu0 %949
  %v952 = vadd.f32 %v942, %v950
  %v953 = vtanh.pop %v952
  %955 = vrot.lane.b32.xlu0 %v953, 64
  %v956 = vpop.permute.xlu0 %955
  %v958 = vmul.f32 %v936, %v956
  %960 = vrot.lane.b32.xlu0 %v958, 32
  %v961 = vpop.permute.xlu0 %960
  %963 = vst.msk [vmem:[%s243] sm:$0xff] %vm160, %v961
  %965 = vrot.lane.b32.xlu0 %v952, 96
  %v966 = vpop.permute.xlu0 %965
  %968 = vst.msk [vmem:[%s245] sm:$0xff] %vm160, %v966
  %s969 = scalar_lea.vmem %s5, 16
  %970 = vst.msk [vmem:[%s969] sm:$0xff] %vm160, %v961
  %s971 = scalar_lea.vmem [#allocation4], 24
  %v972 = vld [vmem:[%s971] sm:$0xff]
  %v973 = vld [vmem:[#allocation2] sm:$0xff]
  %v974 = vld [vmem:[#allocation3] sm:$0xff]
  %v975 = vpack.c.bf16 %v973, %v973
  %v976 = vld [vmem:[%s3] sm:$0xf]
  %v977 = vld [vmem:[%s3 + $0x4] sm:$0xf]
  %v978 = vld [vmem:[%s3 + $0x8] sm:$0xf]
  %v979 = vld [vmem:[%s3 + $0xc] sm:$0xf]
  %v984 = vunpack.c.l.b16 %v976
  %v985 = vunpack.c.l.b16 %v977
  %v986 = vunpack.c.l.b16 %v978
  %v987 = vunpack.c.l.b16 %v979
  %v988 = vpack.c.b16 %v985, %v984
  %v989 = vpack.c.b16 %v987, %v986
  %v993 = vsel %vm160, %v975, 0
  %995 = vmatprep.subr.bf16.mxu0 0
  %996 = vmatpush1.bf16.msra.mxu0 %v988
  %997 = vmatprep.subr.bf16.mxu0 0
  %998 = vmatpush1.bf16.msra.mxu0 %v989
  %999 = vmatprep.subr.bf16.mxu0 0
  %1000 = vmatpush1.bf16.msra.mxu0 0
  %1001 = vmatprep.subr.bf16.mxu0 0
  %1002 = vmatpush1.bf16.msra.mxu0 0
  %1003 = vmatprep.subr.bf16.mxu0 0
  %1004 = vmatpush1.bf16.msra.mxu0 0
  %1005 = vmatprep.subr.bf16.mxu0 0
  %1006 = vmatpush1.bf16.msra.mxu0 0
  %1007 = vmatprep.subr.bf16.mxu0 0
  %1008 = vmatpush1.bf16.msra.mxu0 0
  %1009 = vmatprep.subr.bf16.mxu0 0
  %1010 = vmatpush1.bf16.msra.mxu0 0
  %1011 = vmatprep.subr.bf16.mxu0 0
  %1012 = vmatpush1.bf16.msra.mxu0 0
  %1013 = vmatprep.subr.bf16.mxu0 0
  %1014 = vmatpush1.bf16.msra.mxu0 0
  %1015 = vmatprep.subr.bf16.mxu0 0
  %1016 = vmatpush1.bf16.msra.mxu0 0
  %1017 = vmatprep.subr.bf16.mxu0 0
  %1018 = vmatpush1.bf16.msra.mxu0 0
  %1019 = vmatprep.subr.bf16.mxu0 0
  %1020 = vmatpush1.bf16.msra.mxu0 0
  %1021 = vmatprep.subr.bf16.mxu0 0
  %1022 = vmatpush1.bf16.msra.mxu0 0
  %1023 = vmatprep.subr.bf16.mxu0 0
  %1024 = vmatpush1.bf16.msra.mxu0 0
  %1025 = vmatprep.subr.bf16.mxu0 0
  %1026 = vmatpush1.bf16.msra.mxu0 0
  %1027 = vmatprep.mubr.bf16.mxu0 0
  %1028 = vmatmul.mubr.bf16.gmra.mrb[0].mxu0 %v993
  %v1029 = vpop.f32.mrb[0].mxu0
  %v1030 = vadd.f32 0.0, %v1029
  %v1031 = vpop.f32.mrb[0].mxu0
  %v1032 = vpop.f32.mrb[0].mxu0
  %v1033 = vpop.f32.mrb[0].mxu0
  %1034 = vdwg.mxu0
  %v1035 = vadd.f32 %v972, %v1030
  %v1036 = vxor.u32 %v1035, 2147483648
  %v1037 = vmul.f32 %v1036, 1.442695
  %v1038 = vpow.pop %v1037
  %v1039 = vadd.f32 %v1038, 1.0
  %v1040 = vrcp.pop %v1039
  %v1041 = vmul.f32 1.0, %v1040
  %v1042 = vtanh.pop %v1035
  %1044 = vrot.lane.b32.xlu0 %v974, 32
  %v1045 = vpop.permute.xlu0 %1044
  %v1047 = vmul.f32 %v1041, %v1045
  %1049 = vrot.lane.b32.xlu0 %v1042, 64
  %v1050 = vpop.permute.xlu0 %1049
  %v1052 = vmul.f32 %v1041, %v1050
  %1054 = vrot.lane.b32.xlu0 %v1052, 32
  %v1055 = vpop.permute.xlu0 %1054
  %v1057 = vadd.f32 %v1047, %v1055
  %v1058 = vtanh.pop %v1057
  %1060 = vrot.lane.b32.xlu0 %v1058, 64
  %v1061 = vpop.permute.xlu0 %1060
  %v1063 = vmul.f32 %v1041, %v1061
  %1065 = vrot.lane.b32.xlu0 %v1063, 32
  %v1066 = vpop.permute.xlu0 %1065
  %1068 = vst.msk [vmem:[#allocation2] sm:$0xff] %vm160, %v1066
  %1070 = vrot.lane.b32.xlu0 %v1057, 96
  %v1071 = vpop.permute.xlu0 %1070
  %1073 = vst.msk [vmem:[#allocation3] sm:$0xff] %vm160, %v1071
  %v1074 = vld [vmem:[%s243] sm:$0xff]
  %v1075 = vld [vmem:[%s245] sm:$0xff]
  %v1076 = vpack.c.bf16 %v1074, %v1074
  %v1077 = vld [vmem:[%s248] sm:$0xf]
  %v1078 = vld [vmem:[%s248 + $0x4] sm:$0xf]
  %v1079 = vld [vmem:[%s248 + $0x8] sm:$0xf]
  %v1080 = vld [vmem:[%s248 + $0xc] sm:$0xf]
  %v1085 = vunpack.c.l.b16 %v1077
  %v1086 = vunpack.c.l.b16 %v1078
  %v1087 = vunpack.c.l.b16 %v1079
  %v1088 = vunpack.c.l.b16 %v1080
  %v1089 = vpack.c.b16 %v1086, %v1085
  %v1090 = vpack.c.b16 %v1088, %v1087
  %v1094 = vsel %vm160, %v1076, 0
  %1096 = vmatprep.subr.bf16.mxu0 0
  %1097 = vmatpush1.bf16.msra.mxu0 %v1089
  %1098 = vmatprep.subr.bf16.mxu0 0
  %1099 = vmatpush1.bf16.msra.mxu0 %v1090
  %1100 = vmatprep.subr.bf16.mxu0 0
  %1101 = vmatpush1.bf16.msra.mxu0 0
  %1102 = vmatprep.subr.bf16.mxu0 0
  %1103 = vmatpush1.bf16.msra.mxu0 0
  %1104 = vmatprep.subr.bf16.mxu0 0
  %1105 = vmatpush1.bf16.msra.mxu0 0
  %1106 = vmatprep.subr.bf16.mxu0 0
  %1107 = vmatpush1.bf16.msra.mxu0 0
  %1108 = vmatprep.subr.bf16.mxu0 0
  %1109 = vmatpush1.bf16.msra.mxu0 0
  %1110 = vmatprep.subr.bf16.mxu0 0
  %1111 = vmatpush1.bf16.msra.mxu0 0
  %1112 = vmatprep.subr.bf16.mxu0 0
  %1113 = vmatpush1.bf16.msra.mxu0 0
  %1114 = vmatprep.subr.bf16.mxu0 0
  %1115 = vmatpush1.bf16.msra.mxu0 0
  %1116 = vmatprep.subr.bf16.mxu0 0
  %1117 = vmatpush1.bf16.msra.mxu0 0
  %1118 = vmatprep.subr.bf16.mxu0 0
  %1119 = vmatpush1.bf16.msra.mxu0 0
  %1120 = vmatprep.subr.bf16.mxu0 0
  %1121 = vmatpush1.bf16.msra.mxu0 0
  %1122 = vmatprep.subr.bf16.mxu0 0
  %1123 = vmatpush1.bf16.msra.mxu0 0
  %1124 = vmatprep.subr.bf16.mxu0 0
  %1125 = vmatpush1.bf16.msra.mxu0 0
  %1126 = vmatprep.subr.bf16.mxu0 0
  %1127 = vmatpush1.bf16.msra.mxu0 0
  %1128 = vmatprep.mubr.bf16.mxu0 0
  %1129 = vmatmul.mubr.bf16.gmra.mrb[0].mxu0 %v1094
  %v1130 = vpop.f32.mrb[0].mxu0
  %v1131 = vadd.f32 0.0, %v1130
  %v1132 = vpop.f32.mrb[0].mxu0
  %v1133 = vpop.f32.mrb[0].mxu0
  %v1134 = vpop.f32.mrb[0].mxu0
  %1135 = vdwg.mxu0
  %v1136 = vpack.c.bf16 %v1063, %v1063
  %v1137 = vld [vmem:[%s2] sm:$0xf]
  %v1138 = vld [vmem:[%s2 + $0x4] sm:$0xf]
  %v1139 = vld [vmem:[%s2 + $0x8] sm:$0xf]
  %v1140 = vld [vmem:[%s2 + $0xc] sm:$0xf]
  %1142 = vrot.lane.b32.xlu0 %v1136, 32
  %v1143 = vpop.permute.xlu0 %1142
  %v1148 = vunpack.c.l.b16 %v1137
  %v1149 = vunpack.c.l.b16 %v1138
  %v1150 = vunpack.c.l.b16 %v1139
  %v1151 = vunpack.c.l.b16 %v1140
  %v1152 = vpack.c.b16 %v1149, %v1148
  %v1153 = vpack.c.b16 %v1151, %v1150
  %v1157 = vsel %vm160, %v1143, 0
  %1159 = vmatprep.subr.bf16.mxu0 0
  %1160 = vmatpush1.bf16.msra.mxu0 %v1152
  %1161 = vmatprep.subr.bf16.mxu0 0
  %1162 = vmatpush1.bf16.msra.mxu0 %v1153
  %1163 = vmatprep.subr.bf16.mxu0 0
  %1164 = vmatpush1.bf16.msra.mxu0 0
  %1165 = vmatprep.subr.bf16.mxu0 0
  %1166 = vmatpush1.bf16.msra.mxu0 0
  %1167 = vmatprep.subr.bf16.mxu0 0
  %1168 = vmatpush1.bf16.msra.mxu0 0
  %1169 = vmatprep.subr.bf16.mxu0 0
  %1170 = vmatpush1.bf16.msra.mxu0 0
  %1171 = vmatprep.subr.bf16.mxu0 0
  %1172 = vmatpush1.bf16.msra.mxu0 0
  %1173 = vmatprep.subr.bf16.mxu0 0
  %1174 = vmatpush1.bf16.msra.mxu0 0
  %1175 = vmatprep.subr.bf16.mxu0 0
  %1176 = vmatpush1.bf16.msra.mxu0 0
  %1177 = vmatprep.subr.bf16.mxu0 0
  %1178 = vmatpush1.bf16.msra.mxu0 0
  %1179 = vmatprep.subr.bf16.mxu0 0
  %1180 = vmatpush1.bf16.msra.mxu0 0
  %1181 = vmatprep.subr.bf16.mxu0 0
  %1182 = vmatpush1.bf16.msra.mxu0 0
  %1183 = vmatprep.subr.bf16.mxu0 0
  %1184 = vmatpush1.bf16.msra.mxu0 0
  %1185 = vmatprep.subr.bf16.mxu0 0
  %1186 = vmatpush1.bf16.msra.mxu0 0
  %1187 = vmatprep.subr.bf16.mxu0 0
  %1188 = vmatpush1.bf16.msra.mxu0 0
  %1189 = vmatprep.subr.bf16.mxu0 0
  %1190 = vmatpush1.bf16.msra.mxu0 0
  %1191 = vmatprep.mubr.bf16.mxu0 0
  %1192 = vmatmul.mubr.bf16.gmra.mrb[0].mxu0 %v1157
  %v1193 = vpop.f32.mrb[0].mxu0
  %v1194 = vadd.f32 %v1131, %v1193
  %v1195 = vpop.f32.mrb[0].mxu0
  %v1196 = vpop.f32.mrb[0].mxu0
  %v1197 = vpop.f32.mrb[0].mxu0
  %1198 = vdwg.mxu0
  %v1199 = vld [vmem:[%s371] sm:$0x1]
  %v1201 = vlaneseq
  %v1202 = vshrl.u32 %v1201, 7
  %v1203 = vsub.s32 0, %v1202
  %v1204 = vrot.slane %v1199, %v1203
  %v1206 = vadd.f32 %v1194, %v1204
  %v1207 = vxor.u32 %v1206, 2147483648
  %v1208 = vmul.f32 %v1207, 1.442695
  %v1209 = vpow.pop %v1208
  %v1210 = vadd.f32 %v1209, 1.0
  %v1211 = vrcp.pop %v1210
  %v1212 = vmul.f32 1.0, %v1211
  %v1213 = vtanh.pop %v1206
  %1215 = vrot.lane.b32.xlu0 %v1075, 32
  %v1216 = vpop.permute.xlu0 %1215
  %v1218 = vmul.f32 %v1212, %v1216
  %1220 = vrot.lane.b32.xlu0 %v1213, 64
  %v1221 = vpop.permute.xlu0 %1220
  %v1223 = vmul.f32 %v1212, %v1221
  %1225 = vrot.lane.b32.xlu0 %v1223, 32
  %v1226 = vpop.permute.xlu0 %1225
  %v1228 = vadd.f32 %v1218, %v1226
  %v1229 = vtanh.pop %v1228
  %1231 = vrot.lane.b32.xlu0 %v1229, 64
  %v1232 = vpop.permute.xlu0 %1231
  %v1234 = vmul.f32 %v1212, %v1232
  %1236 = vrot.lane.b32.xlu0 %v1234, 32
  %v1237 = vpop.permute.xlu0 %1236
  %1239 = vst.msk [vmem:[%s243] sm:$0xff] %vm160, %v1237
  %1241 = vrot.lane.b32.xlu0 %v1228, 96
  %v1242 = vpop.permute.xlu0 %1241
  %1244 = vst.msk [vmem:[%s245] sm:$0xff] %vm160, %v1242
  %s1245 = scalar_lea.vmem %s5, 24
  %1246 = vst.msk [vmem:[%s1245] sm:$0xff] %vm160, %v1237
  %s1247 = scalar_lea.vmem [#allocation4], 32
  %v1248 = vld [vmem:[%s1247] sm:$0xff]
  %v1249 = vld [vmem:[#allocation2] sm:$0xff]
  %v1250 = vld [vmem:[#allocation3] sm:$0xff]
  %v1251 = vpack.c.bf16 %v1249, %v1249
  %v1252 = vld [vmem:[%s3] sm:$0xf]
  %v1253 = vld [vmem:[%s3 + $0x4] sm:$0xf]
  %v1254 = vld [vmem:[%s3 + $0x8] sm:$0xf]
  %v1255 = vld [vmem:[%s3 + $0xc] sm:$0xf]
  %v1260 = vunpack.c.l.b16 %v1252
  %v1261 = vunpack.c.l.b16 %v1253
  %v1262 = vunpack.c.l.b16 %v1254
  %v1263 = vunpack.c.l.b16 %v1255
  %v1264 = vpack.c.b16 %v1261, %v1260
  %v1265 = vpack.c.b16 %v1263, %v1262
  %v1269 = vsel %vm160, %v1251, 0
  %1271 = vmatprep.subr.bf16.mxu0 0
  %1272 = vmatpush1.bf16.msra.mxu0 %v1264
  %1273 = vmatprep.subr.bf16.mxu0 0
  %1274 = vmatpush1.bf16.msra.mxu0 %v1265
  %1275 = vmatprep.subr.bf16.mxu0 0
  %1276 = vmatpush1.bf16.msra.mxu0 0
  %1277 = vmatprep.subr.bf16.mxu0 0
  %1278 = vmatpush1.bf16.msra.mxu0 0
  %1279 = vmatprep.subr.bf16.mxu0 0
  %1280 = vmatpush1.bf16.msra.mxu0 0
  %1281 = vmatprep.subr.bf16.mxu0 0
  %1282 = vmatpush1.bf16.msra.mxu0 0
  %1283 = vmatprep.subr.bf16.mxu0 0
  %1284 = vmatpush1.bf16.msra.mxu0 0
  %1285 = vmatprep.subr.bf16.mxu0 0
  %1286 = vmatpush1.bf16.msra.mxu0 0
  %1287 = vmatprep.subr.bf16.mxu0 0
  %1288 = vmatpush1.bf16.msra.mxu0 0
  %1289 = vmatprep.subr.bf16.mxu0 0
  %1290 = vmatpush1.bf16.msra.mxu0 0
  %1291 = vmatprep.subr.bf16.mxu0 0
  %1292 = vmatpush1.bf16.msra.mxu0 0
  %1293 = vmatprep.subr.bf16.mxu0 0
  %1294 = vmatpush1.bf16.msra.mxu0 0
  %1295 = vmatprep.subr.bf16.mxu0 0
  %1296 = vmatpush1.bf16.msra.mxu0 0
  %1297 = vmatprep.subr.bf16.mxu0 0
  %1298 = vmatpush1.bf16.msra.mxu0 0
  %1299 = vmatprep.subr.bf16.mxu0 0
  %1300 = vmatpush1.bf16.msra.mxu0 0
  %1301 = vmatprep.subr.bf16.mxu0 0
  %1302 = vmatpush1.bf16.msra.mxu0 0
  %1303 = vmatprep.mubr.bf16.mxu0 0
  %1304 = vmatmul.mubr.bf16.gmra.mrb[0].mxu0 %v1269
  %v1305 = vpop.f32.mrb[0].mxu0
  %v1306 = vadd.f32 0.0, %v1305
  %v1307 = vpop.f32.mrb[0].mxu0
  %v1308 = vpop.f32.mrb[0].mxu0
  %v1309 = vpop.f32.mrb[0].mxu0
  %1310 = vdwg.mxu0
  %v1311 = vadd.f32 %v1248, %v1306
  %v1312 = vxor.u32 %v1311, 2147483648
  %v1313 = vmul.f32 %v1312, 1.442695
  %v1314 = vpow.pop %v1313
  %v1315 = vadd.f32 %v1314, 1.0
  %v1316 = vrcp.pop %v1315
  %v1317 = vmul.f32 1.0, %v1316
  %v1318 = vtanh.pop %v1311
  %1320 = vrot.lane.b32.xlu0 %v1250, 32
  %v1321 = vpop.permute.xlu0 %1320
  %v1323 = vmul.f32 %v1317, %v1321
  %1325 = vrot.lane.b32.xlu0 %v1318, 64
  %v1326 = vpop.permute.xlu0 %1325
  %v1328 = vmul.f32 %v1317, %v1326
  %1330 = vrot.lane.b32.xlu0 %v1328, 32
  %v1331 = vpop.permute.xlu0 %1330
  %v1333 = vadd.f32 %v1323, %v1331
  %v1334 = vtanh.pop %v1333
  %1336 = vrot.lane.b32.xlu0 %v1334, 64
  %v1337 = vpop.permute.xlu0 %1336
  %v1339 = vmul.f32 %v1317, %v1337
  %1341 = vrot.lane.b32.xlu0 %v1339, 32
  %v1342 = vpop.permute.xlu0 %1341
  %1344 = vst.msk [vmem:[#allocation2] sm:$0xff] %vm160, %v1342
  %1346 = vrot.lane.b32.xlu0 %v1333, 96
  %v1347 = vpop.permute.xlu0 %1346
  %1349 = vst.msk [vmem:[#allocation3] sm:$0xff] %vm160, %v1347
  %v1350 = vld [vmem:[%s243] sm:$0xff]
  %v1351 = vld [vmem:[%s245] sm:$0xff]
  %v1352 = vpack.c.bf16 %v1350, %v1350
  %v1353 = vld [vmem:[%s248] sm:$0xf]
  %v1354 = vld [vmem:[%s248 + $0x4] sm:$0xf]
  %v1355 = vld [vmem:[%s248 + $0x8] sm:$0xf]
  %v1356 = vld [vmem:[%s248 + $0xc] sm:$0xf]
  %v1361 = vunpack.c.l.b16 %v1353
  %v1362 = vunpack.c.l.b16 %v1354
  %v1363 = vunpack.c.l.b16 %v1355
  %v1364 = vunpack.c.l.b16 %v1356
  %v1365 = vpack.c.b16 %v1362, %v1361
  %v1366 = vpack.c.b16 %v1364, %v1363
  %v1370 = vsel %vm160, %v1352, 0
  %1372 = vmatprep.subr.bf16.mxu0 0
  %1373 = vmatpush1.bf16.msra.mxu0 %v1365
  %1374 = vmatprep.subr.bf16.mxu0 0
  %1375 = vmatpush1.bf16.msra.mxu0 %v1366
  %1376 = vmatprep.subr.bf16.mxu0 0
  %1377 = vmatpush1.bf16.msra.mxu0 0
  %1378 = vmatprep.subr.bf16.mxu0 0
  %1379 = vmatpush1.bf16.msra.mxu0 0
  %1380 = vmatprep.subr.bf16.mxu0 0
  %1381 = vmatpush1.bf16.msra.mxu0 0
  %1382 = vmatprep.subr.bf16.mxu0 0
  %1383 = vmatpush1.bf16.msra.mxu0 0
  %1384 = vmatprep.subr.bf16.mxu0 0
  %1385 = vmatpush1.bf16.msra.mxu0 0
  %1386 = vmatprep.subr.bf16.mxu0 0
  %1387 = vmatpush1.bf16.msra.mxu0 0
  %1388 = vmatprep.subr.bf16.mxu0 0
  %1389 = vmatpush1.bf16.msra.mxu0 0
  %1390 = vmatprep.subr.bf16.mxu0 0
  %1391 = vmatpush1.bf16.msra.mxu0 0
  %1392 = vmatprep.subr.bf16.mxu0 0
  %1393 = vmatpush1.bf16.msra.mxu0 0
  %1394 = vmatprep.subr.bf16.mxu0 0
  %1395 = vmatpush1.bf16.msra.mxu0 0
  %1396 = vmatprep.subr.bf16.mxu0 0
  %1397 = vmatpush1.bf16.msra.mxu0 0
  %1398 = vmatprep.subr.bf16.mxu0 0
  %1399 = vmatpush1.bf16.msra.mxu0 0
  %1400 = vmatprep.subr.bf16.mxu0 0
  %1401 = vmatpush1.bf16.msra.mxu0 0
  %1402 = vmatprep.subr.bf16.mxu0 0
  %1403 = vmatpush1.bf16.msra.mxu0 0
  %1404 = vmatprep.mubr.bf16.mxu0 0
  %1405 = vmatmul.mubr.bf16.gmra.mrb[0].mxu0 %v1370
  %v1406 = vpop.f32.mrb[0].mxu0
  %v1407 = vadd.f32 0.0, %v1406
  %v1408 = vpop.f32.mrb[0].mxu0
  %v1409 = vpop.f32.mrb[0].mxu0
  %v1410 = vpop.f32.mrb[0].mxu0
  %1411 = vdwg.mxu0
  %v1412 = vpack.c.bf16 %v1339, %v1339
  %v1413 = vld [vmem:[%s2] sm:$0xf]
  %v1414 = vld [vmem:[%s2 + $0x4] sm:$0xf]
  %v1415 = vld [vmem:[%s2 + $0x8] sm:$0xf]
  %v1416 = vld [vmem:[%s2 + $0xc] sm:$0xf]
  %1418 = vrot.lane.b32.xlu0 %v1412, 32
  %v1419 = vpop.permute.xlu0 %1418
  %v1424 = vunpack.c.l.b16 %v1413
  %v1425 = vunpack.c.l.b16 %v1414
  %v1426 = vunpack.c.l.b16 %v1415
  %v1427 = vunpack.c.l.b16 %v1416
  %v1428 = vpack.c.b16 %v1425, %v1424
  %v1429 = vpack.c.b16 %v1427, %v1426
  %v1433 = vsel %vm160, %v1419, 0
  %1435 = vmatprep.subr.bf16.mxu0 0
  %1436 = vmatpush1.bf16.msra.mxu0 %v1428
  %1437 = vmatprep.subr.bf16.mxu0 0
  %1438 = vmatpush1.bf16.msra.mxu0 %v1429
  %1439 = vmatprep.subr.bf16.mxu0 0
  %1440 = vmatpush1.bf16.msra.mxu0 0
  %1441 = vmatprep.subr.bf16.mxu0 0
  %1442 = vmatpush1.bf16.msra.mxu0 0
  %1443 = vmatprep.subr.bf16.mxu0 0
  %1444 = vmatpush1.bf16.msra.mxu0 0
  %1445 = vmatprep.subr.bf16.mxu0 0
  %1446 = vmatpush1.bf16.msra.mxu0 0
  %1447 = vmatprep.subr.bf16.mxu0 0
  %1448 = vmatpush1.bf16.msra.mxu0 0
  %1449 = vmatprep.subr.bf16.mxu0 0
  %1450 = vmatpush1.bf16.msra.mxu0 0
  %1451 = vmatprep.subr.bf16.mxu0 0
  %1452 = vmatpush1.bf16.msra.mxu0 0
  %1453 = vmatprep.subr.bf16.mxu0 0
  %1454 = vmatpush1.bf16.msra.mxu0 0
  %1455 = vmatprep.subr.bf16.mxu0 0
  %1456 = vmatpush1.bf16.msra.mxu0 0
  %1457 = vmatprep.subr.bf16.mxu0 0
  %1458 = vmatpush1.bf16.msra.mxu0 0
  %1459 = vmatprep.subr.bf16.mxu0 0
  %1460 = vmatpush1.bf16.msra.mxu0 0
  %1461 = vmatprep.subr.bf16.mxu0 0
  %1462 = vmatpush1.bf16.msra.mxu0 0
  %1463 = vmatprep.subr.bf16.mxu0 0
  %1464 = vmatpush1.bf16.msra.mxu0 0
  %1465 = vmatprep.subr.bf16.mxu0 0
  %1466 = vmatpush1.bf16.msra.mxu0 0
  %1467 = vmatprep.mubr.bf16.mxu0 0
  %1468 = vmatmul.mubr.bf16.gmra.mrb[0].mxu0 %v1433
  %v1469 = vpop.f32.mrb[0].mxu0
  %v1470 = vadd.f32 %v1407, %v1469
  %v1471 = vpop.f32.mrb[0].mxu0
  %v1472 = vpop.f32.mrb[0].mxu0
  %v1473 = vpop.f32.mrb[0].mxu0
  %1474 = vdwg.mxu0
  %v1475 = vld [vmem:[%s371] sm:$0x1]
  %v1477 = vlaneseq
  %v1478 = vshrl.u32 %v1477, 7
  %v1479 = vsub.s32 0, %v1478
  %v1480 = vrot.slane %v1475, %v1479
  %v1482 = vadd.f32 %v1470, %v1480
  %v1483 = vxor.u32 %v1482, 2147483648
  %v1484 = vmul.f32 %v1483, 1.442695
  %v1485 = vpow.pop %v1484
  %v1486 = vadd.f32 %v1485, 1.0
  %v1487 = vrcp.pop %v1486
  %v1488 = vmul.f32 1.0, %v1487
  %v1489 = vtanh.pop %v1482
  %1491 = vrot.lane.b32.xlu0 %v1351, 32
  %v1492 = vpop.permute.xlu0 %1491
  %v1494 = vmul.f32 %v1488, %v1492
  %1496 = vrot.lane.b32.xlu0 %v1489, 64
  %v1497 = vpop.permute.xlu0 %1496
  %v1499 = vmul.f32 %v1488, %v1497
  %1501 = vrot.lane.b32.xlu0 %v1499, 32
  %v1502 = vpop.permute.xlu0 %1501
  %v1504 = vadd.f32 %v1494, %v1502
  %v1505 = vtanh.pop %v1504
  %1507 = vrot.lane.b32.xlu0 %v1505, 64
  %v1508 = vpop.permute.xlu0 %1507
  %v1510 = vmul.f32 %v1488, %v1508
  %1512 = vrot.lane.b32.xlu0 %v1510, 32
  %v1513 = vpop.permute.xlu0 %1512
  %1515 = vst.msk [vmem:[%s243] sm:$0xff] %vm160, %v1513
  %1517 = vrot.lane.b32.xlu0 %v1504, 96
  %v1518 = vpop.permute.xlu0 %1517
  %1520 = vst.msk [vmem:[%s245] sm:$0xff] %vm160, %v1518
  %s1521 = scalar_lea.vmem %s5, 32
  %1522 = vst.msk [vmem:[%s1521] sm:$0xff] %vm160, %v1513
  %s1523 = scalar_lea.vmem [#allocation4], 40
  %v1524 = vld [vmem:[%s1523] sm:$0xff]
  %v1525 = vld [vmem:[#allocation2] sm:$0xff]
  %v1526 = vld [vmem:[#allocation3] sm:$0xff]
  %v1527 = vpack.c.bf16 %v1525, %v1525
  %v1528 = vld [vmem:[%s3] sm:$0xf]
  %v1529 = vld [vmem:[%s3 + $0x4] sm:$0xf]
  %v1530 = vld [vmem:[%s3 + $0x8] sm:$0xf]
  %v1531 = vld [vmem:[%s3 + $0xc] sm:$0xf]
  %v1536 = vunpack.c.l.b16 %v1528
  %v1537 = vunpack.c.l.b16 %v1529
  %v1538 = vunpack.c.l.b16 %v1530
  %v1539 = vunpack.c.l.b16 %v1531
  %v1540 = vpack.c.b16 %v1537, %v1536
  %v1541 = vpack.c.b16 %v1539, %v1538
  %v1545 = vsel %vm160, %v1527, 0
  %1547 = vmatprep.subr.bf16.mxu0 0
  %1548 = vmatpush1.bf16.msra.mxu0 %v1540
  %1549 = vmatprep.subr.bf16.mxu0 0
  %1550 = vmatpush1.bf16.msra.mxu0 %v1541
  %1551 = vmatprep.subr.bf16.mxu0 0
  %1552 = vmatpush1.bf16.msra.mxu0 0
  %1553 = vmatprep.subr.bf16.mxu0 0
  %1554 = vmatpush1.bf16.msra.mxu0 0
  %1555 = vmatprep.subr.bf16.mxu0 0
  %1556 = vmatpush1.bf16.msra.mxu0 0
  %1557 = vmatprep.subr.bf16.mxu0 0
  %1558 = vmatpush1.bf16.msra.mxu0 0
  %1559 = vmatprep.subr.bf16.mxu0 0
  %1560 = vmatpush1.bf16.msra.mxu0 0
  %1561 = vmatprep.subr.bf16.mxu0 0
  %1562 = vmatpush1.bf16.msra.mxu0 0
  %1563 = vmatprep.subr.bf16.mxu0 0
  %1564 = vmatpush1.bf16.msra.mxu0 0
  %1565 = vmatprep.subr.bf16.mxu0 0
  %1566 = vmatpush1.bf16.msra.mxu0 0
  %1567 = vmatprep.subr.bf16.mxu0 0
  %1568 = vmatpush1.bf16.msra.mxu0 0
  %1569 = vmatprep.subr.bf16.mxu0 0
  %1570 = vmatpush1.bf16.msra.mxu0 0
  %1571 = vmatprep.subr.bf16.mxu0 0
  %1572 = vmatpush1.bf16.msra.mxu0 0
  %1573 = vmatprep.subr.bf16.mxu0 0
  %1574 = vmatpush1.bf16.msra.mxu0 0
  %1575 = vmatprep.subr.bf16.mxu0 0
  %1576 = vmatpush1.bf16.msra.mxu0 0
  %1577 = vmatprep.subr.bf16.mxu0 0
  %1578 = vmatpush1.bf16.msra.mxu0 0
  %1579 = vmatprep.mubr.bf16.mxu0 0
  %1580 = vmatmul.mubr.bf16.gmra.mrb[0].mxu0 %v1545
  %v1581 = vpop.f32.mrb[0].mxu0
  %v1582 = vadd.f32 0.0, %v1581
  %v1583 = vpop.f32.mrb[0].mxu0
  %v1584 = vpop.f32.mrb[0].mxu0
  %v1585 = vpop.f32.mrb[0].mxu0
  %1586 = vdwg.mxu0
  %v1587 = vadd.f32 %v1524, %v1582
  %v1588 = vxor.u32 %v1587, 2147483648
  %v1589 = vmul.f32 %v1588, 1.442695
  %v1590 = vpow.pop %v1589
  %v1591 = vadd.f32 %v1590, 1.0
  %v1592 = vrcp.pop %v1591
  %v1593 = vmul.f32 1.0, %v1592
  %v1594 = vtanh.pop %v1587
  %1596 = vrot.lane.b32.xlu0 %v1526, 32
  %v1597 = vpop.permute.xlu0 %1596
  %v1599 = vmul.f32 %v1593, %v1597
  %1601 = vrot.lane.b32.xlu0 %v1594, 64
  %v1602 = vpop.permute.xlu0 %1601
  %v1604 = vmul.f32 %v1593, %v1602
  %1606 = vrot.lane.b32.xlu0 %v1604, 32
  %v1607 = vpop.permute.xlu0 %1606
  %v1609 = vadd.f32 %v1599, %v1607
  %v1610 = vtanh.pop %v1609
  %1612 = vrot.lane.b32.xlu0 %v1610, 64
  %v1613 = vpop.permute.xlu0 %1612
  %v1615 = vmul.f32 %v1593, %v1613
  %1617 = vrot.lane.b32.xlu0 %v1615, 32
  %v1618 = vpop.permute.xlu0 %1617
  %1620 = vst.msk [vmem:[#allocation2] sm:$0xff] %vm160, %v1618
  %1622 = vrot.lane.b32.xlu0 %v1609, 96
  %v1623 = vpop.permute.xlu0 %1622
  %1625 = vst.msk [vmem:[#allocation3] sm:$0xff] %vm160, %v1623
  %v1626 = vld [vmem:[%s243] sm:$0xff]
  %v1627 = vld [vmem:[%s245] sm:$0xff]
  %v1628 = vpack.c.bf16 %v1626, %v1626
  %v1629 = vld [vmem:[%s248] sm:$0xf]
  %v1630 = vld [vmem:[%s248 + $0x4] sm:$0xf]
  %v1631 = vld [vmem:[%s248 + $0x8] sm:$0xf]
  %v1632 = vld [vmem:[%s248 + $0xc] sm:$0xf]
  %v1637 = vunpack.c.l.b16 %v1629
  %v1638 = vunpack.c.l.b16 %v1630
  %v1639 = vunpack.c.l.b16 %v1631
  %v1640 = vunpack.c.l.b16 %v1632
  %v1641 = vpack.c.b16 %v1638, %v1637
  %v1642 = vpack.c.b16 %v1640, %v1639
  %v1646 = vsel %vm160, %v1628, 0
  %1648 = vmatprep.subr.bf16.mxu0 0
  %1649 = vmatpush1.bf16.msra.mxu0 %v1641
  %1650 = vmatprep.subr.bf16.mxu0 0
  %1651 = vmatpush1.bf16.msra.mxu0 %v1642
  %1652 = vmatprep.subr.bf16.mxu0 0
  %1653 = vmatpush1.bf16.msra.mxu0 0
  %1654 = vmatprep.subr.bf16.mxu0 0
  %1655 = vmatpush1.bf16.msra.mxu0 0
  %1656 = vmatprep.subr.bf16.mxu0 0
  %1657 = vmatpush1.bf16.msra.mxu0 0
  %1658 = vmatprep.subr.bf16.mxu0 0
  %1659 = vmatpush1.bf16.msra.mxu0 0
  %1660 = vmatprep.subr.bf16.mxu0 0
  %1661 = vmatpush1.bf16.msra.mxu0 0
  %1662 = vmatprep.subr.bf16.mxu0 0
  %1663 = vmatpush1.bf16.msra.mxu0 0
  %1664 = vmatprep.subr.bf16.mxu0 0
  %1665 = vmatpush1.bf16.msra.mxu0 0
  %1666 = vmatprep.subr.bf16.mxu0 0
  %1667 = vmatpush1.bf16.msra.mxu0 0
  %1668 = vmatprep.subr.bf16.mxu0 0
  %1669 = vmatpush1.bf16.msra.mxu0 0
  %1670 = vmatprep.subr.bf16.mxu0 0
  %1671 = vmatpush1.bf16.msra.mxu0 0
  %1672 = vmatprep.subr.bf16.mxu0 0
  %1673 = vmatpush1.bf16.msra.mxu0 0
  %1674 = vmatprep.subr.bf16.mxu0 0
  %1675 = vmatpush1.bf16.msra.mxu0 0
  %1676 = vmatprep.subr.bf16.mxu0 0
  %1677 = vmatpush1.bf16.msra.mxu0 0
  %1678 = vmatprep.subr.bf16.mxu0 0
  %1679 = vmatpush1.bf16.msra.mxu0 0
  %1680 = vmatprep.mubr.bf16.mxu0 0
  %1681 = vmatmul.mubr.bf16.gmra.mrb[0].mxu0 %v1646
  %v1682 = vpop.f32.mrb[0].mxu0
  %v1683 = vadd.f32 0.0, %v1682
  %v1684 = vpop.f32.mrb[0].mxu0
  %v1685 = vpop.f32.mrb[0].mxu0
  %v1686 = vpop.f32.mrb[0].mxu0
  %1687 = vdwg.mxu0
  %v1688 = vpack.c.bf16 %v1615, %v1615
  %v1689 = vld [vmem:[%s2] sm:$0xf]
  %v1690 = vld [vmem:[%s2 + $0x4] sm:$0xf]
  %v1691 = vld [vmem:[%s2 + $0x8] sm:$0xf]
  %v1692 = vld [vmem:[%s2 + $0xc] sm:$0xf]
  %1694 = vrot.lane.b32.xlu0 %v1688, 32
  %v1695 = vpop.permute.xlu0 %1694
  %v1700 = vunpack.c.l.b16 %v1689
  %v1701 = vunpack.c.l.b16 %v1690
  %v1702 = vunpack.c.l.b16 %v1691
  %v1703 = vunpack.c.l.b16 %v1692
  %v1704 = vpack.c.b16 %v1701, %v1700
  %v1705 = vpack.c.b16 %v1703, %v1702
  %v1709 = vsel %vm160, %v1695, 0
  %1711 = vmatprep.subr.bf16.mxu0 0
  %1712 = vmatpush1.bf16.msra.mxu0 %v1704
  %1713 = vmatprep.subr.bf16.mxu0 0
  %1714 = vmatpush1.bf16.msra.mxu0 %v1705
  %1715 = vmatprep.subr.bf16.mxu0 0
  %1716 = vmatpush1.bf16.msra.mxu0 0
  %1717 = vmatprep.subr.bf16.mxu0 0
  %1718 = vmatpush1.bf16.msra.mxu0 0
  %1719 = vmatprep.subr.bf16.mxu0 0
  %1720 = vmatpush1.bf16.msra.mxu0 0
  %1721 = vmatprep.subr.bf16.mxu0 0
  %1722 = vmatpush1.bf16.msra.mxu0 0
  %1723 = vmatprep.subr.bf16.mxu0 0
  %1724 = vmatpush1.bf16.msra.mxu0 0
  %1725 = vmatprep.subr.bf16.mxu0 0
  %1726 = vmatpush1.bf16.msra.mxu0 0
  %1727 = vmatprep.subr.bf16.mxu0 0
  %1728 = vmatpush1.bf16.msra.mxu0 0
  %1729 = vmatprep.subr.bf16.mxu0 0
  %1730 = vmatpush1.bf16.msra.mxu0 0
  %1731 = vmatprep.subr.bf16.mxu0 0
  %1732 = vmatpush1.bf16.msra.mxu0 0
  %1733 = vmatprep.subr.bf16.mxu0 0
  %1734 = vmatpush1.bf16.msra.mxu0 0
  %1735 = vmatprep.subr.bf16.mxu0 0
  %1736 = vmatpush1.bf16.msra.mxu0 0
  %1737 = vmatprep.subr.bf16.mxu0 0
  %1738 = vmatpush1.bf16.msra.mxu0 0
  %1739 = vmatprep.subr.bf16.mxu0 0
  %1740 = vmatpush1.bf16.msra.mxu0 0
  %1741 = vmatprep.subr.bf16.mxu0 0
  %1742 = vmatpush1.bf16.msra.mxu0 0
  %1743 = vmatprep.mubr.bf16.mxu0 0
  %1744 = vmatmul.mubr.bf16.gmra.mrb[0].mxu0 %v1709
  %v1745 = vpop.f32.mrb[0].mxu0
  %v1746 = vadd.f32 %v1683, %v1745
  %v1747 = vpop.f32.mrb[0].mxu0
  %v1748 = vpop.f32.mrb[0].mxu0
  %v1749 = vpop.f32.mrb[0].mxu0
  %1750 = vdwg.mxu0
  %v1751 = vld [vmem:[%s371] sm:$0x1]
  %v1753 = vlaneseq
  %v1754 = vshrl.u32 %v1753, 7
  %v1755 = vsub.s32 0, %v1754
  %v1756 = vrot.slane %v1751, %v1755
  %v1758 = vadd.f32 %v1746, %v1756
  %v1759 = vxor.u32 %v1758, 2147483648
  %v1760 = vmul.f32 %v1759, 1.442695
  %v1761 = vpow.pop %v1760
  %v1762 = vadd.f32 %v1761, 1.0
  %v1763 = vrcp.pop %v1762
  %v1764 = vmul.f32 1.0, %v1763
  %v1765 = vtanh.pop %v1758
  %1767 = vrot.lane.b32.xlu0 %v1627, 32
  %v1768 = vpop.permute.xlu0 %1767
  %v1770 = vmul.f32 %v1764, %v1768
  %1772 = vrot.lane.b32.xlu0 %v1765, 64
  %v1773 = vpop.permute.xlu0 %1772
  %v1775 = vmul.f32 %v1764, %v1773
  %1777 = vrot.lane.b32.xlu0 %v1775, 32
  %v1778 = vpop.permute.xlu0 %1777
  %v1780 = vadd.f32 %v1770, %v1778
  %v1781 = vtanh.pop %v1780
  %1783 = vrot.lane.b32.xlu0 %v1781, 64
  %v1784 = vpop.permute.xlu0 %1783
  %v1786 = vmul.f32 %v1764, %v1784
  %1788 = vrot.lane.b32.xlu0 %v1786, 32
  %v1789 = vpop.permute.xlu0 %1788
  %1791 = vst.msk [vmem:[%s243] sm:$0xff] %vm160, %v1789
  %1793 = vrot.lane.b32.xlu0 %v1780, 96
  %v1794 = vpop.permute.xlu0 %1793
  %1796 = vst.msk [vmem:[%s245] sm:$0xff] %vm160, %v1794
  %s1797 = scalar_lea.vmem %s5, 40
  %1798 = vst.msk [vmem:[%s1797] sm:$0xff] %vm160, %v1789
  %s1799 = scalar_lea.vmem [#allocation4], 48
  %v1800 = vld [vmem:[%s1799] sm:$0xff]
  %v1801 = vld [vmem:[#allocation2] sm:$0xff]
  %v1802 = vld [vmem:[#allocation3] sm:$0xff]
  %v1803 = vpack.c.bf16 %v1801, %v1801
  %v1804 = vld [vmem:[%s3] sm:$0xf]
  %v1805 = vld [vmem:[%s3 + $0x4] sm:$0xf]
  %v1806 = vld [vmem:[%s3 + $0x8] sm:$0xf]
  %v1807 = vld [vmem:[%s3 + $0xc] sm:$0xf]
  %v1812 = vunpack.c.l.b16 %v1804
  %v1813 = vunpack.c.l.b16 %v1805
  %v1814 = vunpack.c.l.b16 %v1806
  %v1815 = vunpack.c.l.b16 %v1807
  %v1816 = vpack.c.b16 %v1813, %v1812
  %v1817 = vpack.c.b16 %v1815, %v1814
  %v1821 = vsel %vm160, %v1803, 0
  %1823 = vmatprep.subr.bf16.mxu0 0
  %1824 = vmatpush1.bf16.msra.mxu0 %v1816
  %1825 = vmatprep.subr.bf16.mxu0 0
  %1826 = vmatpush1.bf16.msra.mxu0 %v1817
  %1827 = vmatprep.subr.bf16.mxu0 0
  %1828 = vmatpush1.bf16.msra.mxu0 0
  %1829 = vmatprep.subr.bf16.mxu0 0
  %1830 = vmatpush1.bf16.msra.mxu0 0
  %1831 = vmatprep.subr.bf16.mxu0 0
  %1832 = vmatpush1.bf16.msra.mxu0 0
  %1833 = vmatprep.subr.bf16.mxu0 0
  %1834 = vmatpush1.bf16.msra.mxu0 0
  %1835 = vmatprep.subr.bf16.mxu0 0
  %1836 = vmatpush1.bf16.msra.mxu0 0
  %1837 = vmatprep.subr.bf16.mxu0 0
  %1838 = vmatpush1.bf16.msra.mxu0 0
  %1839 = vmatprep.subr.bf16.mxu0 0
  %1840 = vmatpush1.bf16.msra.mxu0 0
  %1841 = vmatprep.subr.bf16.mxu0 0
  %1842 = vmatpush1.bf16.msra.mxu0 0
  %1843 = vmatprep.subr.bf16.mxu0 0
  %1844 = vmatpush1.bf16.msra.mxu0 0
  %1845 = vmatprep.subr.bf16.mxu0 0
  %1846 = vmatpush1.bf16.msra.mxu0 0
  %1847 = vmatprep.subr.bf16.mxu0 0
  %1848 = vmatpush1.bf16.msra.mxu0 0
  %1849 = vmatprep.subr.bf16.mxu0 0
  %1850 = vmatpush1.bf16.msra.mxu0 0
  %1851 = vmatprep.subr.bf16.mxu0 0
  %1852 = vmatpush1.bf16.msra.mxu0 0
  %1853 = vmatprep.subr.bf16.mxu0 0
  %1854 = vmatpush1.bf16.msra.mxu0 0
  %1855 = vmatprep.mubr.bf16.mxu0 0
  %1856 = vmatmul.mubr.bf16.gmra.mrb[0].mxu0 %v1821
  %v1857 = vpop.f32.mrb[0].mxu0
  %v1858 = vadd.f32 0.0, %v1857
  %v1859 = vpop.f32.mrb[0].mxu0
  %v1860 = vpop.f32.mrb[0].mxu0
  %v1861 = vpop.f32.mrb[0].mxu0
  %1862 = vdwg.mxu0
  %v1863 = vadd.f32 %v1800, %v1858
  %v1864 = vxor.u32 %v1863, 2147483648
  %v1865 = vmul.f32 %v1864, 1.442695
  %v1866 = vpow.pop %v1865
  %v1867 = vadd.f32 %v1866, 1.0
  %v1868 = vrcp.pop %v1867
  %v1869 = vmul.f32 1.0, %v1868
  %v1870 = vtanh.pop %v1863
  %1872 = vrot.lane.b32.xlu0 %v1802, 32
  %v1873 = vpop.permute.xlu0 %1872
  %v1875 = vmul.f32 %v1869, %v1873
  %1877 = vrot.lane.b32.xlu0 %v1870, 64
  %v1878 = vpop.permute.xlu0 %1877
  %v1880 = vmul.f32 %v1869, %v1878
  %1882 = vrot.lane.b32.xlu0 %v1880, 32
  %v1883 = vpop.permute.xlu0 %1882
  %v1885 = vadd.f32 %v1875, %v1883
  %v1886 = vtanh.pop %v1885
  %1888 = vrot.lane.b32.xlu0 %v1886, 64
  %v1889 = vpop.permute.xlu0 %1888
  %v1891 = vmul.f32 %v1869, %v1889
  %1893 = vrot.lane.b32.xlu0 %v1891, 32
  %v1894 = vpop.permute.xlu0 %1893
  %1896 = vst.msk [vmem:[#allocation2] sm:$0xff] %vm160, %v1894
  %1898 = vrot.lane.b32.xlu0 %v1885, 96
  %v1899 = vpop.permute.xlu0 %1898
  %1901 = vst.msk [vmem:[#allocation3] sm:$0xff] %vm160, %v1899
  %v1902 = vld [vmem:[%s243] sm:$0xff]
  %v1903 = vld [vmem:[%s245] sm:$0xff]
  %v1904 = vpack.c.bf16 %v1902, %v1902
  %v1905 = vld [vmem:[%s248] sm:$0xf]
  %v1906 = vld [vmem:[%s248 + $0x4] sm:$0xf]
  %v1907 = vld [vmem:[%s248 + $0x8] sm:$0xf]
  %v1908 = vld [vmem:[%s248 + $0xc] sm:$0xf]
  %v1913 = vunpack.c.l.b16 %v1905
  %v1914 = vunpack.c.l.b16 %v1906
  %v1915 = vunpack.c.l.b16 %v1907
  %v1916 = vunpack.c.l.b16 %v1908
  %v1917 = vpack.c.b16 %v1914, %v1913
  %v1918 = vpack.c.b16 %v1916, %v1915
  %v1922 = vsel %vm160, %v1904, 0
  %1924 = vmatprep.subr.bf16.mxu0 0
  %1925 = vmatpush1.bf16.msra.mxu0 %v1917
  %1926 = vmatprep.subr.bf16.mxu0 0
  %1927 = vmatpush1.bf16.msra.mxu0 %v1918
  %1928 = vmatprep.subr.bf16.mxu0 0
  %1929 = vmatpush1.bf16.msra.mxu0 0
  %1930 = vmatprep.subr.bf16.mxu0 0
  %1931 = vmatpush1.bf16.msra.mxu0 0
  %1932 = vmatprep.subr.bf16.mxu0 0
  %1933 = vmatpush1.bf16.msra.mxu0 0
  %1934 = vmatprep.subr.bf16.mxu0 0
  %1935 = vmatpush1.bf16.msra.mxu0 0
  %1936 = vmatprep.subr.bf16.mxu0 0
  %1937 = vmatpush1.bf16.msra.mxu0 0
  %1938 = vmatprep.subr.bf16.mxu0 0
  %1939 = vmatpush1.bf16.msra.mxu0 0
  %1940 = vmatprep.subr.bf16.mxu0 0
  %1941 = vmatpush1.bf16.msra.mxu0 0
  %1942 = vmatprep.subr.bf16.mxu0 0
  %1943 = vmatpush1.bf16.msra.mxu0 0
  %1944 = vmatprep.subr.bf16.mxu0 0
  %1945 = vmatpush1.bf16.msra.mxu0 0
  %1946 = vmatprep.subr.bf16.mxu0 0
  %1947 = vmatpush1.bf16.msra.mxu0 0
  %1948 = vmatprep.subr.bf16.mxu0 0
  %1949 = vmatpush1.bf16.msra.mxu0 0
  %1950 = vmatprep.subr.bf16.mxu0 0
  %1951 = vmatpush1.bf16.msra.mxu0 0
  %1952 = vmatprep.subr.bf16.mxu0 0
  %1953 = vmatpush1.bf16.msra.mxu0 0
  %1954 = vmatprep.subr.bf16.mxu0 0
  %1955 = vmatpush1.bf16.msra.mxu0 0
  %1956 = vmatprep.mubr.bf16.mxu0 0
  %1957 = vmatmul.mubr.bf16.gmra.mrb[0].mxu0 %v1922
  %v1958 = vpop.f32.mrb[0].mxu0
  %v1959 = vadd.f32 0.0, %v1958
  %v1960 = vpop.f32.mrb[0].mxu0
  %v1961 = vpop.f32.mrb[0].mxu0
  %v1962 = vpop.f32.mrb[0].mxu0
  %1963 = vdwg.mxu0
  %v1964 = vpack.c.bf16 %v1891, %v1891
  %v1965 = vld [vmem:[%s2] sm:$0xf]
  %v1966 = vld [vmem:[%s2 + $0x4] sm:$0xf]
  %v1967 = vld [vmem:[%s2 + $0x8] sm:$0xf]
  %v1968 = vld [vmem:[%s2 + $0xc] sm:$0xf]
  %1970 = vrot.lane.b32.xlu0 %v1964, 32
  %v1971 = vpop.permute.xlu0 %1970
  %v1976 = vunpack.c.l.b16 %v1965
  %v1977 = vunpack.c.l.b16 %v1966
  %v1978 = vunpack.c.l.b16 %v1967
  %v1979 = vunpack.c.l.b16 %v1968
  %v1980 = vpack.c.b16 %v1977, %v1976
  %v1981 = vpack.c.b16 %v1979, %v1978
  %v1985 = vsel %vm160, %v1971, 0
  %1987 = vmatprep.subr.bf16.mxu0 0
  %1988 = vmatpush1.bf16.msra.mxu0 %v1980
  %1989 = vmatprep.subr.bf16.mxu0 0
  %1990 = vmatpush1.bf16.msra.mxu0 %v1981
  %1991 = vmatprep.subr.bf16.mxu0 0
  %1992 = vmatpush1.bf16.msra.mxu0 0
  %1993 = vmatprep.subr.bf16.mxu0 0
  %1994 = vmatpush1.bf16.msra.mxu0 0
  %1995 = vmatprep.subr.bf16.mxu0 0
  %1996 = vmatpush1.bf16.msra.mxu0 0
  %1997 = vmatprep.subr.bf16.mxu0 0
  %1998 = vmatpush1.bf16.msra.mxu0 0
  %1999 = vmatprep.subr.bf16.mxu0 0
  %2000 = vmatpush1.bf16.msra.mxu0 0
  %2001 = vmatprep.subr.bf16.mxu0 0
  %2002 = vmatpush1.bf16.msra.mxu0 0
  %2003 = vmatprep.subr.bf16.mxu0 0
  %2004 = vmatpush1.bf16.msra.mxu0 0
  %2005 = vmatprep.subr.bf16.mxu0 0
  %2006 = vmatpush1.bf16.msra.mxu0 0
  %2007 = vmatprep.subr.bf16.mxu0 0
  %2008 = vmatpush1.bf16.msra.mxu0 0
  %2009 = vmatprep.subr.bf16.mxu0 0
  %2010 = vmatpush1.bf16.msra.mxu0 0
  %2011 = vmatprep.subr.bf16.mxu0 0
  %2012 = vmatpush1.bf16.msra.mxu0 0
  %2013 = vmatprep.subr.bf16.mxu0 0
  %2014 = vmatpush1.bf16.msra.mxu0 0
  %2015 = vmatprep.subr.bf16.mxu0 0
  %2016 = vmatpush1.bf16.msra.mxu0 0
  %2017 = vmatprep.subr.bf16.mxu0 0
  %2018 = vmatpush1.bf16.msra.mxu0 0
  %2019 = vmatprep.mubr.bf16.mxu0 0
  %2020 = vmatmul.mubr.bf16.gmra.mrb[0].mxu0 %v1985
  %v2021 = vpop.f32.mrb[0].mxu0
  %v2022 = vadd.f32 %v1959, %v2021
  %v2023 = vpop.f32.mrb[0].mxu0
  %v2024 = vpop.f32.mrb[0].mxu0
  %v2025 = vpop.f32.mrb[0].mxu0
  %2026 = vdwg.mxu0
  %v2027 = vld [vmem:[%s371] sm:$0x1]
  %v2029 = vlaneseq
  %v2030 = vshrl.u32 %v2029, 7
  %v2031 = vsub.s32 0, %v2030
  %v2032 = vrot.slane %v2027, %v2031
  %v2034 = vadd.f32 %v2022, %v2032
  %v2035 = vxor.u32 %v2034, 2147483648
  %v2036 = vmul.f32 %v2035, 1.442695
  %v2037 = vpow.pop %v2036
  %v2038 = vadd.f32 %v2037, 1.0
  %v2039 = vrcp.pop %v2038
  %v2040 = vmul.f32 1.0, %v2039
  %v2041 = vtanh.pop %v2034
  %2043 = vrot.lane.b32.xlu0 %v1903, 32
  %v2044 = vpop.permute.xlu0 %2043
  %v2046 = vmul.f32 %v2040, %v2044
  %2048 = vrot.lane.b32.xlu0 %v2041, 64
  %v2049 = vpop.permute.xlu0 %2048
  %v2051 = vmul.f32 %v2040, %v2049
  %2053 = vrot.lane.b32.xlu0 %v2051, 32
  %v2054 = vpop.permute.xlu0 %2053
  %v2056 = vadd.f32 %v2046, %v2054
  %v2057 = vtanh.pop %v2056
  %2059 = vrot.lane.b32.xlu0 %v2057, 64
  %v2060 = vpop.permute.xlu0 %2059
  %v2062 = vmul.f32 %v2040, %v2060
  %2064 = vrot.lane.b32.xlu0 %v2062, 32
  %v2065 = vpop.permute.xlu0 %2064
  %2067 = vst.msk [vmem:[%s243] sm:$0xff] %vm160, %v2065
  %2069 = vrot.lane.b32.xlu0 %v2056, 96
  %v2070 = vpop.permute.xlu0 %2069
  %2072 = vst.msk [vmem:[%s245] sm:$0xff] %vm160, %v2070
  %s2073 = scalar_lea.vmem %s5, 48
  %2074 = vst.msk [vmem:[%s2073] sm:$0xff] %vm160, %v2065
  %s2075 = scalar_lea.vmem [#allocation4], 56
  %v2076 = vld [vmem:[%s2075] sm:$0xff]
  %v2077 = vld [vmem:[#allocation2] sm:$0xff]
  %v2078 = vld [vmem:[#allocation3] sm:$0xff]
  %v2079 = vpack.c.bf16 %v2077, %v2077
  %v2080 = vld [vmem:[%s3] sm:$0xf]
  %v2081 = vld [vmem:[%s3 + $0x4] sm:$0xf]
  %v2082 = vld [vmem:[%s3 + $0x8] sm:$0xf]
  %v2083 = vld [vmem:[%s3 + $0xc] sm:$0xf]
  %v2088 = vunpack.c.l.b16 %v2080
  %v2089 = vunpack.c.l.b16 %v2081
  %v2090 = vunpack.c.l.b16 %v2082
  %v2091 = vunpack.c.l.b16 %v2083
  %v2092 = vpack.c.b16 %v2089, %v2088
  %v2093 = vpack.c.b16 %v2091, %v2090
  %v2097 = vsel %vm160, %v2079, 0
  %2099 = vmatprep.subr.bf16.mxu0 0
  %2100 = vmatpush1.bf16.msra.mxu0 %v2092
  %2101 = vmatprep.subr.bf16.mxu0 0
  %2102 = vmatpush1.bf16.msra.mxu0 %v2093
  %2103 = vmatprep.subr.bf16.mxu0 0
  %2104 = vmatpush1.bf16.msra.mxu0 0
  %2105 = vmatprep.subr.bf16.mxu0 0
  %2106 = vmatpush1.bf16.msra.mxu0 0
  %2107 = vmatprep.subr.bf16.mxu0 0
  %2108 = vmatpush1.bf16.msra.mxu0 0
  %2109 = vmatprep.subr.bf16.mxu0 0
  %2110 = vmatpush1.bf16.msra.mxu0 0
  %2111 = vmatprep.subr.bf16.mxu0 0
  %2112 = vmatpush1.bf16.msra.mxu0 0
  %2113 = vmatprep.subr.bf16.mxu0 0
  %2114 = vmatpush1.bf16.msra.mxu0 0
  %2115 = vmatprep.subr.bf16.mxu0 0
  %2116 = vmatpush1.bf16.msra.mxu0 0
  %2117 = vmatprep.subr.bf16.mxu0 0
  %2118 = vmatpush1.bf16.msra.mxu0 0
  %2119 = vmatprep.subr.bf16.mxu0 0
  %2120 = vmatpush1.bf16.msra.mxu0 0
  %2121 = vmatprep.subr.bf16.mxu0 0
  %2122 = vmatpush1.bf16.msra.mxu0 0
  %2123 = vmatprep.subr.bf16.mxu0 0
  %2124 = vmatpush1.bf16.msra.mxu0 0
  %2125 = vmatprep.subr.bf16.mxu0 0
  %2126 = vmatpush1.bf16.msra.mxu0 0
  %2127 = vmatprep.subr.bf16.mxu0 0
  %2128 = vmatpush1.bf16.msra.mxu0 0
  %2129 = vmatprep.subr.bf16.mxu0 0
  %2130 = vmatpush1.bf16.msra.mxu0 0
  %2131 = vmatprep.mubr.bf16.mxu0 0
  %2132 = vmatmul.mubr.bf16.gmra.mrb[0].mxu0 %v2097
  %v2133 = vpop.f32.mrb[0].mxu0
  %v2134 = vadd.f32 0.0, %v2133
  %v2135 = vpop.f32.mrb[0].mxu0
  %v2136 = vpop.f32.mrb[0].mxu0
  %v2137 = vpop.f32.mrb[0].mxu0
  %2138 = vdwg.mxu0
  %v2139 = vadd.f32 %v2076, %v2134
  %v2140 = vxor.u32 %v2139, 2147483648
  %v2141 = vmul.f32 %v2140, 1.442695
  %v2142 = vpow.pop %v2141
  %v2143 = vadd.f32 %v2142, 1.0
  %v2144 = vrcp.pop %v2143
  %v2145 = vmul.f32 1.0, %v2144
  %v2146 = vtanh.pop %v2139
  %2148 = vrot.lane.b32.xlu0 %v2078, 32
  %v2149 = vpop.permute.xlu0 %2148
  %v2151 = vmul.f32 %v2145, %v2149
  %2153 = vrot.lane.b32.xlu0 %v2146, 64
  %v2154 = vpop.permute.xlu0 %2153
  %v2156 = vmul.f32 %v2145, %v2154
  %2158 = vrot.lane.b32.xlu0 %v2156, 32
  %v2159 = vpop.permute.xlu0 %2158
  %v2161 = vadd.f32 %v2151, %v2159
  %v2162 = vtanh.pop %v2161
  %2164 = vrot.lane.b32.xlu0 %v2162, 64
  %v2165 = vpop.permute.xlu0 %2164
  %v2167 = vmul.f32 %v2145, %v2165
  %2169 = vrot.lane.b32.xlu0 %v2167, 32
  %v2170 = vpop.permute.xlu0 %2169
  %2172 = vst.msk [vmem:[#allocation2] sm:$0xff] %vm160, %v2170
  %2174 = vrot.lane.b32.xlu0 %v2161, 96
  %v2175 = vpop.permute.xlu0 %2174
  %2177 = vst.msk [vmem:[#allocation3] sm:$0xff] %vm160, %v2175
  %v2178 = vld [vmem:[%s243] sm:$0xff]
  %v2179 = vld [vmem:[%s245] sm:$0xff]
  %v2180 = vpack.c.bf16 %v2178, %v2178
  %v2181 = vld [vmem:[%s248] sm:$0xf]
  %v2182 = vld [vmem:[%s248 + $0x4] sm:$0xf]
  %v2183 = vld [vmem:[%s248 + $0x8] sm:$0xf]
  %v2184 = vld [vmem:[%s248 + $0xc] sm:$0xf]
  %v2189 = vunpack.c.l.b16 %v2181
  %v2190 = vunpack.c.l.b16 %v2182
  %v2191 = vunpack.c.l.b16 %v2183
  %v2192 = vunpack.c.l.b16 %v2184
  %v2193 = vpack.c.b16 %v2190, %v2189
  %v2194 = vpack.c.b16 %v2192, %v2191
  %v2198 = vsel %vm160, %v2180, 0
  %2200 = vmatprep.subr.bf16.mxu0 0
  %2201 = vmatpush1.bf16.msra.mxu0 %v2193
  %2202 = vmatprep.subr.bf16.mxu0 0
  %2203 = vmatpush1.bf16.msra.mxu0 %v2194
  %2204 = vmatprep.subr.bf16.mxu0 0
  %2205 = vmatpush1.bf16.msra.mxu0 0
  %2206 = vmatprep.subr.bf16.mxu0 0
  %2207 = vmatpush1.bf16.msra.mxu0 0
  %2208 = vmatprep.subr.bf16.mxu0 0
  %2209 = vmatpush1.bf16.msra.mxu0 0
  %2210 = vmatprep.subr.bf16.mxu0 0
  %2211 = vmatpush1.bf16.msra.mxu0 0
  %2212 = vmatprep.subr.bf16.mxu0 0
  %2213 = vmatpush1.bf16.msra.mxu0 0
  %2214 = vmatprep.subr.bf16.mxu0 0
  %2215 = vmatpush1.bf16.msra.mxu0 0
  %2216 = vmatprep.subr.bf16.mxu0 0
  %2217 = vmatpush1.bf16.msra.mxu0 0
  %2218 = vmatprep.subr.bf16.mxu0 0
  %2219 = vmatpush1.bf16.msra.mxu0 0
  %2220 = vmatprep.subr.bf16.mxu0 0
  %2221 = vmatpush1.bf16.msra.mxu0 0
  %2222 = vmatprep.subr.bf16.mxu0 0
  %2223 = vmatpush1.bf16.msra.mxu0 0
  %2224 = vmatprep.subr.bf16.mxu0 0
  %2225 = vmatpush1.bf16.msra.mxu0 0
  %2226 = vmatprep.subr.bf16.mxu0 0
  %2227 = vmatpush1.bf16.msra.mxu0 0
  %2228 = vmatprep.subr.bf16.mxu0 0
  %2229 = vmatpush1.bf16.msra.mxu0 0
  %2230 = vmatprep.subr.bf16.mxu0 0
  %2231 = vmatpush1.bf16.msra.mxu0 0
  %2232 = vmatprep.mubr.bf16.mxu0 0
  %2233 = vmatmul.mubr.bf16.gmra.mrb[0].mxu0 %v2198
  %v2234 = vpop.f32.mrb[0].mxu0
  %v2235 = vadd.f32 0.0, %v2234
  %v2236 = vpop.f32.mrb[0].mxu0
  %v2237 = vpop.f32.mrb[0].mxu0
  %v2238 = vpop.f32.mrb[0].mxu0
  %2239 = vdwg.mxu0
  %v2240 = vpack.c.bf16 %v2167, %v2167
  %v2241 = vld [vmem:[%s2] sm:$0xf]
  %v2242 = vld [vmem:[%s2 + $0x4] sm:$0xf]
  %v2243 = vld [vmem:[%s2 + $0x8] sm:$0xf]
  %v2244 = vld [vmem:[%s2 + $0xc] sm:$0xf]
  %2246 = vrot.lane.b32.xlu0 %v2240, 32
  %v2247 = vpop.permute.xlu0 %2246
  %v2252 = vunpack.c.l.b16 %v2241
  %v2253 = vunpack.c.l.b16 %v2242
  %v2254 = vunpack.c.l.b16 %v2243
  %v2255 = vunpack.c.l.b16 %v2244
  %v2256 = vpack.c.b16 %v2253, %v2252
  %v2257 = vpack.c.b16 %v2255, %v2254
  %v2261 = vsel %vm160, %v2247, 0
  %2263 = vmatprep.subr.bf16.mxu0 0
  %2264 = vmatpush1.bf16.msra.mxu0 %v2256
  %2265 = vmatprep.subr.bf16.mxu0 0
  %2266 = vmatpush1.bf16.msra.mxu0 %v2257
  %2267 = vmatprep.subr.bf16.mxu0 0
  %2268 = vmatpush1.bf16.msra.mxu0 0
  %2269 = vmatprep.subr.bf16.mxu0 0
  %2270 = vmatpush1.bf16.msra.mxu0 0
  %2271 = vmatprep.subr.bf16.mxu0 0
  %2272 = vmatpush1.bf16.msra.mxu0 0
  %2273 = vmatprep.subr.bf16.mxu0 0
  %2274 = vmatpush1.bf16.msra.mxu0 0
  %2275 = vmatprep.subr.bf16.mxu0 0
  %2276 = vmatpush1.bf16.msra.mxu0 0
  %2277 = vmatprep.subr.bf16.mxu0 0
  %2278 = vmatpush1.bf16.msra.mxu0 0
  %2279 = vmatprep.subr.bf16.mxu0 0
  %2280 = vmatpush1.bf16.msra.mxu0 0
  %2281 = vmatprep.subr.bf16.mxu0 0
  %2282 = vmatpush1.bf16.msra.mxu0 0
  %2283 = vmatprep.subr.bf16.mxu0 0
  %2284 = vmatpush1.bf16.msra.mxu0 0
  %2285 = vmatprep.subr.bf16.mxu0 0
  %2286 = vmatpush1.bf16.msra.mxu0 0
  %2287 = vmatprep.subr.bf16.mxu0 0
  %2288 = vmatpush1.bf16.msra.mxu0 0
  %2289 = vmatprep.subr.bf16.mxu0 0
  %2290 = vmatpush1.bf16.msra.mxu0 0
  %2291 = vmatprep.subr.bf16.mxu0 0
  %2292 = vmatpush1.bf16.msra.mxu0 0
  %2293 = vmatprep.subr.bf16.mxu0 0
  %2294 = vmatpush1.bf16.msra.mxu0 0
  %2295 = vmatprep.mubr.bf16.mxu0 0
  %2296 = vmatmul.mubr.bf16.gmra.mrb[0].mxu0 %v2261
  %v2297 = vpop.f32.mrb[0].mxu0
  %v2298 = vadd.f32 %v2235, %v2297
  %v2299 = vpop.f32.mrb[0].mxu0
  %v2300 = vpop.f32.mrb[0].mxu0
  %v2301 = vpop.f32.mrb[0].mxu0
  %2302 = vdwg.mxu0
  %v2303 = vld [vmem:[%s371] sm:$0x1]
  %v2305 = vlaneseq
  %v2306 = vshrl.u32 %v2305, 7
  %v2307 = vsub.s32 0, %v2306
  %v2308 = vrot.slane %v2303, %v2307
  %v2310 = vadd.f32 %v2298, %v2308
  %v2311 = vxor.u32 %v2310, 2147483648
  %v2312 = vmul.f32 %v2311, 1.442695
  %v2313 = vpow.pop %v2312
  %v2314 = vadd.f32 %v2313, 1.0
  %v2315 = vrcp.pop %v2314
  %v2316 = vmul.f32 1.0, %v2315
  %v2317 = vtanh.pop %v2310
  %2319 = vrot.lane.b32.xlu0 %v2179, 32
  %v2320 = vpop.permute.xlu0 %2319
  %v2322 = vmul.f32 %v2316, %v2320
  %2324 = vrot.lane.b32.xlu0 %v2317, 64
  %v2325 = vpop.permute.xlu0 %2324
  %v2327 = vmul.f32 %v2316, %v2325
  %2329 = vrot.lane.b32.xlu0 %v2327, 32
  %v2330 = vpop.permute.xlu0 %2329
  %v2332 = vadd.f32 %v2322, %v2330
  %v2333 = vtanh.pop %v2332
  %2335 = vrot.lane.b32.xlu0 %v2333, 64
  %v2336 = vpop.permute.xlu0 %2335
  %v2338 = vmul.f32 %v2316, %v2336
  %2340 = vrot.lane.b32.xlu0 %v2338, 32
  %v2341 = vpop.permute.xlu0 %2340
  %2343 = vst.msk [vmem:[%s243] sm:$0xff] %vm160, %v2341
  %2345 = vrot.lane.b32.xlu0 %v2332, 96
  %v2346 = vpop.permute.xlu0 %2345
  %2348 = vst.msk [vmem:[%s245] sm:$0xff] %vm160, %v2346
  %s2349 = scalar_lea.vmem %s5, 56
  %2350 = vst.msk [vmem:[%s2349] sm:$0xff] %vm160, %v2341
  // Predicated region
  $region26: #{encoder_forward.1} parent=0 // pred_check
    _
  $region27: #{encoder_forward.1} parent=0 // pred_check_branch
    %2352 = sbr.rel (0) target = $region29
  $region28: #{encoder_forward.1} parent=0 // pred_region
    _
  $region29: #{encoder_forward.1} parent=0 // pred_fallthru
    _
  // Predicated region
  $region30: #{encoder_forward.1} parent=0 // pred_check
    _
  $region31: #{encoder_forward.1} parent=0 // pred_check_branch
    %2354 = sbr.rel (0) target = $region33
  $region32: #{encoder_forward.1} parent=0 // pred_region
    _
  $region33: #{encoder_forward.1} parent=0 // pred_fallthru
    _

</llo_original>
